<compile_context>
chip_gen: v6e
topology: v6e:2x2x1
jax: 0.10.0
libtpu: 0.0.40
codegen_flags: <defaults>
</compile_context>

<pallas_src>
import jax
import jax.numpy as jnp
from jax.experimental import pallas as pl
from jax.experimental.pallas import tpu as pltpu

EPS = 1e-5     # nn.BatchNorm2d default
LANE = 128     # TPU lane width


def _round_up(x, m):
    return (x + m - 1) // m * m


# --------------------------- fused conv+BN kernel ---------------------------

def _fused_kernel_factory(do_relu, has_res):
    def kernel(*refs):
        if has_res:
            a_ref, b_ref, g_ref, bt_ref, r_ref, o_ref, acc_ref = refs
        else:
            a_ref, b_ref, g_ref, bt_ref, o_ref, acc_ref = refs

        k = pl.program_id(0)

        @pl.when(k == 0)
        def _init():
            acc_ref[...] = jnp.zeros_like(acc_ref)

        # bf16 x bf16 -> f32 accumulate on the MXU.
        acc_ref[...] += jnp.dot(a_ref[...], b_ref[...],
                                preferred_element_type=jnp.float32)

        @pl.when(k == pl.num_programs(0) - 1)
        def _finalize():
            y = acc_ref[...]                                      # [M, C] f32
            # Training-mode BatchNorm: batch stats over all rows (= N*OH*OW),
            # biased variance, per-channel affine.  All math in f32.
            mean = jnp.mean(y, axis=0, keepdims=True)
            var = jnp.mean(jnp.square(y - mean), axis=0, keepdims=True)
            out = (y - mean) * jax.lax.rsqrt(var + EPS) * g_ref[...] + bt_ref[...]
            if has_res:
                out = out + r_ref[...].astype(jnp.float32)
            if do_relu:
                out = jnp.maximum(out, 0.0)
            o_ref[...] = out.astype(o_ref.dtype)

    return kernel


def _pick_tk(K, cp_in, M, C, budget_bytes=8 << 20):
    """Largest tap-aligned K tile whose (A tile + B tile), double-buffered,
    fits a VMEM budget.  Falls back to one tap group (cp_in)."""
    taps = K // cp_in
    tk = cp_in
    for t in range(taps, 0, -1):
        if taps % t == 0 and 4 * (M + C) * t * cp_in <= budget_bytes:
            tk = t * cp_in
            break
    return tk


def fused_conv_bn(a, b, gamma2, beta2, *, relu, residual=None, cp_in):
    """Fused (a @ b) -> BatchNorm(train) -> [+residual] -> [ReLU].

    a:        [M, K]  bf16 im2col matrix (channel-padded, K = taps * cp_in)
    b:        [K, C]  bf16 packed weights (C multiple of 128)
    gamma2/beta2: [1, C] f32 BN affine (zero in padded channels)
    residual: [M, C]  bf16 or None
    returns   [M, C]  bf16
    """
    M, K = a.shape
    K2, C = b.shape
    assert K == K2 and K % cp_in == 0 and C % LANE == 0
    tk = _pick_tk(K, cp_in, M, C)
    nsteps = K // tk
    has_res = residual is not None

    in_specs = [
        pl.BlockSpec((M, tk), lambda k: (0, k)),
        pl.BlockSpec((tk, C), lambda k: (k, 0)),
        pl.BlockSpec((1, C), lambda k: (0, 0)),
        pl.BlockSpec((1, C), lambda k: (0, 0)),
    ]
    args = [a, b, gamma2, beta2]
    if has_res:
        in_specs.append(pl.BlockSpec((M, C), lambda k: (0, 0)))
        args.append(residual)

    return pl.pallas_call(
        _fused_kernel_factory(relu, has_res),
        out_shape=jax.ShapeDtypeStruct((M, C), jnp.bfloat16),
        grid=(nsteps,),
        in_specs=in_specs,
        out_specs=pl.BlockSpec((M, C), lambda k: (0, 0)),
        scratch_shapes=[pltpu.VMEM((M, C), jnp.float32)],
        compiler_params=pltpu.CompilerParams(
            dimension_semantics=("arbitrary",)),   # K axis is a reduction
    )(*args)


# ------------------------------ plain-JAX glue -------------------------------

def _im2col(x, kh_kw, stride, padding):
    """x: [N, H, W, CP] bf16 -> ([N*OH*OW, KH*KW*CP] bf16, (N, OH, OW))."""
    N, H, W, CP = x.shape
    KH, KW = kh_kw
    OH = (H + 2 * padding - KH) // stride + 1
    OW = (W + 2 * padding - KW) // stride + 1
    if padding:
        x = jnp.pad(x, ((0, 0), (padding, padding), (padding, padding), (0, 0)))
    pats = []
    for kh in range(KH):
        for kw in range(KW):
            pats.append(x[:, kh:kh + stride * (OH - 1) + 1:stride,
                          kw:kw + stride * (OW - 1) + 1:stride, :])
    a = jnp.concatenate(pats, axis=-1).reshape(N * OH * OW, KH * KW * CP)
    return a, (N, OH, OW)


def _pack_weight(w_oihw, cp_in, cp_out):
    """PyTorch [Cout, Cin, KH, KW] f32 -> [KH*KW*cp_in, cp_out] bf16 (zero-padded)."""
    Cout, Cin, KH, KW = w_oihw.shape
    w = jnp.transpose(w_oihw, (2, 3, 1, 0))           # [KH, KW, Cin, Cout]
    w = jnp.pad(w, ((0, 0), (0, 0), (0, cp_in - Cin), (0, cp_out - Cout)))
    return w.reshape(KH * KW * cp_in, cp_out).astype(jnp.bfloat16)


def _pack_affine(gamma, beta, cp):
    C = gamma.shape[0]
    g = jnp.pad(gamma, (0, cp - C)).reshape(1, cp).astype(jnp.float32)
    b = jnp.pad(beta, (0, cp - C)).reshape(1, cp).astype(jnp.float32)
    return g, b


# --------------------------- parameters & forward ----------------------------

def _conv_w(key, cout, cin, kh, kw):
    return jax.random.normal(key, (cout, cin, kh, kw), jnp.float32) * 0.05


def init_layer_params(key, in_channels, out_channels, n):
    """Mirrors ResnetLayer(in_channels, out_channels, block=ResnetBasicBlock, n=n)."""
    cp_out = _round_up(out_channels, LANE)
    blocks = []
    b_in = in_channels
    ds = 2 if in_channels != out_channels else 1
    for _ in range(n):
        cp_in = _round_up(b_in, LANE)
        key, k1, k2, k3 = jax.random.split(key, 4)
        blk = {
            "downsampling": ds,
            "has_shortcut": b_in != out_channels,     # expansion = 1
            "conv1_w": _pack_weight(_conv_w(k1, out_channels, b_in, 3, 3),
                                    cp_in, cp_out),
            "conv2_w": _pack_weight(_conv_w(k2, out_channels, out_channels, 3, 3),
                                    cp_out, cp_out),
        }
        blk["bn1_gamma"], blk["bn1_beta"] = _pack_affine(
            jnp.ones((out_channels,), jnp.float32),
            jnp.zeros((out_channels,), jnp.float32), cp_out)
        blk["bn2_gamma"], blk["bn2_beta"] = _pack_affine(
            jnp.ones((out_channels,), jnp.float32),
            jnp.zeros((out_channels,), jnp.float32), cp_out)
        if blk["has_shortcut"]:
            blk["sc_w"] = _pack_weight(_conv_w(k3, out_channels, b_in, 1, 1),
                                       cp_in, cp_out)
            blk["sc_gamma"], blk["sc_beta"] = _pack_affine(
                jnp.ones((out_channels,), jnp.float32),
                jnp.zeros((out_channels,), jnp.float32), cp_out)
        blocks.append(blk)
        b_in = out_channels
        ds = 1
    return {"blocks": blocks, "out_channels": out_channels}


def basic_block_forward(x, blk):
    """ResnetBasicBlock: [conv3x3(s=ds)-BN-ReLU, conv3x3-BN] + shortcut, no final act.

    x: [N, H, W, CP_in] bf16 (channel padded).  Returns [N, OH, OW, CP_out] bf16."""
    ds = blk["downsampling"]
    cp_in = x.shape[-1]
    cp_out = blk["conv1_w"].shape[1]

    # residual / shortcut (conv1x1(stride=ds) + BN when channels change)
    if blk["has_shortcut"]:
        a_sc, _ = _im2col(x, (1, 1), stride=ds, padding=0)
        res = fused_conv_bn(a_sc, blk["sc_w"], blk["sc_gamma"], blk["sc_beta"],
                            relu=False, residual=None, cp_in=cp_in)
    else:
        res = x.reshape(-1, cp_in)                 # identity (ds == 1 here)

    # main path
    a1, (N, OH, OW) = _im2col(x, (3, 3), stride=ds, padding=1)
    y1 = fused_conv_bn(a1, blk["conv1_w"], blk["bn1_gamma"], blk["bn1_beta"],
                       relu=True, residual=None, cp_in=cp_in)
    a2, _ = _im2col(y1.reshape(N, OH, OW, cp_out), (3, 3), stride=1, padding=1)
    out = fused_conv_bn(a2, blk["conv2_w"], blk["bn2_gamma"], blk["bn2_beta"],
                        relu=False, residual=res, cp_in=cp_out)
    return out.reshape(N, OH, OW, cp_out)


def resnet_layer_forward(x_nchw, params):
    # NCHW -> NHWC, pad channels to a multiple of 128 lanes, bf16 activations.
    x = jnp.transpose(x_nchw, (0, 2, 3, 1))
    N, H, W, C = x.shape
    cp = _round_up(C, LANE)
    x = jnp.pad(x, ((0, 0), (0, 0), (0, 0), (0, cp - C))).astype(jnp.bfloat16)
    for blk in params["blocks"]:
        x = basic_block_forward(x, blk)
    cout = params["out_channels"]
    # strip channel padding, back to NCHW f32 (match the PyTorch module output)
    return jnp.transpose(x[..., :cout].astype(jnp.float32), (0, 3, 1, 2))


if __name__ == "__main__":
    key = jax.random.PRNGKey(0)
    kx, kp = jax.random.split(key)

    # ResnetLayer(in_channels=16, out_channels=32, n=2): first block downsamples.
    in_channels, out_channels, n = 16, 32, 2
    H = W = 16
    x = jax.random.normal(kx, (2, in_channels, H, W), jnp.float32)   # NCHW
    params = init_layer_params(kp, in_channels, out_channels, n)

    fwd = jax.jit(lambda inp: resnet_layer_forward(inp, params))
    out = jax.block_until_ready(fwd(x))

    assert out.shape == (2, out_channels, H // 2, W // 2), out.shape
    assert bool(jnp.all(jnp.isfinite(out)))
    print("KERNEL_OK")
</pallas_src>

<mosaic_0001>
module attributes {stable_mosaic.version = 11 : i64} {
  func.func @kernel(%arg0: i32, %arg1: memref<128x128xbf16, #tpu.memory_space<vmem>>, %arg2: memref<128x128xbf16, #tpu.memory_space<vmem>>, %arg3: memref<1x128xf32, #tpu.memory_space<vmem>>, %arg4: memref<1x128xf32, #tpu.memory_space<vmem>>, %arg5: memref<128x128xbf16, #tpu.memory_space<vmem>>, %arg6: memref<128x128xf32, #tpu.memory_space<vmem>>) attributes {dimension_semantics = [#tpu.dimension_semantics<arbitrary>], iteration_bounds = array<i64: 1>, scalar_prefetch = 0 : i64, scratch_operands = 1 : i64, tpu.core_type = #tpu.core_type<tc>, window_params = [{transform_indices = @transform_0, window_bounds = array<i64: 128, 128>}, {transform_indices = @transform_1, window_bounds = array<i64: 128, 128>}, {pipeline_mode = #tpu.pipeline_mode<synchronous>, transform_indices = @transform_2, window_bounds = array<i64: 1, 128>}, {pipeline_mode = #tpu.pipeline_mode<synchronous>, transform_indices = @transform_3, window_bounds = array<i64: 1, 128>}, {pipeline_mode = #tpu.pipeline_mode<synchronous>, transform_indices = @transform_4, window_bounds = array<i64: 128, 128>}]} {
    %c0_i32 = arith.constant 0 : i32
    %0 = arith.cmpi eq, %arg0, %c0_i32 : i32
    %1 = arith.extui %0 : i1 to i32
    %c0_i32_0 = arith.constant 0 : i32
    %2 = arith.cmpi ne, %1, %c0_i32_0 : i32
    scf.if %2 {
      %cst_10 = arith.constant 0.000000e+00 : f32
      %12 = vector.broadcast %cst_10 : f32 to vector<128x128xf32>
      %c0_11 = arith.constant 0 : index
      %c0_12 = arith.constant 0 : index
      %13 = vector.load %arg6[%c0_11, %c0_12] : memref<128x128xf32, #tpu.memory_space<vmem>>, vector<128x128xf32>
      tpu.vector_store %arg6[%c0_11, %c0_12], %12 {strides = array<i32>} : memref<128x128xf32, #tpu.memory_space<vmem>>, vector<128x128xf32>,
    } else {
    }
    %c0 = arith.constant 0 : index
    %c0_1 = arith.constant 0 : index
    %3 = vector.load %arg6[%c0, %c0_1] : memref<128x128xf32, #tpu.memory_space<vmem>>, vector<128x128xf32>
    %c0_2 = arith.constant 0 : index
    %c0_3 = arith.constant 0 : index
    %4 = vector.load %arg1[%c0_2, %c0_3] : memref<128x128xbf16, #tpu.memory_space<vmem>>, vector<128x128xbf16>
    %c0_4 = arith.constant 0 : index
    %c0_5 = arith.constant 0 : index
    %5 = vector.load %arg2[%c0_4, %c0_5] : memref<128x128xbf16, #tpu.memory_space<vmem>>, vector<128x128xbf16>
    %cst = arith.constant dense<0.000000e+00> : vector<128x128xf32>
    %6 = tpu.matmul %4, %5, %cst {dimension_numbers = #tpu.dot_dimension_numbers<[1], [0], [0], [1], [0, 0, 1, 1], [], []>} : vector<128x128xbf16>, vector<128x128xbf16>, vector<128x128xf32> -> vector<128x128xf32>
    %7 = arith.addf %3, %6 : vector<128x128xf32>
    %c0_6 = arith.constant 0 : index
    %c0_7 = arith.constant 0 : index
    %8 = vector.load %arg6[%c0_6, %c0_7] : memref<128x128xf32, #tpu.memory_space<vmem>>, vector<128x128xf32>
    tpu.vector_store %arg6[%c0_6, %c0_7], %7 {strides = array<i32>} : memref<128x128xf32, #tpu.memory_space<vmem>>, vector<128x128xf32>,
    %c0_i32_8 = arith.constant 0 : i32
    %9 = arith.cmpi eq, %arg0, %c0_i32_8 : i32
    %10 = arith.extui %9 : i1 to i32
    %c0_i32_9 = arith.constant 0 : i32
    %11 = arith.cmpi ne, %10, %c0_i32_9 : i32
    scf.if %11 {
      %c0_10 = arith.constant 0 : index
      %c0_11 = arith.constant 0 : index
      %12 = vector.load %arg6[%c0_10, %c0_11] : memref<128x128xf32, #tpu.memory_space<vmem>>, vector<128x128xf32>
      %cst_12 = arith.constant dense<0.000000e+00> : vector<128xf32>
      %13 = vector.multi_reduction <add>, %12, %cst_12 [0] : vector<128x128xf32> to vector<128xf32>
      %14 = vector.shape_cast %13 : vector<128xf32> to vector<1x128xf32>
      %cst_13 = arith.constant 1.280000e+02 : f32
      %15 = vector.broadcast %cst_13 : f32 to vector<1x128xf32>
      %16 = arith.divf %14, %15 : vector<1x128xf32>
      %17 = vector.broadcast %16 : vector<1x128xf32> to vector<128x128xf32>
      %18 = arith.subf %12, %17 : vector<128x128xf32>
      %19 = arith.mulf %18, %18 : vector<128x128xf32>
      %cst_14 = arith.constant dense<0.000000e+00> : vector<128xf32>
      %20 = vector.multi_reduction <add>, %19, %cst_14 [0] : vector<128x128xf32> to vector<128xf32>
      %21 = vector.shape_cast %20 : vector<128xf32> to vector<1x128xf32>
      %cst_15 = arith.constant 1.280000e+02 : f32
      %22 = vector.broadcast %cst_15 : f32 to vector<1x128xf32>
      %23 = arith.divf %21, %22 : vector<1x128xf32>
      %24 = vector.broadcast %16 : vector<1x128xf32> to vector<128x128xf32>
      %25 = arith.subf %12, %24 : vector<128x128xf32>
      %cst_16 = arith.constant 9.99999974E-6 : f32
      %26 = vector.broadcast %cst_16 : f32 to vector<1x128xf32>
      %27 = arith.addf %23, %26 : vector<1x128xf32>
      %28 = math.rsqrt %27 : vector<1x128xf32>
      %29 = vector.broadcast %28 : vector<1x128xf32> to vector<128x128xf32>
      %30 = arith.mulf %25, %29 : vector<128x128xf32>
      %c0_17 = arith.constant 0 : index
      %c0_18 = arith.constant 0 : index
      %31 = vector.load %arg3[%c0_17, %c0_18] : memref<1x128xf32, #tpu.memory_space<vmem>>, vector<1x128xf32>
      %32 = vector.broadcast %31 : vector<1x128xf32> to vector<128x128xf32>
      %33 = arith.mulf %30, %32 : vector<128x128xf32>
      %c0_19 = arith.constant 0 : index
      %c0_20 = arith.constant 0 : index
      %34 = vector.load %arg4[%c0_19, %c0_20] : memref<1x128xf32, #tpu.memory_space<vmem>>, vector<1x128xf32>
      %35 = vector.broadcast %34 : vector<1x128xf32> to vector<128x128xf32>
      %36 = arith.addf %33, %35 : vector<128x128xf32>
      %37 = arith.truncf %36 : vector<128x128xf32> to vector<128x128xbf16>
      %c0_21 = arith.constant 0 : index
      %c0_22 = arith.constant 0 : index
      %38 = vector.load %arg5[%c0_21, %c0_22] : memref<128x128xbf16, #tpu.memory_space<vmem>>, vector<128x128xbf16>
      tpu.vector_store %arg5[%c0_21, %c0_22], %37 {strides = array<i32>} : memref<128x128xbf16, #tpu.memory_space<vmem>>, vector<128x128xbf16>,
    } else {
    }
    return
  }
  func.func @transform_0(%arg0: i32) -> (i32, i32) {
    %c0_i32 = arith.constant 0 : i32
    %c0_i32_0 = arith.constant 0 : i32
    return %c0_i32, %arg0 : i32, i32
  }
  func.func @transform_1(%arg0: i32) -> (i32, i32) {
    %c0_i32 = arith.constant 0 : i32
    %c0_i32_0 = arith.constant 0 : i32
    return %arg0, %c0_i32 : i32, i32
  }
  func.func @transform_2(%arg0: i32) -> (i32, i32) {
    %c0_i32 = arith.constant 0 : i32
    %c0_i32_0 = arith.constant 0 : i32
    %c0_i32_1 = arith.constant 0 : i32
    return %c0_i32, %c0_i32_0 : i32, i32
  }
  func.func @transform_3(%arg0: i32) -> (i32, i32) {
    %c0_i32 = arith.constant 0 : i32
    %c0_i32_0 = arith.constant 0 : i32
    %c0_i32_1 = arith.constant 0 : i32
    return %c0_i32, %c0_i32_0 : i32, i32
  }
  func.func @transform_4(%arg0: i32) -> (i32, i32) {
    %c0_i32 = arith.constant 0 : i32
    %c0_i32_0 = arith.constant 0 : i32
    %c0_i32_1 = arith.constant 0 : i32
    return %c0_i32, %c0_i32_0 : i32, i32
  }
}

module attributes {stable_mosaic.version = 11 : i64} {
  func.func @kernel(%arg0: i32, %arg1: memref<128x1152xbf16, #tpu.memory_space<vmem>>, %arg2: memref<1152x128xbf16, #tpu.memory_space<vmem>>, %arg3: memref<1x128xf32, #tpu.memory_space<vmem>>, %arg4: memref<1x128xf32, #tpu.memory_space<vmem>>, %arg5: memref<128x128xbf16, #tpu.memory_space<vmem>>, %arg6: memref<128x128xf32, #tpu.memory_space<vmem>>) attributes {dimension_semantics = [#tpu.dimension_semantics<arbitrary>], iteration_bounds = array<i64: 1>, scalar_prefetch = 0 : i64, scratch_operands = 1 : i64, tpu.core_type = #tpu.core_type<tc>, window_params = [{transform_indices = @transform_0, window_bounds = array<i64: 128, 1152>}, {transform_indices = @transform_1, window_bounds = array<i64: 1152, 128>}, {pipeline_mode = #tpu.pipeline_mode<synchronous>, transform_indices = @transform_2, window_bounds = array<i64: 1, 128>}, {pipeline_mode = #tpu.pipeline_mode<synchronous>, transform_indices = @transform_3, window_bounds = array<i64: 1, 128>}, {pipeline_mode = #tpu.pipeline_mode<synchronous>, transform_indices = @transform_4, window_bounds = array<i64: 128, 128>}]} {
    %c0_i32 = arith.constant 0 : i32
    %0 = arith.cmpi eq, %arg0, %c0_i32 : i32
    %1 = arith.extui %0 : i1 to i32
    %c0_i32_0 = arith.constant 0 : i32
    %2 = arith.cmpi ne, %1, %c0_i32_0 : i32
    scf.if %2 {
      %cst_10 = arith.constant 0.000000e+00 : f32
      %12 = vector.broadcast %cst_10 : f32 to vector<128x128xf32>
      %c0_11 = arith.constant 0 : index
      %c0_12 = arith.constant 0 : index
      %13 = vector.load %arg6[%c0_11, %c0_12] : memref<128x128xf32, #tpu.memory_space<vmem>>, vector<128x128xf32>
      tpu.vector_store %arg6[%c0_11, %c0_12], %12 {strides = array<i32>} : memref<128x128xf32, #tpu.memory_space<vmem>>, vector<128x128xf32>,
    } else {
    }
    %c0 = arith.constant 0 : index
    %c0_1 = arith.constant 0 : index
    %3 = vector.load %arg6[%c0, %c0_1] : memref<128x128xf32, #tpu.memory_space<vmem>>, vector<128x128xf32>
    %c0_2 = arith.constant 0 : index
    %c0_3 = arith.constant 0 : index
    %4 = vector.load %arg1[%c0_2, %c0_3] : memref<128x1152xbf16, #tpu.memory_space<vmem>>, vector<128x1152xbf16>
    %c0_4 = arith.constant 0 : index
    %c0_5 = arith.constant 0 : index
    %5 = vector.load %arg2[%c0_4, %c0_5] : memref<1152x128xbf16, #tpu.memory_space<vmem>>, vector<1152x128xbf16>
    %cst = arith.constant dense<0.000000e+00> : vector<128x128xf32>
    %6 = tpu.matmul %4, %5, %cst {dimension_numbers = #tpu.dot_dimension_numbers<[1], [0], [0], [1], [0, 0, 1, 1], [], []>} : vector<128x1152xbf16>, vector<1152x128xbf16>, vector<128x128xf32> -> vector<128x128xf32>
    %7 = arith.addf %3, %6 : vector<128x128xf32>
    %c0_6 = arith.constant 0 : index
    %c0_7 = arith.constant 0 : index
    %8 = vector.load %arg6[%c0_6, %c0_7] : memref<128x128xf32, #tpu.memory_space<vmem>>, vector<128x128xf32>
    tpu.vector_store %arg6[%c0_6, %c0_7], %7 {strides = array<i32>} : memref<128x128xf32, #tpu.memory_space<vmem>>, vector<128x128xf32>,
    %c0_i32_8 = arith.constant 0 : i32
    %9 = arith.cmpi eq, %arg0, %c0_i32_8 : i32
    %10 = arith.extui %9 : i1 to i32
    %c0_i32_9 = arith.constant 0 : i32
    %11 = arith.cmpi ne, %10, %c0_i32_9 : i32
    scf.if %11 {
      %c0_10 = arith.constant 0 : index
      %c0_11 = arith.constant 0 : index
      %12 = vector.load %arg6[%c0_10, %c0_11] : memref<128x128xf32, #tpu.memory_space<vmem>>, vector<128x128xf32>
      %cst_12 = arith.constant dense<0.000000e+00> : vector<128xf32>
      %13 = vector.multi_reduction <add>, %12, %cst_12 [0] : vector<128x128xf32> to vector<128xf32>
      %14 = vector.shape_cast %13 : vector<128xf32> to vector<1x128xf32>
      %cst_13 = arith.constant 1.280000e+02 : f32
      %15 = vector.broadcast %cst_13 : f32 to vector<1x128xf32>
      %16 = arith.divf %14, %15 : vector<1x128xf32>
      %17 = vector.broadcast %16 : vector<1x128xf32> to vector<128x128xf32>
      %18 = arith.subf %12, %17 : vector<128x128xf32>
      %19 = arith.mulf %18, %18 : vector<128x128xf32>
      %cst_14 = arith.constant dense<0.000000e+00> : vector<128xf32>
      %20 = vector.multi_reduction <add>, %19, %cst_14 [0] : vector<128x128xf32> to vector<128xf32>
      %21 = vector.shape_cast %20 : vector<128xf32> to vector<1x128xf32>
      %cst_15 = arith.constant 1.280000e+02 : f32
      %22 = vector.broadcast %cst_15 : f32 to vector<1x128xf32>
      %23 = arith.divf %21, %22 : vector<1x128xf32>
      %24 = vector.broadcast %16 : vector<1x128xf32> to vector<128x128xf32>
      %25 = arith.subf %12, %24 : vector<128x128xf32>
      %cst_16 = arith.constant 9.99999974E-6 : f32
      %26 = vector.broadcast %cst_16 : f32 to vector<1x128xf32>
      %27 = arith.addf %23, %26 : vector<1x128xf32>
      %28 = math.rsqrt %27 : vector<1x128xf32>
      %29 = vector.broadcast %28 : vector<1x128xf32> to vector<128x128xf32>
      %30 = arith.mulf %25, %29 : vector<128x128xf32>
      %c0_17 = arith.constant 0 : index
      %c0_18 = arith.constant 0 : index
      %31 = vector.load %arg3[%c0_17, %c0_18] : memref<1x128xf32, #tpu.memory_space<vmem>>, vector<1x128xf32>
      %32 = vector.broadcast %31 : vector<1x128xf32> to vector<128x128xf32>
      %33 = arith.mulf %30, %32 : vector<128x128xf32>
      %c0_19 = arith.constant 0 : index
      %c0_20 = arith.constant 0 : index
      %34 = vector.load %arg4[%c0_19, %c0_20] : memref<1x128xf32, #tpu.memory_space<vmem>>, vector<1x128xf32>
      %35 = vector.broadcast %34 : vector<1x128xf32> to vector<128x128xf32>
      %36 = arith.addf %33, %35 : vector<128x128xf32>
      %cst_21 = arith.constant 0.000000e+00 : f32
      %37 = vector.broadcast %cst_21 : f32 to vector<128x128xf32>
      %38 = arith.maximumf %36, %37 : vector<128x128xf32>
      %39 = arith.truncf %38 : vector<128x128xf32> to vector<128x128xbf16>
      %c0_22 = arith.constant 0 : index
      %c0_23 = arith.constant 0 : index
      %40 = vector.load %arg5[%c0_22, %c0_23] : memref<128x128xbf16, #tpu.memory_space<vmem>>, vector<128x128xbf16>
      tpu.vector_store %arg5[%c0_22, %c0_23], %39 {strides = array<i32>} : memref<128x128xbf16, #tpu.memory_space<vmem>>, vector<128x128xbf16>,
    } else {
    }
    return
  }
  func.func @transform_0(%arg0: i32) -> (i32, i32) {
    %c0_i32 = arith.constant 0 : i32
    %c0_i32_0 = arith.constant 0 : i32
    return %c0_i32, %arg0 : i32, i32
  }
  func.func @transform_1(%arg0: i32) -> (i32, i32) {
    %c0_i32 = arith.constant 0 : i32
    %c0_i32_0 = arith.constant 0 : i32
    return %arg0, %c0_i32 : i32, i32
  }
  func.func @transform_2(%arg0: i32) -> (i32, i32) {
    %c0_i32 = arith.constant 0 : i32
    %c0_i32_0 = arith.constant 0 : i32
    %c0_i32_1 = arith.constant 0 : i32
    return %c0_i32, %c0_i32_0 : i32, i32
  }
  func.func @transform_3(%arg0: i32) -> (i32, i32) {
    %c0_i32 = arith.constant 0 : i32
    %c0_i32_0 = arith.constant 0 : i32
    %c0_i32_1 = arith.constant 0 : i32
    return %c0_i32, %c0_i32_0 : i32, i32
  }
  func.func @transform_4(%arg0: i32) -> (i32, i32) {
    %c0_i32 = arith.constant 0 : i32
    %c0_i32_0 = arith.constant 0 : i32
    %c0_i32_1 = arith.constant 0 : i32
    return %c0_i32, %c0_i32_0 : i32, i32
  }
}

module attributes {stable_mosaic.version = 11 : i64} {
  func.func @kernel(%arg0: i32, %arg1: memref<128x1152xbf16, #tpu.memory_space<vmem>>, %arg2: memref<1152x128xbf16, #tpu.memory_space<vmem>>, %arg3: memref<1x128xf32, #tpu.memory_space<vmem>>, %arg4: memref<1x128xf32, #tpu.memory_space<vmem>>, %arg5: memref<128x128xbf16, #tpu.memory_space<vmem>>, %arg6: memref<128x128xbf16, #tpu.memory_space<vmem>>, %arg7: memref<128x128xf32, #tpu.memory_space<vmem>>) attributes {dimension_semantics = [#tpu.dimension_semantics<arbitrary>], iteration_bounds = array<i64: 1>, scalar_prefetch = 0 : i64, scratch_operands = 1 : i64, tpu.core_type = #tpu.core_type<tc>, window_params = [{transform_indices = @transform_0, window_bounds = array<i64: 128, 1152>}, {transform_indices = @transform_1, window_bounds = array<i64: 1152, 128>}, {pipeline_mode = #tpu.pipeline_mode<synchronous>, transform_indices = @transform_2, window_bounds = array<i64: 1, 128>}, {pipeline_mode = #tpu.pipeline_mode<synchronous>, transform_indices = @transform_3, window_bounds = array<i64: 1, 128>}, {pipeline_mode = #tpu.pipeline_mode<synchronous>, transform_indices = @transform_4, window_bounds = array<i64: 128, 128>}, {pipeline_mode = #tpu.pipeline_mode<synchronous>, transform_indices = @transform_5, window_bounds = array<i64: 128, 128>}]} {
    %c0_i32 = arith.constant 0 : i32
    %0 = arith.cmpi eq, %arg0, %c0_i32 : i32
    %1 = arith.extui %0 : i1 to i32
    %c0_i32_0 = arith.constant 0 : i32
    %2 = arith.cmpi ne, %1, %c0_i32_0 : i32
    scf.if %2 {
      %cst_10 = arith.constant 0.000000e+00 : f32
      %12 = vector.broadcast %cst_10 : f32 to vector<128x128xf32>
      %c0_11 = arith.constant 0 : index
      %c0_12 = arith.constant 0 : index
      %13 = vector.load %arg7[%c0_11, %c0_12] : memref<128x128xf32, #tpu.memory_space<vmem>>, vector<128x128xf32>
      tpu.vector_store %arg7[%c0_11, %c0_12], %12 {strides = array<i32>} : memref<128x128xf32, #tpu.memory_space<vmem>>, vector<128x128xf32>,
    } else {
    }
    %c0 = arith.constant 0 : index
    %c0_1 = arith.constant 0 : index
    %3 = vector.load %arg7[%c0, %c0_1] : memref<128x128xf32, #tpu.memory_space<vmem>>, vector<128x128xf32>
    %c0_2 = arith.constant 0 : index
    %c0_3 = arith.constant 0 : index
    %4 = vector.load %arg1[%c0_2, %c0_3] : memref<128x1152xbf16, #tpu.memory_space<vmem>>, vector<128x1152xbf16>
    %c0_4 = arith.constant 0 : index
    %c0_5 = arith.constant 0 : index
    %5 = vector.load %arg2[%c0_4, %c0_5] : memref<1152x128xbf16, #tpu.memory_space<vmem>>, vector<1152x128xbf16>
    %cst = arith.constant dense<0.000000e+00> : vector<128x128xf32>
    %6 = tpu.matmul %4, %5, %cst {dimension_numbers = #tpu.dot_dimension_numbers<[1], [0], [0], [1], [0, 0, 1, 1], [], []>} : vector<128x1152xbf16>, vector<1152x128xbf16>, vector<128x128xf32> -> vector<128x128xf32>
    %7 = arith.addf %3, %6 : vector<128x128xf32>
    %c0_6 = arith.constant 0 : index
    %c0_7 = arith.constant 0 : index
    %8 = vector.load %arg7[%c0_6, %c0_7] : memref<128x128xf32, #tpu.memory_space<vmem>>, vector<128x128xf32>
    tpu.vector_store %arg7[%c0_6, %c0_7], %7 {strides = array<i32>} : memref<128x128xf32, #tpu.memory_space<vmem>>, vector<128x128xf32>,
    %c0_i32_8 = arith.constant 0 : i32
    %9 = arith.cmpi eq, %arg0, %c0_i32_8 : i32
    %10 = arith.extui %9 : i1 to i32
    %c0_i32_9 = arith.constant 0 : i32
    %11 = arith.cmpi ne, %10, %c0_i32_9 : i32
    scf.if %11 {
      %c0_10 = arith.constant 0 : index
      %c0_11 = arith.constant 0 : index
      %12 = vector.load %arg7[%c0_10, %c0_11] : memref<128x128xf32, #tpu.memory_space<vmem>>, vector<128x128xf32>
      %cst_12 = arith.constant dense<0.000000e+00> : vector<128xf32>
      %13 = vector.multi_reduction <add>, %12, %cst_12 [0] : vector<128x128xf32> to vector<128xf32>
      %14 = vector.shape_cast %13 : vector<128xf32> to vector<1x128xf32>
      %cst_13 = arith.constant 1.280000e+02 : f32
      %15 = vector.broadcast %cst_13 : f32 to vector<1x128xf32>
      %16 = arith.divf %14, %15 : vector<1x128xf32>
      %17 = vector.broadcast %16 : vector<1x128xf32> to vector<128x128xf32>
      %18 = arith.subf %12, %17 : vector<128x128xf32>
      %19 = arith.mulf %18, %18 : vector<128x128xf32>
      %cst_14 = arith.constant dense<0.000000e+00> : vector<128xf32>
      %20 = vector.multi_reduction <add>, %19, %cst_14 [0] : vector<128x128xf32> to vector<128xf32>
      %21 = vector.shape_cast %20 : vector<128xf32> to vector<1x128xf32>
      %cst_15 = arith.constant 1.280000e+02 : f32
      %22 = vector.broadcast %cst_15 : f32 to vector<1x128xf32>
      %23 = arith.divf %21, %22 : vector<1x128xf32>
      %24 = vector.broadcast %16 : vector<1x128xf32> to vector<128x128xf32>
      %25 = arith.subf %12, %24 : vector<128x128xf32>
      %cst_16 = arith.constant 9.99999974E-6 : f32
      %26 = vector.broadcast %cst_16 : f32 to vector<1x128xf32>
      %27 = arith.addf %23, %26 : vector<1x128xf32>
      %28 = math.rsqrt %27 : vector<1x128xf32>
      %29 = vector.broadcast %28 : vector<1x128xf32> to vector<128x128xf32>
      %30 = arith.mulf %25, %29 : vector<128x128xf32>
      %c0_17 = arith.constant 0 : index
      %c0_18 = arith.constant 0 : index
      %31 = vector.load %arg3[%c0_17, %c0_18] : memref<1x128xf32, #tpu.memory_space<vmem>>, vector<1x128xf32>
      %32 = vector.broadcast %31 : vector<1x128xf32> to vector<128x128xf32>
      %33 = arith.mulf %30, %32 : vector<128x128xf32>
      %c0_19 = arith.constant 0 : index
      %c0_20 = arith.constant 0 : index
      %34 = vector.load %arg4[%c0_19, %c0_20] : memref<1x128xf32, #tpu.memory_space<vmem>>, vector<1x128xf32>
      %35 = vector.broadcast %34 : vector<1x128xf32> to vector<128x128xf32>
      %36 = arith.addf %33, %35 : vector<128x128xf32>
      %c0_21 = arith.constant 0 : index
      %c0_22 = arith.constant 0 : index
      %37 = vector.load %arg5[%c0_21, %c0_22] : memref<128x128xbf16, #tpu.memory_space<vmem>>, vector<128x128xbf16>
      %38 = arith.extf %37 : vector<128x128xbf16> to vector<128x128xf32>
      %39 = arith.addf %36, %38 : vector<128x128xf32>
      %40 = arith.truncf %39 : vector<128x128xf32> to vector<128x128xbf16>
      %c0_23 = arith.constant 0 : index
      %c0_24 = arith.constant 0 : index
      %41 = vector.load %arg6[%c0_23, %c0_24] : memref<128x128xbf16, #tpu.memory_space<vmem>>, vector<128x128xbf16>
      tpu.vector_store %arg6[%c0_23, %c0_24], %40 {strides = array<i32>} : memref<128x128xbf16, #tpu.memory_space<vmem>>, vector<128x128xbf16>,
    } else {
    }
    return
  }
  func.func @transform_0(%arg0: i32) -> (i32, i32) {
    %c0_i32 = arith.constant 0 : i32
    %c0_i32_0 = arith.constant 0 : i32
    return %c0_i32, %arg0 : i32, i32
  }
  func.func @transform_1(%arg0: i32) -> (i32, i32) {
    %c0_i32 = arith.constant 0 : i32
    %c0_i32_0 = arith.constant 0 : i32
    return %arg0, %c0_i32 : i32, i32
  }
  func.func @transform_2(%arg0: i32) -> (i32, i32) {
    %c0_i32 = arith.constant 0 : i32
    %c0_i32_0 = arith.constant 0 : i32
    %c0_i32_1 = arith.constant 0 : i32
    return %c0_i32, %c0_i32_0 : i32, i32
  }
  func.func @transform_3(%arg0: i32) -> (i32, i32) {
    %c0_i32 = arith.constant 0 : i32
    %c0_i32_0 = arith.constant 0 : i32
    %c0_i32_1 = arith.constant 0 : i32
    return %c0_i32, %c0_i32_0 : i32, i32
  }
  func.func @transform_4(%arg0: i32) -> (i32, i32) {
    %c0_i32 = arith.constant 0 : i32
    %c0_i32_0 = arith.constant 0 : i32
    %c0_i32_1 = arith.constant 0 : i32
    return %c0_i32, %c0_i32_0 : i32, i32
  }
  func.func @transform_5(%arg0: i32) -> (i32, i32) {
    %c0_i32 = arith.constant 0 : i32
    %c0_i32_0 = arith.constant 0 : i32
    %c0_i32_1 = arith.constant 0 : i32
    return %c0_i32, %c0_i32_0 : i32, i32
  }
}

</mosaic_0001>

<llo_original>
// kernel: _lambda_.5
$region0: #{_lambda_.5}
  #allocation0 [shape = 'u32[]', space=smem, size = 0x4, offset = 0x4, fixed_abs, tag = 'smem constant byte address 0x4 - core index']
  #allocation1 [shape = 'u32[144,128]{1,0:T(1,128)}', space=vmem, size = 0x12000, scoped, tag = 'internal scratch']
  #allocation2 [shape = 'f32[128,128]{1,0:T(8,128)}', space=vmem, size = 0x10000, scoped, tag = 'scratch operand']
  %s0 = inlined_call_operand.vmem [shape: bf16[128,128], index: 0, kind: input, shape index: {}]
  %s1 = inlined_call_operand.vmem [shape: bf16[128,128], index: 1, kind: input, shape index: {}]
  %s2 = inlined_call_operand.vmem [shape: f32[1,128], index: 2, kind: input, shape index: {}]
  %s3 = inlined_call_operand.vmem [shape: f32[1,128], index: 3, kind: input, shape index: {}]
  %s4 = inlined_call_operand.vmem [shape: bf16[128,128], index: 4, kind: output, shape index: {}]
  %s5 = sld [smem:[#allocation0]]
  $region34: #{_lambda_.5} parent=0
    _
  %s7 = ssub.s32 1, %s5
  %s8 = scalar_select 0, %s7, %s5
  // Predicated region
  $region2: #{_lambda_.5} parent=0 // pred_check
    _
  $region3: #{_lambda_.5} parent=0 // pred_check_branch
    %10 = sbr.rel (0) target = $region5
  $region4: #{_lambda_.5} parent=0 // pred_region
    _
  $region5: #{_lambda_.5} parent=0 // pred_fallthru
    _
  // Predicated region
  $region6: #{_lambda_.5} parent=0 // pred_check
    _
  $region7: #{_lambda_.5} parent=0 // pred_check_branch
    %12 = sbr.rel (0) target = $region9
  $region8: #{_lambda_.5} parent=0 // pred_region
    _
  $region9: #{_lambda_.5} parent=0 // pred_fallthru
    _
  // Predicated region
  $region10: #{_lambda_.5} parent=0 // pred_check
    _
  $region11: #{_lambda_.5} parent=0 // pred_check_branch
    %14 = sbr.rel (0) target = $region13
  $region12: #{_lambda_.5} parent=0 // pred_region
    _
  $region13: #{_lambda_.5} parent=0 // pred_fallthru
    _
  // Predicated region
  $region14: #{_lambda_.5} parent=0 // pred_check
    _
  $region15: #{_lambda_.5} parent=0 // pred_check_branch
    %16 = sbr.rel (0) target = $region17
  $region16: #{_lambda_.5} parent=0 // pred_region
    _
  $region17: #{_lambda_.5} parent=0 // pred_fallthru
    _
  %p18 = scmp.eq.s32.totalorder 0, 0
  // Predicated region
  $region18: #{_lambda_.5} parent=0 // pred_check
    %p19 = pneg %p18
  $region19: #{_lambda_.5} parent=0 // pred_check_branch
    %21 = sbr.rel (%p19) target = $region21
  $region20: #{_lambda_.5} parent=0 // pred_region
    %22 = vst [vmem:[#allocation2] sm:$0xff] 0.0
    %23 = vst [vmem:[#allocation2 + $0x8] sm:$0xff] 0.0
    %24 = vst [vmem:[#allocation2 + $0x10] sm:$0xff] 0.0
    %25 = vst [vmem:[#allocation2 + $0x18] sm:$0xff] 0.0
    %26 = vst [vmem:[#allocation2 + $0x20] sm:$0xff] 0.0
    %27 = vst [vmem:[#allocation2 + $0x28] sm:$0xff] 0.0
    %28 = vst [vmem:[#allocation2 + $0x30] sm:$0xff] 0.0
    %29 = vst [vmem:[#allocation2 + $0x38] sm:$0xff] 0.0
    %30 = vst [vmem:[#allocation2 + $0x40] sm:$0xff] 0.0
    %31 = vst [vmem:[#allocation2 + $0x48] sm:$0xff] 0.0
    %32 = vst [vmem:[#allocation2 + $0x50] sm:$0xff] 0.0
    %33 = vst [vmem:[#allocation2 + $0x58] sm:$0xff] 0.0
    %34 = vst [vmem:[#allocation2 + $0x60] sm:$0xff] 0.0
    %35 = vst [vmem:[#allocation2 + $0x68] sm:$0xff] 0.0
    %36 = vst [vmem:[#allocation2 + $0x70] sm:$0xff] 0.0
    %37 = vst [vmem:[#allocation2 + $0x78] sm:$0xff] 0.0
  $region21: #{_lambda_.5} parent=0 // pred_fallthru
    _
  %v38 = vld [vmem:[#allocation2] sm:$0xff]
  %v39 = vld [vmem:[#allocation2 + $0x8] sm:$0xff]
  %v40 = vld [vmem:[#allocation2 + $0x10] sm:$0xff]
  %v41 = vld [vmem:[#allocation2 + $0x18] sm:$0xff]
  %v42 = vld [vmem:[#allocation2 + $0x20] sm:$0xff]
  %v43 = vld [vmem:[#allocation2 + $0x28] sm:$0xff]
  %v44 = vld [vmem:[#allocation2 + $0x30] sm:$0xff]
  %v45 = vld [vmem:[#allocation2 + $0x38] sm:$0xff]
  %v46 = vld [vmem:[#allocation2 + $0x40] sm:$0xff]
  %v47 = vld [vmem:[#allocation2 + $0x48] sm:$0xff]
  %v48 = vld [vmem:[#allocation2 + $0x50] sm:$0xff]
  %v49 = vld [vmem:[#allocation2 + $0x58] sm:$0xff]
  %v50 = vld [vmem:[#allocation2 + $0x60] sm:$0xff]
  %v51 = vld [vmem:[#allocation2 + $0x68] sm:$0xff]
  %v52 = vld [vmem:[#allocation2 + $0x70] sm:$0xff]
  %v53 = vld [vmem:[#allocation2 + $0x78] sm:$0xff]
  %v54 = vld [vmem:[%s0] sm:$0xf]
  %v55 = vld [vmem:[%s0 + $0x4] sm:$0xf]
  %v56 = vld [vmem:[%s0 + $0x8] sm:$0xf]
  %v57 = vld [vmem:[%s0 + $0xc] sm:$0xf]
  %v58 = vld [vmem:[%s0 + $0x10] sm:$0xf]
  %v59 = vld [vmem:[%s0 + $0x14] sm:$0xf]
  %v60 = vld [vmem:[%s0 + $0x18] sm:$0xf]
  %v61 = vld [vmem:[%s0 + $0x1c] sm:$0xf]
  %v62 = vld [vmem:[%s0 + $0x20] sm:$0xf]
  %v63 = vld [vmem:[%s0 + $0x24] sm:$0xf]
  %v64 = vld [vmem:[%s0 + $0x28] sm:$0xf]
  %v65 = vld [vmem:[%s0 + $0x2c] sm:$0xf]
  %v66 = vld [vmem:[%s0 + $0x30] sm:$0xf]
  %v67 = vld [vmem:[%s0 + $0x34] sm:$0xf]
  %v68 = vld [vmem:[%s0 + $0x38] sm:$0xf]
  %v69 = vld [vmem:[%s0 + $0x3c] sm:$0xf]
  %v70 = vld [vmem:[%s1] sm:$0xf]
  %v71 = vld [vmem:[%s1 + $0x4] sm:$0xf]
  %v72 = vld [vmem:[%s1 + $0x8] sm:$0xf]
  %v73 = vld [vmem:[%s1 + $0xc] sm:$0xf]
  %v74 = vld [vmem:[%s1 + $0x10] sm:$0xf]
  %v75 = vld [vmem:[%s1 + $0x14] sm:$0xf]
  %v76 = vld [vmem:[%s1 + $0x18] sm:$0xf]
  %v77 = vld [vmem:[%s1 + $0x1c] sm:$0xf]
  %v78 = vld [vmem:[%s1 + $0x20] sm:$0xf]
  %v79 = vld [vmem:[%s1 + $0x24] sm:$0xf]
  %v80 = vld [vmem:[%s1 + $0x28] sm:$0xf]
  %v81 = vld [vmem:[%s1 + $0x2c] sm:$0xf]
  %v82 = vld [vmem:[%s1 + $0x30] sm:$0xf]
  %v83 = vld [vmem:[%s1 + $0x34] sm:$0xf]
  %v84 = vld [vmem:[%s1 + $0x38] sm:$0xf]
  %v85 = vld [vmem:[%s1 + $0x3c] sm:$0xf]
  %v102 = vunpack.c.l.b16 %v54
  %v103 = vunpack.c.l.b16 %v55
  %v104 = vunpack.c.l.b16 %v56
  %v105 = vunpack.c.l.b16 %v57
  %v106 = vunpack.c.l.b16 %v58
  %v107 = vunpack.c.l.b16 %v59
  %v108 = vunpack.c.l.b16 %v60
  %v109 = vunpack.c.l.b16 %v61
  %v110 = vunpack.c.l.b16 %v62
  %v111 = vunpack.c.l.b16 %v63
  %v112 = vunpack.c.l.b16 %v64
  %v113 = vunpack.c.l.b16 %v65
  %v114 = vunpack.c.l.b16 %v66
  %v115 = vunpack.c.l.b16 %v67
  %v116 = vunpack.c.l.b16 %v68
  %v117 = vunpack.c.l.b16 %v69
  %v118 = vpack.c.b16 %v103, %v102
  %v119 = vpack.c.b16 %v105, %v104
  %v120 = vpack.c.b16 %v107, %v106
  %v121 = vpack.c.b16 %v109, %v108
  %v122 = vpack.c.b16 %v111, %v110
  %v123 = vpack.c.b16 %v113, %v112
  %v124 = vpack.c.b16 %v115, %v114
  %v125 = vpack.c.b16 %v117, %v116
  %v150 = vunpack.c.l.b16 %v70
  %v151 = vunpack.c.l.b16 %v71
  %v152 = vunpack.c.l.b16 %v72
  %v153 = vunpack.c.l.b16 %v73
  %v154 = vunpack.c.l.b16 %v74
  %v155 = vunpack.c.l.b16 %v75
  %v156 = vunpack.c.l.b16 %v76
  %v157 = vunpack.c.l.b16 %v77
  %v158 = vunpack.c.l.b16 %v78
  %v159 = vunpack.c.l.b16 %v79
  %v160 = vunpack.c.l.b16 %v80
  %v161 = vunpack.c.l.b16 %v81
  %v162 = vunpack.c.l.b16 %v82
  %v163 = vunpack.c.l.b16 %v83
  %v164 = vunpack.c.l.b16 %v84
  %v165 = vunpack.c.l.b16 %v85
  %v166 = vpack.c.b16 %v151, %v150
  %v167 = vpack.c.b16 %v153, %v152
  %v168 = vpack.c.b16 %v155, %v154
  %v169 = vpack.c.b16 %v157, %v156
  %v170 = vpack.c.b16 %v159, %v158
  %v171 = vpack.c.b16 %v161, %v160
  %v172 = vpack.c.b16 %v163, %v162
  %v173 = vpack.c.b16 %v165, %v164
  %182 = vmatprep.subr.bf16.mxu0 0
  %183 = vmatpush1.bf16.msra.mxu0 %v173
  %184 = vmatprep.subr.bf16.mxu0 0
  %185 = vmatpush1.bf16.msra.mxu0 %v172
  %186 = vmatprep.subr.bf16.mxu0 0
  %187 = vmatpush1.bf16.msra.mxu0 %v171
  %188 = vmatprep.subr.bf16.mxu0 0
  %189 = vmatpush1.bf16.msra.mxu0 %v170
  %190 = vmatprep.subr.bf16.mxu0 0
  %191 = vmatpush1.bf16.msra.mxu0 %v169
  %192 = vmatprep.subr.bf16.mxu0 0
  %193 = vmatpush1.bf16.msra.mxu0 %v168
  %194 = vmatprep.subr.bf16.mxu0 0
  %195 = vmatpush1.bf16.msra.mxu0 %v167
  %196 = vmatprep.subr.bf16.mxu0 0
  %197 = vmatpush1.bf16.msra.mxu0 %v166
  %198 = vmatprep.subr.bf16.mxu0 0
  %199 = vmatpush2.bf16.msra.mxu0 0
  %200 = vmatprep.subr.bf16.mxu0 0
  %201 = vmatpush2.bf16.msra.mxu0 0
  %202 = vmatprep.subr.bf16.mxu0 0
  %203 = vmatpush2.bf16.msra.mxu0 0
  %204 = vmatprep.subr.bf16.mxu0 0
  %205 = vmatpush2.bf16.msra.mxu0 0
  %206 = vmatprep.subr.bf16.mxu0 0
  %207 = vmatpush2.bf16.msra.mxu0 0
  %208 = vmatprep.subr.bf16.mxu0 0
  %209 = vmatpush2.bf16.msra.mxu0 0
  %210 = vmatprep.subr.bf16.mxu0 0
  %211 = vmatpush2.bf16.msra.mxu0 0
  %212 = vmatprep.subr.bf16.mxu0 0
  %213 = vmatpush2.bf16.msra.mxu0 0
  %214 = vmatprep.mubr.bf16.mxu0 0
  %215 = vmatmul.mubr.bf16.gmra.mxu0 %v118
  %v216 = vpop.f32.mrf.mxu0
  %v217 = vadd.f32 0.0, %v216
  %v218 = vpop.f32.mrf.mxu0
  %v219 = vpop.f32.mrf.mxu0
  %v220 = vadd.f32 0.0, %v219
  %v221 = vpop.f32.mrf.mxu0
  %222 = vmatprep.mubr.bf16.mxu0 0
  %223 = vmatmul.mubr.bf16.gmra.mxu0 %v119
  %v224 = vpop.f32.mrf.mxu0
  %v225 = vadd.f32 0.0, %v224
  %v226 = vpop.f32.mrf.mxu0
  %v227 = vpop.f32.mrf.mxu0
  %v228 = vadd.f32 0.0, %v227
  %v229 = vpop.f32.mrf.mxu0
  %230 = vmatprep.mubr.bf16.mxu0 0
  %231 = vmatmul.mubr.bf16.gmra.mxu0 %v120
  %v232 = vpop.f32.mrf.mxu0
  %v233 = vadd.f32 0.0, %v232
  %v234 = vpop.f32.mrf.mxu0
  %v235 = vpop.f32.mrf.mxu0
  %v236 = vadd.f32 0.0, %v235
  %v237 = vpop.f32.mrf.mxu0
  %238 = vmatprep.mubr.bf16.mxu0 0
  %239 = vmatmul.mubr.bf16.gmra.mxu0 %v121
  %v240 = vpop.f32.mrf.mxu0
  %v241 = vadd.f32 0.0, %v240
  %v242 = vpop.f32.mrf.mxu0
  %v243 = vpop.f32.mrf.mxu0
  %v244 = vadd.f32 0.0, %v243
  %v245 = vpop.f32.mrf.mxu0
  %246 = vmatprep.mubr.bf16.mxu0 0
  %247 = vmatmul.mubr.bf16.gmra.mxu0 %v122
  %v248 = vpop.f32.mrf.mxu0
  %v249 = vadd.f32 0.0, %v248
  %v250 = vpop.f32.mrf.mxu0
  %v251 = vpop.f32.mrf.mxu0
  %v252 = vadd.f32 0.0, %v251
  %v253 = vpop.f32.mrf.mxu0
  %254 = vmatprep.mubr.bf16.mxu0 0
  %255 = vmatmul.mubr.bf16.gmra.mxu0 %v123
  %v256 = vpop.f32.mrf.mxu0
  %v257 = vadd.f32 0.0, %v256
  %v258 = vpop.f32.mrf.mxu0
  %v259 = vpop.f32.mrf.mxu0
  %v260 = vadd.f32 0.0, %v259
  %v261 = vpop.f32.mrf.mxu0
  %262 = vmatprep.mubr.bf16.mxu0 0
  %263 = vmatmul.mubr.bf16.gmra.mxu0 %v124
  %v264 = vpop.f32.mrf.mxu0
  %v265 = vadd.f32 0.0, %v264
  %v266 = vpop.f32.mrf.mxu0
  %v267 = vpop.f32.mrf.mxu0
  %v268 = vadd.f32 0.0, %v267
  %v269 = vpop.f32.mrf.mxu0
  %270 = vmatprep.mubr.bf16.mxu0 0
  %271 = vmatmul.mubr.bf16.gmra.mxu0 %v125
  %v272 = vpop.f32.mrf.mxu0
  %v273 = vadd.f32 0.0, %v272
  %v274 = vpop.f32.mrf.mxu0
  %v275 = vpop.f32.mrf.mxu0
  %v276 = vadd.f32 0.0, %v275
  %v277 = vpop.f32.mrf.mxu0
  %278 = vdwg.mxu0
  %v279 = vadd.f32 %v38, %v217
  %v280 = vadd.f32 %v39, %v220
  %v281 = vadd.f32 %v40, %v225
  %v282 = vadd.f32 %v41, %v228
  %v283 = vadd.f32 %v42, %v233
  %v284 = vadd.f32 %v43, %v236
  %v285 = vadd.f32 %v44, %v241
  %v286 = vadd.f32 %v45, %v244
  %v287 = vadd.f32 %v46, %v249
  %v288 = vadd.f32 %v47, %v252
  %v289 = vadd.f32 %v48, %v257
  %v290 = vadd.f32 %v49, %v260
  %v291 = vadd.f32 %v50, %v265
  %v292 = vadd.f32 %v51, %v268
  %v293 = vadd.f32 %v52, %v273
  %v294 = vadd.f32 %v53, %v276
  %295 = vst [vmem:[#allocation2] sm:$0xff] %v279
  %296 = vst [vmem:[#allocation2 + $0x8] sm:$0xff] %v280
  %297 = vst [vmem:[#allocation2 + $0x10] sm:$0xff] %v281
  %298 = vst [vmem:[#allocation2 + $0x18] sm:$0xff] %v282
  %299 = vst [vmem:[#allocation2 + $0x20] sm:$0xff] %v283
  %300 = vst [vmem:[#allocation2 + $0x28] sm:$0xff] %v284
  %301 = vst [vmem:[#allocation2 + $0x30] sm:$0xff] %v285
  %302 = vst [vmem:[#allocation2 + $0x38] sm:$0xff] %v286
  %303 = vst [vmem:[#allocation2 + $0x40] sm:$0xff] %v287
  %304 = vst [vmem:[#allocation2 + $0x48] sm:$0xff] %v288
  %305 = vst [vmem:[#allocation2 + $0x50] sm:$0xff] %v289
  %306 = vst [vmem:[#allocation2 + $0x58] sm:$0xff] %v290
  %307 = vst [vmem:[#allocation2 + $0x60] sm:$0xff] %v291
  %308 = vst [vmem:[#allocation2 + $0x68] sm:$0xff] %v292
  %309 = vst [vmem:[#allocation2 + $0x70] sm:$0xff] %v293
  %310 = vst [vmem:[#allocation2 + $0x78] sm:$0xff] %v294
  // Predicated region
  $region22: #{_lambda_.5} parent=0 // pred_check
    %p311 = pneg %p18
  $region23: #{_lambda_.5} parent=0 // pred_check_branch
    %313 = sbr.rel (%p311) target = $region25
  $region24: #{_lambda_.5} parent=0 // pred_region
    %v314 = vld [vmem:[#allocation2] sm:$0xff]
    %v315 = vld [vmem:[#allocation2 + $0x8] sm:$0xff]
    %v316 = vld [vmem:[#allocation2 + $0x10] sm:$0xff]
    %v317 = vld [vmem:[#allocation2 + $0x18] sm:$0xff]
    %v318 = vld [vmem:[#allocation2 + $0x20] sm:$0xff]
    %v319 = vld [vmem:[#allocation2 + $0x28] sm:$0xff]
    %v320 = vld [vmem:[#allocation2 + $0x30] sm:$0xff]
    %v321 = vld [vmem:[#allocation2 + $0x38] sm:$0xff]
    %v322 = vld [vmem:[#allocation2 + $0x40] sm:$0xff]
    %v323 = vld [vmem:[#allocation2 + $0x48] sm:$0xff]
    %v324 = vld [vmem:[#allocation2 + $0x50] sm:$0xff]
    %v325 = vld [vmem:[#allocation2 + $0x58] sm:$0xff]
    %v326 = vld [vmem:[#allocation2 + $0x60] sm:$0xff]
    %v327 = vld [vmem:[#allocation2 + $0x68] sm:$0xff]
    %v328 = vld [vmem:[#allocation2 + $0x70] sm:$0xff]
    %v329 = vld [vmem:[#allocation2 + $0x78] sm:$0xff]
    %v330 = vadd.f32 %v314, %v315
    %v331 = vadd.f32 %v330, %v316
    %v332 = vadd.f32 %v331, %v317
    %v333 = vadd.f32 %v332, %v318
    %v334 = vadd.f32 %v333, %v319
    %v335 = vadd.f32 %v334, %v320
    %v336 = vadd.f32 %v335, %v321
    %v337 = vadd.f32 %v336, %v322
    %v338 = vadd.f32 %v337, %v323
    %v339 = vadd.f32 %v338, %v324
    %v340 = vadd.f32 %v339, %v325
    %v341 = vadd.f32 %v340, %v326
    %v342 = vadd.f32 %v341, %v327
    %v343 = vadd.f32 %v342, %v328
    %v344 = vadd.f32 %v343, %v329
    %v345 = vrot.slane %v344, 4
    %v346 = vadd.f32 %v344, %v345
    %v347 = vrot.slane %v346, 2
    %v348 = vadd.f32 %v346, %v347
    %v349 = vrot.slane %v348, 1
    %v350 = vadd.f32 %v348, %v349
    %v351 = vrcp.pop 128.0
    %v352 = vmul.f32 %v350, %v351
    %v353 = vsub.f32 %v314, %v352
    %v354 = vsub.f32 %v315, %v352
    %v355 = vsub.f32 %v316, %v352
    %v356 = vsub.f32 %v317, %v352
    %v357 = vsub.f32 %v318, %v352
    %v358 = vsub.f32 %v319, %v352
    %v359 = vsub.f32 %v320, %v352
    %v360 = vsub.f32 %v321, %v352
    %v361 = vsub.f32 %v322, %v352
    %v362 = vsub.f32 %v323, %v352
    %v363 = vsub.f32 %v324, %v352
    %v364 = vsub.f32 %v325, %v352
    %v365 = vsub.f32 %v326, %v352
    %v366 = vsub.f32 %v327, %v352
    %v367 = vsub.f32 %v328, %v352
    %v368 = vsub.f32 %v329, %v352
    %v369 = vmul.f32 %v353, %v353
    %v370 = vmul.f32 %v354, %v354
    %v371 = vmul.f32 %v355, %v355
    %v372 = vmul.f32 %v356, %v356
    %v373 = vmul.f32 %v357, %v357
    %v374 = vmul.f32 %v358, %v358
    %v375 = vmul.f32 %v359, %v359
    %v376 = vmul.f32 %v360, %v360
    %v377 = vmul.f32 %v361, %v361
    %v378 = vmul.f32 %v362, %v362
    %v379 = vmul.f32 %v363, %v363
    %v380 = vmul.f32 %v364, %v364
    %v381 = vmul.f32 %v365, %v365
    %v382 = vmul.f32 %v366, %v366
    %v383 = vmul.f32 %v367, %v367
    %v384 = vmul.f32 %v368, %v368
    %v385 = vadd.f32 %v369, %v370
    %v386 = vadd.f32 %v385, %v371
    %v387 = vadd.f32 %v386, %v372
    %v388 = vadd.f32 %v387, %v373
    %v389 = vadd.f32 %v388, %v374
    %v390 = vadd.f32 %v389, %v375
    %v391 = vadd.f32 %v390, %v376
    %v392 = vadd.f32 %v391, %v377
    %v393 = vadd.f32 %v392, %v378
    %v394 = vadd.f32 %v393, %v379
    %v395 = vadd.f32 %v394, %v380
    %v396 = vadd.f32 %v395, %v381
    %v397 = vadd.f32 %v396, %v382
    %v398 = vadd.f32 %v397, %v383
    %v399 = vadd.f32 %v398, %v384
    %v400 = vrot.slane %v399, 4
    %v401 = vadd.f32 %v399, %v400
    %v402 = vrot.slane %v401, 2
    %v403 = vadd.f32 %v401, %v402
    %v404 = vrot.slane %v403, 1
    %v405 = vadd.f32 %v403, %v404
    %v406 = vmul.f32 %v405, %v351
    %v407 = vadd.f32 %v406, 1e-05
    %v408 = vrsqrt.pop %v407
    %v409 = vmul.f32 %v353, %v408
    %v410 = vmul.f32 %v354, %v408
    %v411 = vmul.f32 %v355, %v408
    %v412 = vmul.f32 %v356, %v408
    %v413 = vmul.f32 %v357, %v408
    %v414 = vmul.f32 %v358, %v408
    %v415 = vmul.f32 %v359, %v408
    %v416 = vmul.f32 %v360, %v408
    %v417 = vmul.f32 %v361, %v408
    %v418 = vmul.f32 %v362, %v408
    %v419 = vmul.f32 %v363, %v408
    %v420 = vmul.f32 %v364, %v408
    %v421 = vmul.f32 %v365, %v408
    %v422 = vmul.f32 %v366, %v408
    %v423 = vmul.f32 %v367, %v408
    %v424 = vmul.f32 %v368, %v408
    %v425 = vld [vmem:[%s2] sm:$0x1]
    %v427 = vlaneseq
    %v428 = vshrl.u32 %v427, 7
    %v429 = vsub.s32 0, %v428
    %v430 = vrot.slane %v425, %v429
    %v432 = vmul.f32 %v409, %v430
    %v433 = vmul.f32 %v410, %v430
    %v434 = vmul.f32 %v411, %v430
    %v435 = vmul.f32 %v412, %v430
    %v436 = vmul.f32 %v413, %v430
    %v437 = vmul.f32 %v414, %v430
    %v438 = vmul.f32 %v415, %v430
    %v439 = vmul.f32 %v416, %v430
    %v440 = vmul.f32 %v417, %v430
    %v441 = vmul.f32 %v418, %v430
    %v442 = vmul.f32 %v419, %v430
    %v443 = vmul.f32 %v420, %v430
    %v444 = vmul.f32 %v421, %v430
    %v445 = vmul.f32 %v422, %v430
    %v446 = vmul.f32 %v423, %v430
    %v447 = vmul.f32 %v424, %v430
    %v448 = vld [vmem:[%s3] sm:$0x1]
    %v450 = vlaneseq
    %v451 = vshrl.u32 %v450, 7
    %v452 = vsub.s32 0, %v451
    %v453 = vrot.slane %v448, %v452
    %v455 = vadd.f32 %v432, %v453
    %v456 = vadd.f32 %v433, %v453
    %v457 = vadd.f32 %v434, %v453
    %v458 = vadd.f32 %v435, %v453
    %v459 = vadd.f32 %v436, %v453
    %v460 = vadd.f32 %v437, %v453
    %v461 = vadd.f32 %v438, %v453
    %v462 = vadd.f32 %v439, %v453
    %v463 = vadd.f32 %v440, %v453
    %v464 = vadd.f32 %v441, %v453
    %v465 = vadd.f32 %v442, %v453
    %v466 = vadd.f32 %v443, %v453
    %v467 = vadd.f32 %v444, %v453
    %v468 = vadd.f32 %v445, %v453
    %v469 = vadd.f32 %v446, %v453
    %v470 = vadd.f32 %v447, %v453
    %v471 = vpack.c.bf16 %v456, %v455
    %v472 = vpack.c.bf16 %v458, %v457
    %v473 = vpack.c.bf16 %v460, %v459
    %v474 = vpack.c.bf16 %v462, %v461
    %v475 = vpack.c.bf16 %v464, %v463
    %v476 = vpack.c.bf16 %v466, %v465
    %v477 = vpack.c.bf16 %v468, %v467
    %v478 = vpack.c.bf16 %v470, %v469
    %v487 = vunpack.c.l.b16 %v471
    %v488 = vunpack.c.h.b16 %v471
    %v489 = vunpack.c.l.b16 %v472
    %v490 = vunpack.c.h.b16 %v472
    %v491 = vunpack.c.l.b16 %v473
    %v492 = vunpack.c.h.b16 %v473
    %v493 = vunpack.c.l.b16 %v474
    %v494 = vunpack.c.h.b16 %v474
    %v495 = vunpack.c.l.b16 %v475
    %v496 = vunpack.c.h.b16 %v475
    %v497 = vunpack.c.l.b16 %v476
    %v498 = vunpack.c.h.b16 %v476
    %v499 = vunpack.c.l.b16 %v477
    %v500 = vunpack.c.h.b16 %v477
    %v501 = vunpack.c.l.b16 %v478
    %v502 = vunpack.c.h.b16 %v478
    %v503 = vpack.c.b16 %v487, %v487
    %v504 = vpack.c.b16 %v488, %v488
    %v505 = vpack.c.b16 %v489, %v489
    %v506 = vpack.c.b16 %v490, %v490
    %v507 = vpack.c.b16 %v491, %v491
    %v508 = vpack.c.b16 %v492, %v492
    %v509 = vpack.c.b16 %v493, %v493
    %v510 = vpack.c.b16 %v494, %v494
    %v511 = vpack.c.b16 %v495, %v495
    %v512 = vpack.c.b16 %v496, %v496
    %v513 = vpack.c.b16 %v497, %v497
    %v514 = vpack.c.b16 %v498, %v498
    %v515 = vpack.c.b16 %v499, %v499
    %v516 = vpack.c.b16 %v500, %v500
    %v517 = vpack.c.b16 %v501, %v501
    %v518 = vpack.c.b16 %v502, %v502
    %535 = vst [vmem:[%s4] sm:$0xf] %v503
    %536 = vst [vmem:[%s4 + $0x4] sm:$0xf] %v504
    %537 = vst [vmem:[%s4 + $0x8] sm:$0xf] %v505
    %538 = vst [vmem:[%s4 + $0xc] sm:$0xf] %v506
    %539 = vst [vmem:[%s4 + $0x10] sm:$0xf] %v507
    %540 = vst [vmem:[%s4 + $0x14] sm:$0xf] %v508
    %541 = vst [vmem:[%s4 + $0x18] sm:$0xf] %v509
    %542 = vst [vmem:[%s4 + $0x1c] sm:$0xf] %v510
    %543 = vst [vmem:[%s4 + $0x20] sm:$0xf] %v511
    %544 = vst [vmem:[%s4 + $0x24] sm:$0xf] %v512
    %545 = vst [vmem:[%s4 + $0x28] sm:$0xf] %v513
    %546 = vst [vmem:[%s4 + $0x2c] sm:$0xf] %v514
    %547 = vst [vmem:[%s4 + $0x30] sm:$0xf] %v515
    %548 = vst [vmem:[%s4 + $0x34] sm:$0xf] %v516
    %549 = vst [vmem:[%s4 + $0x38] sm:$0xf] %v517
    %550 = vst [vmem:[%s4 + $0x3c] sm:$0xf] %v518
  $region25: #{_lambda_.5} parent=0 // pred_fallthru
    _
  // Predicated region
  $region26: #{_lambda_.5} parent=0 // pred_check
    _
  $region27: #{_lambda_.5} parent=0 // pred_check_branch
    %552 = sbr.rel (0) target = $region29
  $region28: #{_lambda_.5} parent=0 // pred_region
    _
  $region29: #{_lambda_.5} parent=0 // pred_fallthru
    _
  // Predicated region
  $region30: #{_lambda_.5} parent=0 // pred_check
    _
  $region31: #{_lambda_.5} parent=0 // pred_check_branch
    %554 = sbr.rel (0) target = $region33
  $region32: #{_lambda_.5} parent=0 // pred_region
    _
  $region33: #{_lambda_.5} parent=0 // pred_fallthru
    _

// kernel: _lambda_.6
$region0: #{_lambda_.6}
  #allocation0 [shape = 'u32[]', space=smem, size = 0x4, offset = 0x4, fixed_abs, tag = 'smem constant byte address 0x4 - core index']
  #allocation1 [shape = 'u32[144,128]{1,0:T(1,128)}', space=vmem, size = 0x12000, scoped, tag = 'internal scratch']
  #allocation2 [shape = 'f32[128,128]{1,0:T(8,128)}', space=vmem, size = 0x10000, scoped, tag = 'scratch operand']
  %s0 = inlined_call_operand.vmem [shape: bf16[128,1152], index: 0, kind: input, shape index: {}]
  %s1 = inlined_call_operand.vmem [shape: bf16[1152,128], index: 1, kind: input, shape index: {}]
  %s2 = inlined_call_operand.vmem [shape: f32[1,128], index: 2, kind: input, shape index: {}]
  %s3 = inlined_call_operand.vmem [shape: f32[1,128], index: 3, kind: input, shape index: {}]
  %s4 = inlined_call_operand.vmem [shape: bf16[128,128], index: 4, kind: output, shape index: {}]
  %s5 = sld [smem:[#allocation0]]
  $region34: #{_lambda_.6} parent=0
    _
  %s7 = ssub.s32 1, %s5
  %s8 = scalar_select 0, %s7, %s5
  // Predicated region
  $region2: #{_lambda_.6} parent=0 // pred_check
    _
  $region3: #{_lambda_.6} parent=0 // pred_check_branch
    %10 = sbr.rel (0) target = $region5
  $region4: #{_lambda_.6} parent=0 // pred_region
    _
  $region5: #{_lambda_.6} parent=0 // pred_fallthru
    _
  // Predicated region
  $region6: #{_lambda_.6} parent=0 // pred_check
    _
  $region7: #{_lambda_.6} parent=0 // pred_check_branch
    %12 = sbr.rel (0) target = $region9
  $region8: #{_lambda_.6} parent=0 // pred_region
    _
  $region9: #{_lambda_.6} parent=0 // pred_fallthru
    _
  // Predicated region
  $region10: #{_lambda_.6} parent=0 // pred_check
    _
  $region11: #{_lambda_.6} parent=0 // pred_check_branch
    %14 = sbr.rel (0) target = $region13
  $region12: #{_lambda_.6} parent=0 // pred_region
    _
  $region13: #{_lambda_.6} parent=0 // pred_fallthru
    _
  // Predicated region
  $region14: #{_lambda_.6} parent=0 // pred_check
    _
  $region15: #{_lambda_.6} parent=0 // pred_check_branch
    %16 = sbr.rel (0) target = $region17
  $region16: #{_lambda_.6} parent=0 // pred_region
    _
  $region17: #{_lambda_.6} parent=0 // pred_fallthru
    _
  %p18 = scmp.eq.s32.totalorder 0, 0
  // Predicated region
  $region18: #{_lambda_.6} parent=0 // pred_check
    %p19 = pneg %p18
  $region19: #{_lambda_.6} parent=0 // pred_check_branch
    %21 = sbr.rel (%p19) target = $region21
  $region20: #{_lambda_.6} parent=0 // pred_region
    %22 = vst [vmem:[#allocation2] sm:$0xff] 0.0
    %23 = vst [vmem:[#allocation2 + $0x8] sm:$0xff] 0.0
    %24 = vst [vmem:[#allocation2 + $0x10] sm:$0xff] 0.0
    %25 = vst [vmem:[#allocation2 + $0x18] sm:$0xff] 0.0
    %26 = vst [vmem:[#allocation2 + $0x20] sm:$0xff] 0.0
    %27 = vst [vmem:[#allocation2 + $0x28] sm:$0xff] 0.0
    %28 = vst [vmem:[#allocation2 + $0x30] sm:$0xff] 0.0
    %29 = vst [vmem:[#allocation2 + $0x38] sm:$0xff] 0.0
    %30 = vst [vmem:[#allocation2 + $0x40] sm:$0xff] 0.0
    %31 = vst [vmem:[#allocation2 + $0x48] sm:$0xff] 0.0
    %32 = vst [vmem:[#allocation2 + $0x50] sm:$0xff] 0.0
    %33 = vst [vmem:[#allocation2 + $0x58] sm:$0xff] 0.0
    %34 = vst [vmem:[#allocation2 + $0x60] sm:$0xff] 0.0
    %35 = vst [vmem:[#allocation2 + $0x68] sm:$0xff] 0.0
    %36 = vst [vmem:[#allocation2 + $0x70] sm:$0xff] 0.0
    %37 = vst [vmem:[#allocation2 + $0x78] sm:$0xff] 0.0
  $region21: #{_lambda_.6} parent=0 // pred_fallthru
    _
  %v38 = vld [vmem:[#allocation2] sm:$0xff]
  %v39 = vld [vmem:[#allocation2 + $0x8] sm:$0xff]
  %v40 = vld [vmem:[#allocation2 + $0x10] sm:$0xff]
  %v41 = vld [vmem:[#allocation2 + $0x18] sm:$0xff]
  %v42 = vld [vmem:[#allocation2 + $0x20] sm:$0xff]
  %v43 = vld [vmem:[#allocation2 + $0x28] sm:$0xff]
  %v44 = vld [vmem:[#allocation2 + $0x30] sm:$0xff]
  %v45 = vld [vmem:[#allocation2 + $0x38] sm:$0xff]
  %v46 = vld [vmem:[#allocation2 + $0x40] sm:$0xff]
  %v47 = vld [vmem:[#allocation2 + $0x48] sm:$0xff]
  %v48 = vld [vmem:[#allocation2 + $0x50] sm:$0xff]
  %v49 = vld [vmem:[#allocation2 + $0x58] sm:$0xff]
  %v50 = vld [vmem:[#allocation2 + $0x60] sm:$0xff]
  %v51 = vld [vmem:[#allocation2 + $0x68] sm:$0xff]
  %v52 = vld [vmem:[#allocation2 + $0x70] sm:$0xff]
  %v53 = vld [vmem:[#allocation2 + $0x78] sm:$0xff]
  %v54 = vld [vmem:[%s0] sm:$0xff]
  %v55 = vld [vmem:[%s0 + $0x8] sm:$0xff]
  %v56 = vld [vmem:[%s0 + $0x10] sm:$0xff]
  %v57 = vld [vmem:[%s0 + $0x18] sm:$0xff]
  %v58 = vld [vmem:[%s0 + $0x20] sm:$0xf]
  %v59 = vld [vmem:[%s0 + $0x24] sm:$0xff]
  %v60 = vld [vmem:[%s0 + $0x2c] sm:$0xff]
  %v61 = vld [vmem:[%s0 + $0x34] sm:$0xff]
  %v62 = vld [vmem:[%s0 + $0x3c] sm:$0xff]
  %v63 = vld [vmem:[%s0 + $0x44] sm:$0xf]
  %v64 = vld [vmem:[%s0 + $0x48] sm:$0xff]
  %v65 = vld [vmem:[%s0 + $0x50] sm:$0xff]
  %v66 = vld [vmem:[%s0 + $0x58] sm:$0xff]
  %v67 = vld [vmem:[%s0 + $0x60] sm:$0xff]
  %v68 = vld [vmem:[%s0 + $0x68] sm:$0xf]
  %v69 = vld [vmem:[%s0 + $0x6c] sm:$0xff]
  %v70 = vld [vmem:[%s0 + $0x74] sm:$0xff]
  %v71 = vld [vmem:[%s0 + $0x7c] sm:$0xff]
  %v72 = vld [vmem:[%s0 + $0x84] sm:$0xff]
  %v73 = vld [vmem:[%s0 + $0x8c] sm:$0xf]
  %v74 = vld [vmem:[%s0 + $0x90] sm:$0xff]
  %v75 = vld [vmem:[%s0 + $0x98] sm:$0xff]
  %v76 = vld [vmem:[%s0 + $0xa0] sm:$0xff]
  %v77 = vld [vmem:[%s0 + $0xa8] sm:$0xff]
  %v78 = vld [vmem:[%s0 + $0xb0] sm:$0xf]
  %v79 = vld [vmem:[%s0 + $0xb4] sm:$0xff]
  %v80 = vld [vmem:[%s0 + $0xbc] sm:$0xff]
  %v81 = vld [vmem:[%s0 + $0xc4] sm:$0xff]
  %v82 = vld [vmem:[%s0 + $0xcc] sm:$0xff]
  %v83 = vld [vmem:[%s0 + $0xd4] sm:$0xf]
  %v84 = vld [vmem:[%s0 + $0xd8] sm:$0xff]
  %v85 = vld [vmem:[%s0 + $0xe0] sm:$0xff]
  %v86 = vld [vmem:[%s0 + $0xe8] sm:$0xff]
  %v87 = vld [vmem:[%s0 + $0xf0] sm:$0xff]
  %v88 = vld [vmem:[%s0 + $0xf8] sm:$0xf]
  %v89 = vld [vmem:[%s0 + $0xfc] sm:$0xff]
  %v90 = vld [vmem:[%s0 + $0x104] sm:$0xff]
  %v91 = vld [vmem:[%s0 + $0x10c] sm:$0xff]
  %v92 = vld [vmem:[%s0 + $0x114] sm:$0xff]
  %v93 = vld [vmem:[%s0 + $0x11c] sm:$0xf]
  %v94 = vld [vmem:[%s0 + $0x120] sm:$0xff]
  %v95 = vld [vmem:[%s0 + $0x128] sm:$0xff]
  %v96 = vld [vmem:[%s0 + $0x130] sm:$0xff]
  %v97 = vld [vmem:[%s0 + $0x138] sm:$0xff]
  %v98 = vld [vmem:[%s0 + $0x140] sm:$0xf]
  %v99 = vld [vmem:[%s0 + $0x144] sm:$0xff]
  %v100 = vld [vmem:[%s0 + $0x14c] sm:$0xff]
  %v101 = vld [vmem:[%s0 + $0x154] sm:$0xff]
  %v102 = vld [vmem:[%s0 + $0x15c] sm:$0xff]
  %v103 = vld [vmem:[%s0 + $0x164] sm:$0xf]
  %v104 = vld [vmem:[%s0 + $0x168] sm:$0xff]
  %v105 = vld [vmem:[%s0 + $0x170] sm:$0xff]
  %v106 = vld [vmem:[%s0 + $0x178] sm:$0xff]
  %v107 = vld [vmem:[%s0 + $0x180] sm:$0xff]
  %v108 = vld [vmem:[%s0 + $0x188] sm:$0xf]
  %v109 = vld [vmem:[%s0 + $0x18c] sm:$0xff]
  %v110 = vld [vmem:[%s0 + $0x194] sm:$0xff]
  %v111 = vld [vmem:[%s0 + $0x19c] sm:$0xff]
  %v112 = vld [vmem:[%s0 + $0x1a4] sm:$0xff]
  %v113 = vld [vmem:[%s0 + $0x1ac] sm:$0xf]
  %v114 = vld [vmem:[%s0 + $0x1b0] sm:$0xff]
  %v115 = vld [vmem:[%s0 + $0x1b8] sm:$0xff]
  %v116 = vld [vmem:[%s0 + $0x1c0] sm:$0xff]
  %v117 = vld [vmem:[%s0 + $0x1c8] sm:$0xff]
  %v118 = vld [vmem:[%s0 + $0x1d0] sm:$0xf]
  %v119 = vld [vmem:[%s0 + $0x1d4] sm:$0xff]
  %v120 = vld [vmem:[%s0 + $0x1dc] sm:$0xff]
  %v121 = vld [vmem:[%s0 + $0x1e4] sm:$0xff]
  %v122 = vld [vmem:[%s0 + $0x1ec] sm:$0xff]
  %v123 = vld [vmem:[%s0 + $0x1f4] sm:$0xf]
  %v124 = vld [vmem:[%s0 + $0x1f8] sm:$0xff]
  %v125 = vld [vmem:[%s0 + $0x200] sm:$0xff]
  %v126 = vld [vmem:[%s0 + $0x208] sm:$0xff]
  %v127 = vld [vmem:[%s0 + $0x210] sm:$0xff]
  %v128 = vld [vmem:[%s0 + $0x218] sm:$0xf]
  %v129 = vld [vmem:[%s0 + $0x21c] sm:$0xff]
  %v130 = vld [vmem:[%s0 + $0x224] sm:$0xff]
  %v131 = vld [vmem:[%s0 + $0x22c] sm:$0xff]
  %v132 = vld [vmem:[%s0 + $0x234] sm:$0xff]
  %v133 = vld [vmem:[%s0 + $0x23c] sm:$0xf]
  %v134 = vld [vmem:[%s1] sm:$0xf]
  %v135 = vld [vmem:[%s1 + $0x4] sm:$0xf]
  %v136 = vld [vmem:[%s1 + $0x8] sm:$0xf]
  %v137 = vld [vmem:[%s1 + $0xc] sm:$0xf]
  %v138 = vld [vmem:[%s1 + $0x10] sm:$0xf]
  %v139 = vld [vmem:[%s1 + $0x14] sm:$0xf]
  %v140 = vld [vmem:[%s1 + $0x18] sm:$0xf]
  %v141 = vld [vmem:[%s1 + $0x1c] sm:$0xf]
  %v142 = vld [vmem:[%s1 + $0x20] sm:$0xf]
  %v143 = vld [vmem:[%s1 + $0x24] sm:$0xf]
  %v144 = vld [vmem:[%s1 + $0x28] sm:$0xf]
  %v145 = vld [vmem:[%s1 + $0x2c] sm:$0xf]
  %v146 = vld [vmem:[%s1 + $0x30] sm:$0xf]
  %v147 = vld [vmem:[%s1 + $0x34] sm:$0xf]
  %v148 = vld [vmem:[%s1 + $0x38] sm:$0xf]
  %v149 = vld [vmem:[%s1 + $0x3c] sm:$0xf]
  %v150 = vld [vmem:[%s1 + $0x40] sm:$0xf]
  %v151 = vld [vmem:[%s1 + $0x44] sm:$0xf]
  %v152 = vld [vmem:[%s1 + $0x48] sm:$0xf]
  %v153 = vld [vmem:[%s1 + $0x4c] sm:$0xf]
  %v154 = vld [vmem:[%s1 + $0x50] sm:$0xf]
  %v155 = vld [vmem:[%s1 + $0x54] sm:$0xf]
  %v156 = vld [vmem:[%s1 + $0x58] sm:$0xf]
  %v157 = vld [vmem:[%s1 + $0x5c] sm:$0xf]
  %v158 = vld [vmem:[%s1 + $0x60] sm:$0xf]
  %v159 = vld [vmem:[%s1 + $0x64] sm:$0xf]
  %v160 = vld [vmem:[%s1 + $0x68] sm:$0xf]
  %v161 = vld [vmem:[%s1 + $0x6c] sm:$0xf]
  %v162 = vld [vmem:[%s1 + $0x70] sm:$0xf]
  %v163 = vld [vmem:[%s1 + $0x74] sm:$0xf]
  %v164 = vld [vmem:[%s1 + $0x78] sm:$0xf]
  %v165 = vld [vmem:[%s1 + $0x7c] sm:$0xf]
  %v166 = vld [vmem:[%s1 + $0x80] sm:$0xf]
  %v167 = vld [vmem:[%s1 + $0x84] sm:$0xf]
  %v168 = vld [vmem:[%s1 + $0x88] sm:$0xf]
  %v169 = vld [vmem:[%s1 + $0x8c] sm:$0xf]
  %v170 = vld [vmem:[%s1 + $0x90] sm:$0xf]
  %v171 = vld [vmem:[%s1 + $0x94] sm:$0xf]
  %v172 = vld [vmem:[%s1 + $0x98] sm:$0xf]
  %v173 = vld [vmem:[%s1 + $0x9c] sm:$0xf]
  %v174 = vld [vmem:[%s1 + $0xa0] sm:$0xf]
  %v175 = vld [vmem:[%s1 + $0xa4] sm:$0xf]
  %v176 = vld [vmem:[%s1 + $0xa8] sm:$0xf]
  %v177 = vld [vmem:[%s1 + $0xac] sm:$0xf]
  %v178 = vld [vmem:[%s1 + $0xb0] sm:$0xf]
  %v179 = vld [vmem:[%s1 + $0xb4] sm:$0xf]
  %v180 = vld [vmem:[%s1 + $0xb8] sm:$0xf]
  %v181 = vld [vmem:[%s1 + $0xbc] sm:$0xf]
  %v182 = vld [vmem:[%s1 + $0xc0] sm:$0xf]
  %v183 = vld [vmem:[%s1 + $0xc4] sm:$0xf]
  %v184 = vld [vmem:[%s1 + $0xc8] sm:$0xf]
  %v185 = vld [vmem:[%s1 + $0xcc] sm:$0xf]
  %v186 = vld [vmem:[%s1 + $0xd0] sm:$0xf]
  %v187 = vld [vmem:[%s1 + $0xd4] sm:$0xf]
  %v188 = vld [vmem:[%s1 + $0xd8] sm:$0xf]
  %v189 = vld [vmem:[%s1 + $0xdc] sm:$0xf]
  %v190 = vld [vmem:[%s1 + $0xe0] sm:$0xf]
  %v191 = vld [vmem:[%s1 + $0xe4] sm:$0xf]
  %v192 = vld [vmem:[%s1 + $0xe8] sm:$0xf]
  %v193 = vld [vmem:[%s1 + $0xec] sm:$0xf]
  %v194 = vld [vmem:[%s1 + $0xf0] sm:$0xf]
  %v195 = vld [vmem:[%s1 + $0xf4] sm:$0xf]
  %v196 = vld [vmem:[%s1 + $0xf8] sm:$0xf]
  %v197 = vld [vmem:[%s1 + $0xfc] sm:$0xf]
  %v198 = vld [vmem:[%s1 + $0x100] sm:$0xf]
  %v199 = vld [vmem:[%s1 + $0x104] sm:$0xf]
  %v200 = vld [vmem:[%s1 + $0x108] sm:$0xf]
  %v201 = vld [vmem:[%s1 + $0x10c] sm:$0xf]
  %v202 = vld [vmem:[%s1 + $0x110] sm:$0xf]
  %v203 = vld [vmem:[%s1 + $0x114] sm:$0xf]
  %v204 = vld [vmem:[%s1 + $0x118] sm:$0xf]
  %v205 = vld [vmem:[%s1 + $0x11c] sm:$0xf]
  %v206 = vld [vmem:[%s1 + $0x120] sm:$0xf]
  %v207 = vld [vmem:[%s1 + $0x124] sm:$0xf]
  %v208 = vld [vmem:[%s1 + $0x128] sm:$0xf]
  %v209 = vld [vmem:[%s1 + $0x12c] sm:$0xf]
  %v210 = vld [vmem:[%s1 + $0x130] sm:$0xf]
  %v211 = vld [vmem:[%s1 + $0x134] sm:$0xf]
  %v212 = vld [vmem:[%s1 + $0x138] sm:$0xf]
  %v213 = vld [vmem:[%s1 + $0x13c] sm:$0xf]
  %v214 = vld [vmem:[%s1 + $0x140] sm:$0xf]
  %v215 = vld [vmem:[%s1 + $0x144] sm:$0xf]
  %v216 = vld [vmem:[%s1 + $0x148] sm:$0xf]
  %v217 = vld [vmem:[%s1 + $0x14c] sm:$0xf]
  %v218 = vld [vmem:[%s1 + $0x150] sm:$0xf]
  %v219 = vld [vmem:[%s1 + $0x154] sm:$0xf]
  %v220 = vld [vmem:[%s1 + $0x158] sm:$0xf]
  %v221 = vld [vmem:[%s1 + $0x15c] sm:$0xf]
  %v222 = vld [vmem:[%s1 + $0x160] sm:$0xf]
  %v223 = vld [vmem:[%s1 + $0x164] sm:$0xf]
  %v224 = vld [vmem:[%s1 + $0x168] sm:$0xf]
  %v225 = vld [vmem:[%s1 + $0x16c] sm:$0xf]
  %v226 = vld [vmem:[%s1 + $0x170] sm:$0xf]
  %v227 = vld [vmem:[%s1 + $0x174] sm:$0xf]
  %v228 = vld [vmem:[%s1 + $0x178] sm:$0xf]
  %v229 = vld [vmem:[%s1 + $0x17c] sm:$0xf]
  %v230 = vld [vmem:[%s1 + $0x180] sm:$0xf]
  %v231 = vld [vmem:[%s1 + $0x184] sm:$0xf]
  %v232 = vld [vmem:[%s1 + $0x188] sm:$0xf]
  %v233 = vld [vmem:[%s1 + $0x18c] sm:$0xf]
  %v234 = vld [vmem:[%s1 + $0x190] sm:$0xf]
  %v235 = vld [vmem:[%s1 + $0x194] sm:$0xf]
  %v236 = vld [vmem:[%s1 + $0x198] sm:$0xf]
  %v237 = vld [vmem:[%s1 + $0x19c] sm:$0xf]
  %v238 = vld [vmem:[%s1 + $0x1a0] sm:$0xf]
  %v239 = vld [vmem:[%s1 + $0x1a4] sm:$0xf]
  %v240 = vld [vmem:[%s1 + $0x1a8] sm:$0xf]
  %v241 = vld [vmem:[%s1 + $0x1ac] sm:$0xf]
  %v242 = vld [vmem:[%s1 + $0x1b0] sm:$0xf]
  %v243 = vld [vmem:[%s1 + $0x1b4] sm:$0xf]
  %v244 = vld [vmem:[%s1 + $0x1b8] sm:$0xf]
  %v245 = vld [vmem:[%s1 + $0x1bc] sm:$0xf]
  %v246 = vld [vmem:[%s1 + $0x1c0] sm:$0xf]
  %v247 = vld [vmem:[%s1 + $0x1c4] sm:$0xf]
  %v248 = vld [vmem:[%s1 + $0x1c8] sm:$0xf]
  %v249 = vld [vmem:[%s1 + $0x1cc] sm:$0xf]
  %v250 = vld [vmem:[%s1 + $0x1d0] sm:$0xf]
  %v251 = vld [vmem:[%s1 + $0x1d4] sm:$0xf]
  %v252 = vld [vmem:[%s1 + $0x1d8] sm:$0xf]
  %v253 = vld [vmem:[%s1 + $0x1dc] sm:$0xf]
  %v254 = vld [vmem:[%s1 + $0x1e0] sm:$0xf]
  %v255 = vld [vmem:[%s1 + $0x1e4] sm:$0xf]
  %v256 = vld [vmem:[%s1 + $0x1e8] sm:$0xf]
  %v257 = vld [vmem:[%s1 + $0x1ec] sm:$0xf]
  %v258 = vld [vmem:[%s1 + $0x1f0] sm:$0xf]
  %v259 = vld [vmem:[%s1 + $0x1f4] sm:$0xf]
  %v260 = vld [vmem:[%s1 + $0x1f8] sm:$0xf]
  %v261 = vld [vmem:[%s1 + $0x1fc] sm:$0xf]
  %v262 = vld [vmem:[%s1 + $0x200] sm:$0xf]
  %v263 = vld [vmem:[%s1 + $0x204] sm:$0xf]
  %v264 = vld [vmem:[%s1 + $0x208] sm:$0xf]
  %v265 = vld [vmem:[%s1 + $0x20c] sm:$0xf]
  %v266 = vld [vmem:[%s1 + $0x210] sm:$0xf]
  %v267 = vld [vmem:[%s1 + $0x214] sm:$0xf]
  %v268 = vld [vmem:[%s1 + $0x218] sm:$0xf]
  %v269 = vld [vmem:[%s1 + $0x21c] sm:$0xf]
  %v270 = vld [vmem:[%s1 + $0x220] sm:$0xf]
  %v271 = vld [vmem:[%s1 + $0x224] sm:$0xf]
  %v272 = vld [vmem:[%s1 + $0x228] sm:$0xf]
  %v273 = vld [vmem:[%s1 + $0x22c] sm:$0xf]
  %v274 = vld [vmem:[%s1 + $0x230] sm:$0xf]
  %v275 = vld [vmem:[%s1 + $0x234] sm:$0xf]
  %v276 = vld [vmem:[%s1 + $0x238] sm:$0xf]
  %v277 = vld [vmem:[%s1 + $0x23c] sm:$0xf]
  %v358 = vunpack.c.l.b16 %v54
  %v359 = vunpack.c.h.b16 %v54
  %v360 = vunpack.c.l.b16 %v55
  %v361 = vunpack.c.h.b16 %v55
  %v362 = vunpack.c.l.b16 %v56
  %v363 = vunpack.c.h.b16 %v56
  %v364 = vunpack.c.l.b16 %v57
  %v365 = vunpack.c.h.b16 %v57
  %v366 = vunpack.c.l.b16 %v58
  %v367 = vunpack.c.l.b16 %v59
  %v368 = vunpack.c.h.b16 %v59
  %v369 = vunpack.c.l.b16 %v60
  %v370 = vunpack.c.h.b16 %v60
  %v371 = vunpack.c.l.b16 %v61
  %v372 = vunpack.c.h.b16 %v61
  %v373 = vunpack.c.l.b16 %v62
  %v374 = vunpack.c.h.b16 %v62
  %v375 = vunpack.c.l.b16 %v63
  %v376 = vunpack.c.l.b16 %v64
  %v377 = vunpack.c.h.b16 %v64
  %v378 = vunpack.c.l.b16 %v65
  %v379 = vunpack.c.h.b16 %v65
  %v380 = vunpack.c.l.b16 %v66
  %v381 = vunpack.c.h.b16 %v66
  %v382 = vunpack.c.l.b16 %v67
  %v383 = vunpack.c.h.b16 %v67
  %v384 = vunpack.c.l.b16 %v68
  %v385 = vunpack.c.l.b16 %v69
  %v386 = vunpack.c.h.b16 %v69
  %v387 = vunpack.c.l.b16 %v70
  %v388 = vunpack.c.h.b16 %v70
  %v389 = vunpack.c.l.b16 %v71
  %v390 = vunpack.c.h.b16 %v71
  %v391 = vunpack.c.l.b16 %v72
  %v392 = vunpack.c.h.b16 %v72
  %v393 = vunpack.c.l.b16 %v73
  %v394 = vunpack.c.l.b16 %v74
  %v395 = vunpack.c.h.b16 %v74
  %v396 = vunpack.c.l.b16 %v75
  %v397 = vunpack.c.h.b16 %v75
  %v398 = vunpack.c.l.b16 %v76
  %v399 = vunpack.c.h.b16 %v76
  %v400 = vunpack.c.l.b16 %v77
  %v401 = vunpack.c.h.b16 %v77
  %v402 = vunpack.c.l.b16 %v78
  %v403 = vunpack.c.l.b16 %v79
  %v404 = vunpack.c.h.b16 %v79
  %v405 = vunpack.c.l.b16 %v80
  %v406 = vunpack.c.h.b16 %v80
  %v407 = vunpack.c.l.b16 %v81
  %v408 = vunpack.c.h.b16 %v81
  %v409 = vunpack.c.l.b16 %v82
  %v410 = vunpack.c.h.b16 %v82
  %v411 = vunpack.c.l.b16 %v83
  %v412 = vunpack.c.l.b16 %v84
  %v413 = vunpack.c.h.b16 %v84
  %v414 = vunpack.c.l.b16 %v85
  %v415 = vunpack.c.h.b16 %v85
  %v416 = vunpack.c.l.b16 %v86
  %v417 = vunpack.c.h.b16 %v86
  %v418 = vunpack.c.l.b16 %v87
  %v419 = vunpack.c.h.b16 %v87
  %v420 = vunpack.c.l.b16 %v88
  %v421 = vunpack.c.l.b16 %v89
  %v422 = vunpack.c.h.b16 %v89
  %v423 = vunpack.c.l.b16 %v90
  %v424 = vunpack.c.h.b16 %v90
  %v425 = vunpack.c.l.b16 %v91
  %v426 = vunpack.c.h.b16 %v91
  %v427 = vunpack.c.l.b16 %v92
  %v428 = vunpack.c.h.b16 %v92
  %v429 = vunpack.c.l.b16 %v93
  %v430 = vunpack.c.l.b16 %v94
  %v431 = vunpack.c.h.b16 %v94
  %v432 = vunpack.c.l.b16 %v95
  %v433 = vunpack.c.h.b16 %v95
  %v434 = vunpack.c.l.b16 %v96
  %v435 = vunpack.c.h.b16 %v96
  %v436 = vunpack.c.l.b16 %v97
  %v437 = vunpack.c.h.b16 %v97
  %v438 = vunpack.c.l.b16 %v98
  %v439 = vunpack.c.l.b16 %v99
  %v440 = vunpack.c.h.b16 %v99
  %v441 = vunpack.c.l.b16 %v100
  %v442 = vunpack.c.h.b16 %v100
  %v443 = vunpack.c.l.b16 %v101
  %v444 = vunpack.c.h.b16 %v101
  %v445 = vunpack.c.l.b16 %v102
  %v446 = vunpack.c.h.b16 %v102
  %v447 = vunpack.c.l.b16 %v103
  %v448 = vunpack.c.l.b16 %v104
  %v449 = vunpack.c.h.b16 %v104
  %v450 = vunpack.c.l.b16 %v105
  %v451 = vunpack.c.h.b16 %v105
  %v452 = vunpack.c.l.b16 %v106
  %v453 = vunpack.c.h.b16 %v106
  %v454 = vunpack.c.l.b16 %v107
  %v455 = vunpack.c.h.b16 %v107
  %v456 = vunpack.c.l.b16 %v108
  %v457 = vunpack.c.l.b16 %v109
  %v458 = vunpack.c.h.b16 %v109
  %v459 = vunpack.c.l.b16 %v110
  %v460 = vunpack.c.h.b16 %v110
  %v461 = vunpack.c.l.b16 %v111
  %v462 = vunpack.c.h.b16 %v111
  %v463 = vunpack.c.l.b16 %v112
  %v464 = vunpack.c.h.b16 %v112
  %v465 = vunpack.c.l.b16 %v113
  %v466 = vunpack.c.l.b16 %v114
  %v467 = vunpack.c.h.b16 %v114
  %v468 = vunpack.c.l.b16 %v115
  %v469 = vunpack.c.h.b16 %v115
  %v470 = vunpack.c.l.b16 %v116
  %v471 = vunpack.c.h.b16 %v116
  %v472 = vunpack.c.l.b16 %v117
  %v473 = vunpack.c.h.b16 %v117
  %v474 = vunpack.c.l.b16 %v118
  %v475 = vunpack.c.l.b16 %v119
  %v476 = vunpack.c.h.b16 %v119
  %v477 = vunpack.c.l.b16 %v120
  %v478 = vunpack.c.h.b16 %v120
  %v479 = vunpack.c.l.b16 %v121
  %v480 = vunpack.c.h.b16 %v121
  %v481 = vunpack.c.l.b16 %v122
  %v482 = vunpack.c.h.b16 %v122
  %v483 = vunpack.c.l.b16 %v123
  %v484 = vunpack.c.l.b16 %v124
  %v485 = vunpack.c.h.b16 %v124
  %v486 = vunpack.c.l.b16 %v125
  %v487 = vunpack.c.h.b16 %v125
  %v488 = vunpack.c.l.b16 %v126
  %v489 = vunpack.c.h.b16 %v126
  %v490 = vunpack.c.l.b16 %v127
  %v491 = vunpack.c.h.b16 %v127
  %v492 = vunpack.c.l.b16 %v128
  %v493 = vunpack.c.l.b16 %v129
  %v494 = vunpack.c.h.b16 %v129
  %v495 = vunpack.c.l.b16 %v130
  %v496 = vunpack.c.h.b16 %v130
  %v497 = vunpack.c.l.b16 %v131
  %v498 = vunpack.c.h.b16 %v131
  %v499 = vunpack.c.l.b16 %v132
  %v500 = vunpack.c.h.b16 %v132
  %v501 = vunpack.c.l.b16 %v133
  %v502 = vpack.c.b16 %v367, %v358
  %v503 = vpack.c.b16 %v368, %v359
  %v504 = vpack.c.b16 %v369, %v360
  %v505 = vpack.c.b16 %v370, %v361
  %v506 = vpack.c.b16 %v371, %v362
  %v507 = vpack.c.b16 %v372, %v363
  %v508 = vpack.c.b16 %v373, %v364
  %v509 = vpack.c.b16 %v374, %v365
  %v510 = vpack.c.b16 %v375, %v366
  %v511 = vpack.c.b16 %v385, %v376
  %v512 = vpack.c.b16 %v386, %v377
  %v513 = vpack.c.b16 %v387, %v378
  %v514 = vpack.c.b16 %v388, %v379
  %v515 = vpack.c.b16 %v389, %v380
  %v516 = vpack.c.b16 %v390, %v381
  %v517 = vpack.c.b16 %v391, %v382
  %v518 = vpack.c.b16 %v392, %v383
  %v519 = vpack.c.b16 %v393, %v384
  %v520 = vpack.c.b16 %v403, %v394
  %v521 = vpack.c.b16 %v404, %v395
  %v522 = vpack.c.b16 %v405, %v396
  %v523 = vpack.c.b16 %v406, %v397
  %v524 = vpack.c.b16 %v407, %v398
  %v525 = vpack.c.b16 %v408, %v399
  %v526 = vpack.c.b16 %v409, %v400
  %v527 = vpack.c.b16 %v410, %v401
  %v528 = vpack.c.b16 %v411, %v402
  %v529 = vpack.c.b16 %v421, %v412
  %v530 = vpack.c.b16 %v422, %v413
  %v531 = vpack.c.b16 %v423, %v414
  %v532 = vpack.c.b16 %v424, %v415
  %v533 = vpack.c.b16 %v425, %v416
  %v534 = vpack.c.b16 %v426, %v417
  %v535 = vpack.c.b16 %v427, %v418
  %v536 = vpack.c.b16 %v428, %v419
  %v537 = vpack.c.b16 %v429, %v420
  %v538 = vpack.c.b16 %v439, %v430
  %v539 = vpack.c.b16 %v440, %v431
  %v540 = vpack.c.b16 %v441, %v432
  %v541 = vpack.c.b16 %v442, %v433
  %v542 = vpack.c.b16 %v443, %v434
  %v543 = vpack.c.b16 %v444, %v435
  %v544 = vpack.c.b16 %v445, %v436
  %v545 = vpack.c.b16 %v446, %v437
  %v546 = vpack.c.b16 %v447, %v438
  %v547 = vpack.c.b16 %v457, %v448
  %v548 = vpack.c.b16 %v458, %v449
  %v549 = vpack.c.b16 %v459, %v450
  %v550 = vpack.c.b16 %v460, %v451
  %v551 = vpack.c.b16 %v461, %v452
  %v552 = vpack.c.b16 %v462, %v453
  %v553 = vpack.c.b16 %v463, %v454
  %v554 = vpack.c.b16 %v464, %v455
  %v555 = vpack.c.b16 %v465, %v456
  %v556 = vpack.c.b16 %v475, %v466
  %v557 = vpack.c.b16 %v476, %v467
  %v558 = vpack.c.b16 %v477, %v468
  %v559 = vpack.c.b16 %v478, %v469
  %v560 = vpack.c.b16 %v479, %v470
  %v561 = vpack.c.b16 %v480, %v471
  %v562 = vpack.c.b16 %v481, %v472
  %v563 = vpack.c.b16 %v482, %v473
  %v564 = vpack.c.b16 %v483, %v474
  %v565 = vpack.c.b16 %v493, %v484
  %v566 = vpack.c.b16 %v494, %v485
  %v567 = vpack.c.b16 %v495, %v486
  %v568 = vpack.c.b16 %v496, %v487
  %v569 = vpack.c.b16 %v497, %v488
  %v570 = vpack.c.b16 %v498, %v489
  %v571 = vpack.c.b16 %v499, %v490
  %v572 = vpack.c.b16 %v500, %v491
  %v573 = vpack.c.b16 %v501, %v492
  %v790 = vunpack.c.l.b16 %v134
  %v791 = vunpack.c.l.b16 %v135
  %v792 = vunpack.c.l.b16 %v136
  %v793 = vunpack.c.l.b16 %v137
  %v794 = vunpack.c.l.b16 %v138
  %v795 = vunpack.c.l.b16 %v139
  %v796 = vunpack.c.l.b16 %v140
  %v797 = vunpack.c.l.b16 %v141
  %v798 = vunpack.c.l.b16 %v142
  %v799 = vunpack.c.l.b16 %v143
  %v800 = vunpack.c.l.b16 %v144
  %v801 = vunpack.c.l.b16 %v145
  %v802 = vunpack.c.l.b16 %v146
  %v803 = vunpack.c.l.b16 %v147
  %v804 = vunpack.c.l.b16 %v148
  %v805 = vunpack.c.l.b16 %v149
  %v806 = vunpack.c.l.b16 %v150
  %v807 = vunpack.c.l.b16 %v151
  %v808 = vunpack.c.l.b16 %v152
  %v809 = vunpack.c.l.b16 %v153
  %v810 = vunpack.c.l.b16 %v154
  %v811 = vunpack.c.l.b16 %v155
  %v812 = vunpack.c.l.b16 %v156
  %v813 = vunpack.c.l.b16 %v157
  %v814 = vunpack.c.l.b16 %v158
  %v815 = vunpack.c.l.b16 %v159
  %v816 = vunpack.c.l.b16 %v160
  %v817 = vunpack.c.l.b16 %v161
  %v818 = vunpack.c.l.b16 %v162
  %v819 = vunpack.c.l.b16 %v163
  %v820 = vunpack.c.l.b16 %v164
  %v821 = vunpack.c.l.b16 %v165
  %v822 = vunpack.c.l.b16 %v166
  %v823 = vunpack.c.l.b16 %v167
  %v824 = vunpack.c.l.b16 %v168
  %v825 = vunpack.c.l.b16 %v169
  %v826 = vunpack.c.l.b16 %v170
  %v827 = vunpack.c.l.b16 %v171
  %v828 = vunpack.c.l.b16 %v172
  %v829 = vunpack.c.l.b16 %v173
  %v830 = vunpack.c.l.b16 %v174
  %v831 = vunpack.c.l.b16 %v175
  %v832 = vunpack.c.l.b16 %v176
  %v833 = vunpack.c.l.b16 %v177
  %v834 = vunpack.c.l.b16 %v178
  %v835 = vunpack.c.l.b16 %v179
  %v836 = vunpack.c.l.b16 %v180
  %v837 = vunpack.c.l.b16 %v181
  %v838 = vunpack.c.l.b16 %v182
  %v839 = vunpack.c.l.b16 %v183
  %v840 = vunpack.c.l.b16 %v184
  %v841 = vunpack.c.l.b16 %v185
  %v842 = vunpack.c.l.b16 %v186
  %v843 = vunpack.c.l.b16 %v187
  %v844 = vunpack.c.l.b16 %v188
  %v845 = vunpack.c.l.b16 %v189
  %v846 = vunpack.c.l.b16 %v190
  %v847 = vunpack.c.l.b16 %v191
  %v848 = vunpack.c.l.b16 %v192
  %v849 = vunpack.c.l.b16 %v193
  %v850 = vunpack.c.l.b16 %v194
  %v851 = vunpack.c.l.b16 %v195
  %v852 = vunpack.c.l.b16 %v196
  %v853 = vunpack.c.l.b16 %v197
  %v854 = vunpack.c.l.b16 %v198
  %v855 = vunpack.c.l.b16 %v199
  %v856 = vunpack.c.l.b16 %v200
  %v857 = vunpack.c.l.b16 %v201
  %v858 = vunpack.c.l.b16 %v202
  %v859 = vunpack.c.l.b16 %v203
  %v860 = vunpack.c.l.b16 %v204
  %v861 = vunpack.c.l.b16 %v205
  %v862 = vunpack.c.l.b16 %v206
  %v863 = vunpack.c.l.b16 %v207
  %v864 = vunpack.c.l.b16 %v208
  %v865 = vunpack.c.l.b16 %v209
  %v866 = vunpack.c.l.b16 %v210
  %v867 = vunpack.c.l.b16 %v211
  %v868 = vunpack.c.l.b16 %v212
  %v869 = vunpack.c.l.b16 %v213
  %v870 = vunpack.c.l.b16 %v214
  %v871 = vunpack.c.l.b16 %v215
  %v872 = vunpack.c.l.b16 %v216
  %v873 = vunpack.c.l.b16 %v217
  %v874 = vunpack.c.l.b16 %v218
  %v875 = vunpack.c.l.b16 %v219
  %v876 = vunpack.c.l.b16 %v220
  %v877 = vunpack.c.l.b16 %v221
  %v878 = vunpack.c.l.b16 %v222
  %v879 = vunpack.c.l.b16 %v223
  %v880 = vunpack.c.l.b16 %v224
  %v881 = vunpack.c.l.b16 %v225
  %v882 = vunpack.c.l.b16 %v226
  %v883 = vunpack.c.l.b16 %v227
  %v884 = vunpack.c.l.b16 %v228
  %v885 = vunpack.c.l.b16 %v229
  %v886 = vunpack.c.l.b16 %v230
  %v887 = vunpack.c.l.b16 %v231
  %v888 = vunpack.c.l.b16 %v232
  %v889 = vunpack.c.l.b16 %v233
  %v890 = vunpack.c.l.b16 %v234
  %v891 = vunpack.c.l.b16 %v235
  %v892 = vunpack.c.l.b16 %v236
  %v893 = vunpack.c.l.b16 %v237
  %v894 = vunpack.c.l.b16 %v238
  %v895 = vunpack.c.l.b16 %v239
  %v896 = vunpack.c.l.b16 %v240
  %v897 = vunpack.c.l.b16 %v241
  %v898 = vunpack.c.l.b16 %v242
  %v899 = vunpack.c.l.b16 %v243
  %v900 = vunpack.c.l.b16 %v244
  %v901 = vunpack.c.l.b16 %v245
  %v902 = vunpack.c.l.b16 %v246
  %v903 = vunpack.c.l.b16 %v247
  %v904 = vunpack.c.l.b16 %v248
  %v905 = vunpack.c.l.b16 %v249
  %v906 = vunpack.c.l.b16 %v250
  %v907 = vunpack.c.l.b16 %v251
  %v908 = vunpack.c.l.b16 %v252
  %v909 = vunpack.c.l.b16 %v253
  %v910 = vunpack.c.l.b16 %v254
  %v911 = vunpack.c.l.b16 %v255
  %v912 = vunpack.c.l.b16 %v256
  %v913 = vunpack.c.l.b16 %v257
  %v914 = vunpack.c.l.b16 %v258
  %v915 = vunpack.c.l.b16 %v259
  %v916 = vunpack.c.l.b16 %v260
  %v917 = vunpack.c.l.b16 %v261
  %v918 = vunpack.c.l.b16 %v262
  %v919 = vunpack.c.l.b16 %v263
  %v920 = vunpack.c.l.b16 %v264
  %v921 = vunpack.c.l.b16 %v265
  %v922 = vunpack.c.l.b16 %v266
  %v923 = vunpack.c.l.b16 %v267
  %v924 = vunpack.c.l.b16 %v268
  %v925 = vunpack.c.l.b16 %v269
  %v926 = vunpack.c.l.b16 %v270
  %v927 = vunpack.c.l.b16 %v271
  %v928 = vunpack.c.l.b16 %v272
  %v929 = vunpack.c.l.b16 %v273
  %v930 = vunpack.c.l.b16 %v274
  %v931 = vunpack.c.l.b16 %v275
  %v932 = vunpack.c.l.b16 %v276
  %v933 = vunpack.c.l.b16 %v277
  %v934 = vpack.c.b16 %v791, %v790
  %v935 = vpack.c.b16 %v793, %v792
  %v936 = vpack.c.b16 %v795, %v794
  %v937 = vpack.c.b16 %v797, %v796
  %v938 = vpack.c.b16 %v799, %v798
  %v939 = vpack.c.b16 %v801, %v800
  %v940 = vpack.c.b16 %v803, %v802
  %v941 = vpack.c.b16 %v805, %v804
  %v942 = vpack.c.b16 %v807, %v806
  %v943 = vpack.c.b16 %v809, %v808
  %v944 = vpack.c.b16 %v811, %v810
  %v945 = vpack.c.b16 %v813, %v812
  %v946 = vpack.c.b16 %v815, %v814
  %v947 = vpack.c.b16 %v817, %v816
  %v948 = vpack.c.b16 %v819, %v818
  %v949 = vpack.c.b16 %v821, %v820
  %v950 = vpack.c.b16 %v823, %v822
  %v951 = vpack.c.b16 %v825, %v824
  %v952 = vpack.c.b16 %v827, %v826
  %v953 = vpack.c.b16 %v829, %v828
  %v954 = vpack.c.b16 %v831, %v830
  %v955 = vpack.c.b16 %v833, %v832
  %v956 = vpack.c.b16 %v835, %v834
  %v957 = vpack.c.b16 %v837, %v836
  %v958 = vpack.c.b16 %v839, %v838
  %v959 = vpack.c.b16 %v841, %v840
  %v960 = vpack.c.b16 %v843, %v842
  %v961 = vpack.c.b16 %v845, %v844
  %v962 = vpack.c.b16 %v847, %v846
  %v963 = vpack.c.b16 %v849, %v848
  %v964 = vpack.c.b16 %v851, %v850
  %v965 = vpack.c.b16 %v853, %v852
  %v966 = vpack.c.b16 %v855, %v854
  %v967 = vpack.c.b16 %v857, %v856
  %v968 = vpack.c.b16 %v859, %v858
  %v969 = vpack.c.b16 %v861, %v860
  %v970 = vpack.c.b16 %v863, %v862
  %v971 = vpack.c.b16 %v865, %v864
  %v972 = vpack.c.b16 %v867, %v866
  %v973 = vpack.c.b16 %v869, %v868
  %v974 = vpack.c.b16 %v871, %v870
  %v975 = vpack.c.b16 %v873, %v872
  %v976 = vpack.c.b16 %v875, %v874
  %v977 = vpack.c.b16 %v877, %v876
  %v978 = vpack.c.b16 %v879, %v878
  %v979 = vpack.c.b16 %v881, %v880
  %v980 = vpack.c.b16 %v883, %v882
  %v981 = vpack.c.b16 %v885, %v884
  %v982 = vpack.c.b16 %v887, %v886
  %v983 = vpack.c.b16 %v889, %v888
  %v984 = vpack.c.b16 %v891, %v890
  %v985 = vpack.c.b16 %v893, %v892
  %v986 = vpack.c.b16 %v895, %v894
  %v987 = vpack.c.b16 %v897, %v896
  %v988 = vpack.c.b16 %v899, %v898
  %v989 = vpack.c.b16 %v901, %v900
  %v990 = vpack.c.b16 %v903, %v902
  %v991 = vpack.c.b16 %v905, %v904
  %v992 = vpack.c.b16 %v907, %v906
  %v993 = vpack.c.b16 %v909, %v908
  %v994 = vpack.c.b16 %v911, %v910
  %v995 = vpack.c.b16 %v913, %v912
  %v996 = vpack.c.b16 %v915, %v914
  %v997 = vpack.c.b16 %v917, %v916
  %v998 = vpack.c.b16 %v919, %v918
  %v999 = vpack.c.b16 %v921, %v920
  %v1000 = vpack.c.b16 %v923, %v922
  %v1001 = vpack.c.b16 %v925, %v924
  %v1002 = vpack.c.b16 %v927, %v926
  %v1003 = vpack.c.b16 %v929, %v928
  %v1004 = vpack.c.b16 %v931, %v930
  %v1005 = vpack.c.b16 %v933, %v932
  %1078 = vmatprep.subr.bf16.mxu0 0
  %1079 = vmatpush1.bf16.msra.mxu0 %v941
  %1080 = vmatprep.subr.bf16.mxu0 0
  %1081 = vmatpush1.bf16.msra.mxu0 %v940
  %1082 = vmatprep.subr.bf16.mxu0 0
  %1083 = vmatpush1.bf16.msra.mxu0 %v939
  %1084 = vmatprep.subr.bf16.mxu0 0
  %1085 = vmatpush1.bf16.msra.mxu0 %v938
  %1086 = vmatprep.subr.bf16.mxu0 0
  %1087 = vmatpush1.bf16.msra.mxu0 %v937
  %1088 = vmatprep.subr.bf16.mxu0 0
  %1089 = vmatpush1.bf16.msra.mxu0 %v936
  %1090 = vmatprep.subr.bf16.mxu0 0
  %1091 = vmatpush1.bf16.msra.mxu0 %v935
  %1092 = vmatprep.subr.bf16.mxu0 0
  %1093 = vmatpush1.bf16.msra.mxu0 %v934
  %1094 = vmatprep.subr.bf16.mxu0 0
  %1095 = vmatpush2.bf16.msra.mxu0 %v949
  %1096 = vmatprep.subr.bf16.mxu0 0
  %1097 = vmatpush2.bf16.msra.mxu0 %v948
  %1098 = vmatprep.subr.bf16.mxu0 0
  %1099 = vmatpush2.bf16.msra.mxu0 %v947
  %1100 = vmatprep.subr.bf16.mxu0 0
  %1101 = vmatpush2.bf16.msra.mxu0 %v946
  %1102 = vmatprep.subr.bf16.mxu0 0
  %1103 = vmatpush2.bf16.msra.mxu0 %v945
  %1104 = vmatprep.subr.bf16.mxu0 0
  %1105 = vmatpush2.bf16.msra.mxu0 %v944
  %1106 = vmatprep.subr.bf16.mxu0 0
  %1107 = vmatpush2.bf16.msra.mxu0 %v943
  %1108 = vmatprep.subr.bf16.mxu0 0
  %1109 = vmatpush2.bf16.msra.mxu0 %v942
  %1110 = vmatprep.mubr.bf16.mxu0 %v503
  %1111 = vmatmul.mubr.bf16.gmra.mxu0 %v502
  %v1112 = vpop.f32.mrf.mxu0
  %v1113 = vadd.f32 0.0, %v1112
  %v1114 = vpop.f32.mrf.mxu0
  %v1115 = vpop.f32.mrf.mxu0
  %v1116 = vadd.f32 0.0, %v1115
  %v1117 = vpop.f32.mrf.mxu0
  %1118 = vmatprep.mubr.bf16.mxu0 %v512
  %1119 = vmatmul.mubr.bf16.gmra.mxu0 %v511
  %v1120 = vpop.f32.mrf.mxu0
  %v1121 = vadd.f32 0.0, %v1120
  %v1122 = vpop.f32.mrf.mxu0
  %v1123 = vpop.f32.mrf.mxu0
  %v1124 = vadd.f32 0.0, %v1123
  %v1125 = vpop.f32.mrf.mxu0
  %1126 = vmatprep.mubr.bf16.mxu0 %v521
  %1127 = vmatmul.mubr.bf16.gmra.mxu0 %v520
  %v1128 = vpop.f32.mrf.mxu0
  %v1129 = vadd.f32 0.0, %v1128
  %v1130 = vpop.f32.mrf.mxu0
  %v1131 = vpop.f32.mrf.mxu0
  %v1132 = vadd.f32 0.0, %v1131
  %v1133 = vpop.f32.mrf.mxu0
  %1134 = vmatprep.mubr.bf16.mxu0 %v530
  %1135 = vmatmul.mubr.bf16.gmra.mxu0 %v529
  %v1136 = vpop.f32.mrf.mxu0
  %v1137 = vadd.f32 0.0, %v1136
  %v1138 = vpop.f32.mrf.mxu0
  %v1139 = vpop.f32.mrf.mxu0
  %v1140 = vadd.f32 0.0, %v1139
  %v1141 = vpop.f32.mrf.mxu0
  %1142 = vmatprep.mubr.bf16.mxu0 %v539
  %1143 = vmatmul.mubr.bf16.gmra.mxu0 %v538
  %v1144 = vpop.f32.mrf.mxu0
  %v1145 = vadd.f32 0.0, %v1144
  %v1146 = vpop.f32.mrf.mxu0
  %v1147 = vpop.f32.mrf.mxu0
  %v1148 = vadd.f32 0.0, %v1147
  %v1149 = vpop.f32.mrf.mxu0
  %1150 = vmatprep.mubr.bf16.mxu0 %v548
  %1151 = vmatmul.mubr.bf16.gmra.mxu0 %v547
  %v1152 = vpop.f32.mrf.mxu0
  %v1153 = vadd.f32 0.0, %v1152
  %v1154 = vpop.f32.mrf.mxu0
  %v1155 = vpop.f32.mrf.mxu0
  %v1156 = vadd.f32 0.0, %v1155
  %v1157 = vpop.f32.mrf.mxu0
  %1158 = vmatprep.mubr.bf16.mxu0 %v557
  %1159 = vmatmul.mubr.bf16.gmra.mxu0 %v556
  %v1160 = vpop.f32.mrf.mxu0
  %v1161 = vadd.f32 0.0, %v1160
  %v1162 = vpop.f32.mrf.mxu0
  %v1163 = vpop.f32.mrf.mxu0
  %v1164 = vadd.f32 0.0, %v1163
  %v1165 = vpop.f32.mrf.mxu0
  %1166 = vmatprep.mubr.bf16.mxu0 %v566
  %1167 = vmatmul.mubr.bf16.gmra.mxu0 %v565
  %v1168 = vpop.f32.mrf.mxu0
  %v1169 = vadd.f32 0.0, %v1168
  %v1170 = vpop.f32.mrf.mxu0
  %v1171 = vpop.f32.mrf.mxu0
  %v1172 = vadd.f32 0.0, %v1171
  %v1173 = vpop.f32.mrf.mxu0
  %1174 = vdwg.mxu0
  %1175 = vmatprep.subr.bf16.mxu0 0
  %1176 = vmatpush1.bf16.msra.mxu0 %v957
  %1177 = vmatprep.subr.bf16.mxu0 0
  %1178 = vmatpush1.bf16.msra.mxu0 %v956
  %1179 = vmatprep.subr.bf16.mxu0 0
  %1180 = vmatpush1.bf16.msra.mxu0 %v955
  %1181 = vmatprep.subr.bf16.mxu0 0
  %1182 = vmatpush1.bf16.msra.mxu0 %v954
  %1183 = vmatprep.subr.bf16.mxu0 0
  %1184 = vmatpush1.bf16.msra.mxu0 %v953
  %1185 = vmatprep.subr.bf16.mxu0 0
  %1186 = vmatpush1.bf16.msra.mxu0 %v952
  %1187 = vmatprep.subr.bf16.mxu0 0
  %1188 = vmatpush1.bf16.msra.mxu0 %v951
  %1189 = vmatprep.subr.bf16.mxu0 0
  %1190 = vmatpush1.bf16.msra.mxu0 %v950
  %1191 = vmatprep.subr.bf16.mxu0 0
  %1192 = vmatpush2.bf16.msra.mxu0 %v965
  %1193 = vmatprep.subr.bf16.mxu0 0
  %1194 = vmatpush2.bf16.msra.mxu0 %v964
  %1195 = vmatprep.subr.bf16.mxu0 0
  %1196 = vmatpush2.bf16.msra.mxu0 %v963
  %1197 = vmatprep.subr.bf16.mxu0 0
  %1198 = vmatpush2.bf16.msra.mxu0 %v962
  %1199 = vmatprep.subr.bf16.mxu0 0
  %1200 = vmatpush2.bf16.msra.mxu0 %v961
  %1201 = vmatprep.subr.bf16.mxu0 0
  %1202 = vmatpush2.bf16.msra.mxu0 %v960
  %1203 = vmatprep.subr.bf16.mxu0 0
  %1204 = vmatpush2.bf16.msra.mxu0 %v959
  %1205 = vmatprep.subr.bf16.mxu0 0
  %1206 = vmatpush2.bf16.msra.mxu0 %v958
  %1207 = vmatprep.mubr.bf16.mxu0 %v505
  %1208 = vmatmul.mubr.bf16.gmra.mxu0 %v504
  %v1209 = vpop.f32.mrf.mxu0
  %v1210 = vadd.f32 %v1113, %v1209
  %v1211 = vpop.f32.mrf.mxu0
  %v1212 = vpop.f32.mrf.mxu0
  %v1213 = vadd.f32 %v1116, %v1212
  %v1214 = vpop.f32.mrf.mxu0
  %1215 = vmatprep.mubr.bf16.mxu0 %v514
  %1216 = vmatmul.mubr.bf16.gmra.mxu0 %v513
  %v1217 = vpop.f32.mrf.mxu0
  %v1218 = vadd.f32 %v1121, %v1217
  %v1219 = vpop.f32.mrf.mxu0
  %v1220 = vpop.f32.mrf.mxu0
  %v1221 = vadd.f32 %v1124, %v1220
  %v1222 = vpop.f32.mrf.mxu0
  %1223 = vmatprep.mubr.bf16.mxu0 %v523
  %1224 = vmatmul.mubr.bf16.gmra.mxu0 %v522
  %v1225 = vpop.f32.mrf.mxu0
  %v1226 = vadd.f32 %v1129, %v1225
  %v1227 = vpop.f32.mrf.mxu0
  %v1228 = vpop.f32.mrf.mxu0
  %v1229 = vadd.f32 %v1132, %v1228
  %v1230 = vpop.f32.mrf.mxu0
  %1231 = vmatprep.mubr.bf16.mxu0 %v532
  %1232 = vmatmul.mubr.bf16.gmra.mxu0 %v531
  %v1233 = vpop.f32.mrf.mxu0
  %v1234 = vadd.f32 %v1137, %v1233
  %v1235 = vpop.f32.mrf.mxu0
  %v1236 = vpop.f32.mrf.mxu0
  %v1237 = vadd.f32 %v1140, %v1236
  %v1238 = vpop.f32.mrf.mxu0
  %1239 = vmatprep.mubr.bf16.mxu0 %v541
  %1240 = vmatmul.mubr.bf16.gmra.mxu0 %v540
  %v1241 = vpop.f32.mrf.mxu0
  %v1242 = vadd.f32 %v1145, %v1241
  %v1243 = vpop.f32.mrf.mxu0
  %v1244 = vpop.f32.mrf.mxu0
  %v1245 = vadd.f32 %v1148, %v1244
  %v1246 = vpop.f32.mrf.mxu0
  %1247 = vmatprep.mubr.bf16.mxu0 %v550
  %1248 = vmatmul.mubr.bf16.gmra.mxu0 %v549
  %v1249 = vpop.f32.mrf.mxu0
  %v1250 = vadd.f32 %v1153, %v1249
  %v1251 = vpop.f32.mrf.mxu0
  %v1252 = vpop.f32.mrf.mxu0
  %v1253 = vadd.f32 %v1156, %v1252
  %v1254 = vpop.f32.mrf.mxu0
  %1255 = vmatprep.mubr.bf16.mxu0 %v559
  %1256 = vmatmul.mubr.bf16.gmra.mxu0 %v558
  %v1257 = vpop.f32.mrf.mxu0
  %v1258 = vadd.f32 %v1161, %v1257
  %v1259 = vpop.f32.mrf.mxu0
  %v1260 = vpop.f32.mrf.mxu0
  %v1261 = vadd.f32 %v1164, %v1260
  %v1262 = vpop.f32.mrf.mxu0
  %1263 = vmatprep.mubr.bf16.mxu0 %v568
  %1264 = vmatmul.mubr.bf16.gmra.mxu0 %v567
  %v1265 = vpop.f32.mrf.mxu0
  %v1266 = vadd.f32 %v1169, %v1265
  %v1267 = vpop.f32.mrf.mxu0
  %v1268 = vpop.f32.mrf.mxu0
  %v1269 = vadd.f32 %v1172, %v1268
  %v1270 = vpop.f32.mrf.mxu0
  %1271 = vdwg.mxu0
  %1272 = vmatprep.subr.bf16.mxu0 0
  %1273 = vmatpush1.bf16.msra.mxu0 %v973
  %1274 = vmatprep.subr.bf16.mxu0 0
  %1275 = vmatpush1.bf16.msra.mxu0 %v972
  %1276 = vmatprep.subr.bf16.mxu0 0
  %1277 = vmatpush1.bf16.msra.mxu0 %v971
  %1278 = vmatprep.subr.bf16.mxu0 0
  %1279 = vmatpush1.bf16.msra.mxu0 %v970
  %1280 = vmatprep.subr.bf16.mxu0 0
  %1281 = vmatpush1.bf16.msra.mxu0 %v969
  %1282 = vmatprep.subr.bf16.mxu0 0
  %1283 = vmatpush1.bf16.msra.mxu0 %v968
  %1284 = vmatprep.subr.bf16.mxu0 0
  %1285 = vmatpush1.bf16.msra.mxu0 %v967
  %1286 = vmatprep.subr.bf16.mxu0 0
  %1287 = vmatpush1.bf16.msra.mxu0 %v966
  %1288 = vmatprep.subr.bf16.mxu0 0
  %1289 = vmatpush2.bf16.msra.mxu0 %v981
  %1290 = vmatprep.subr.bf16.mxu0 0
  %1291 = vmatpush2.bf16.msra.mxu0 %v980
  %1292 = vmatprep.subr.bf16.mxu0 0
  %1293 = vmatpush2.bf16.msra.mxu0 %v979
  %1294 = vmatprep.subr.bf16.mxu0 0
  %1295 = vmatpush2.bf16.msra.mxu0 %v978
  %1296 = vmatprep.subr.bf16.mxu0 0
  %1297 = vmatpush2.bf16.msra.mxu0 %v977
  %1298 = vmatprep.subr.bf16.mxu0 0
  %1299 = vmatpush2.bf16.msra.mxu0 %v976
  %1300 = vmatprep.subr.bf16.mxu0 0
  %1301 = vmatpush2.bf16.msra.mxu0 %v975
  %1302 = vmatprep.subr.bf16.mxu0 0
  %1303 = vmatpush2.bf16.msra.mxu0 %v974
  %1304 = vmatprep.mubr.bf16.mxu0 %v507
  %1305 = vmatmul.mubr.bf16.gmra.mxu0 %v506
  %v1306 = vpop.f32.mrf.mxu0
  %v1307 = vadd.f32 %v1210, %v1306
  %v1308 = vpop.f32.mrf.mxu0
  %v1309 = vpop.f32.mrf.mxu0
  %v1310 = vadd.f32 %v1213, %v1309
  %v1311 = vpop.f32.mrf.mxu0
  %1312 = vmatprep.mubr.bf16.mxu0 %v516
  %1313 = vmatmul.mubr.bf16.gmra.mxu0 %v515
  %v1314 = vpop.f32.mrf.mxu0
  %v1315 = vadd.f32 %v1218, %v1314
  %v1316 = vpop.f32.mrf.mxu0
  %v1317 = vpop.f32.mrf.mxu0
  %v1318 = vadd.f32 %v1221, %v1317
  %v1319 = vpop.f32.mrf.mxu0
  %1320 = vmatprep.mubr.bf16.mxu0 %v525
  %1321 = vmatmul.mubr.bf16.gmra.mxu0 %v524
  %v1322 = vpop.f32.mrf.mxu0
  %v1323 = vadd.f32 %v1226, %v1322
  %v1324 = vpop.f32.mrf.mxu0
  %v1325 = vpop.f32.mrf.mxu0
  %v1326 = vadd.f32 %v1229, %v1325
  %v1327 = vpop.f32.mrf.mxu0
  %1328 = vmatprep.mubr.bf16.mxu0 %v534
  %1329 = vmatmul.mubr.bf16.gmra.mxu0 %v533
  %v1330 = vpop.f32.mrf.mxu0
  %v1331 = vadd.f32 %v1234, %v1330
  %v1332 = vpop.f32.mrf.mxu0
  %v1333 = vpop.f32.mrf.mxu0
  %v1334 = vadd.f32 %v1237, %v1333
  %v1335 = vpop.f32.mrf.mxu0
  %1336 = vmatprep.mubr.bf16.mxu0 %v543
  %1337 = vmatmul.mubr.bf16.gmra.mxu0 %v542
  %v1338 = vpop.f32.mrf.mxu0
  %v1339 = vadd.f32 %v1242, %v1338
  %v1340 = vpop.f32.mrf.mxu0
  %v1341 = vpop.f32.mrf.mxu0
  %v1342 = vadd.f32 %v1245, %v1341
  %v1343 = vpop.f32.mrf.mxu0
  %1344 = vmatprep.mubr.bf16.mxu0 %v552
  %1345 = vmatmul.mubr.bf16.gmra.mxu0 %v551
  %v1346 = vpop.f32.mrf.mxu0
  %v1347 = vadd.f32 %v1250, %v1346
  %v1348 = vpop.f32.mrf.mxu0
  %v1349 = vpop.f32.mrf.mxu0
  %v1350 = vadd.f32 %v1253, %v1349
  %v1351 = vpop.f32.mrf.mxu0
  %1352 = vmatprep.mubr.bf16.mxu0 %v561
  %1353 = vmatmul.mubr.bf16.gmra.mxu0 %v560
  %v1354 = vpop.f32.mrf.mxu0
  %v1355 = vadd.f32 %v1258, %v1354
  %v1356 = vpop.f32.mrf.mxu0
  %v1357 = vpop.f32.mrf.mxu0
  %v1358 = vadd.f32 %v1261, %v1357
  %v1359 = vpop.f32.mrf.mxu0
  %1360 = vmatprep.mubr.bf16.mxu0 %v570
  %1361 = vmatmul.mubr.bf16.gmra.mxu0 %v569
  %v1362 = vpop.f32.mrf.mxu0
  %v1363 = vadd.f32 %v1266, %v1362
  %v1364 = vpop.f32.mrf.mxu0
  %v1365 = vpop.f32.mrf.mxu0
  %v1366 = vadd.f32 %v1269, %v1365
  %v1367 = vpop.f32.mrf.mxu0
  %1368 = vdwg.mxu0
  %1369 = vmatprep.subr.bf16.mxu0 0
  %1370 = vmatpush1.bf16.msra.mxu0 %v989
  %1371 = vmatprep.subr.bf16.mxu0 0
  %1372 = vmatpush1.bf16.msra.mxu0 %v988
  %1373 = vmatprep.subr.bf16.mxu0 0
  %1374 = vmatpush1.bf16.msra.mxu0 %v987
  %1375 = vmatprep.subr.bf16.mxu0 0
  %1376 = vmatpush1.bf16.msra.mxu0 %v986
  %1377 = vmatprep.subr.bf16.mxu0 0
  %1378 = vmatpush1.bf16.msra.mxu0 %v985
  %1379 = vmatprep.subr.bf16.mxu0 0
  %1380 = vmatpush1.bf16.msra.mxu0 %v984
  %1381 = vmatprep.subr.bf16.mxu0 0
  %1382 = vmatpush1.bf16.msra.mxu0 %v983
  %1383 = vmatprep.subr.bf16.mxu0 0
  %1384 = vmatpush1.bf16.msra.mxu0 %v982
  %1385 = vmatprep.subr.bf16.mxu0 0
  %1386 = vmatpush2.bf16.msra.mxu0 %v997
  %1387 = vmatprep.subr.bf16.mxu0 0
  %1388 = vmatpush2.bf16.msra.mxu0 %v996
  %1389 = vmatprep.subr.bf16.mxu0 0
  %1390 = vmatpush2.bf16.msra.mxu0 %v995
  %1391 = vmatprep.subr.bf16.mxu0 0
  %1392 = vmatpush2.bf16.msra.mxu0 %v994
  %1393 = vmatprep.subr.bf16.mxu0 0
  %1394 = vmatpush2.bf16.msra.mxu0 %v993
  %1395 = vmatprep.subr.bf16.mxu0 0
  %1396 = vmatpush2.bf16.msra.mxu0 %v992
  %1397 = vmatprep.subr.bf16.mxu0 0
  %1398 = vmatpush2.bf16.msra.mxu0 %v991
  %1399 = vmatprep.subr.bf16.mxu0 0
  %1400 = vmatpush2.bf16.msra.mxu0 %v990
  %1401 = vmatprep.mubr.bf16.mxu0 %v509
  %1402 = vmatmul.mubr.bf16.gmra.mxu0 %v508
  %v1403 = vpop.f32.mrf.mxu0
  %v1404 = vadd.f32 %v1307, %v1403
  %v1405 = vpop.f32.mrf.mxu0
  %v1406 = vpop.f32.mrf.mxu0
  %v1407 = vadd.f32 %v1310, %v1406
  %v1408 = vpop.f32.mrf.mxu0
  %1409 = vmatprep.mubr.bf16.mxu0 %v518
  %1410 = vmatmul.mubr.bf16.gmra.mxu0 %v517
  %v1411 = vpop.f32.mrf.mxu0
  %v1412 = vadd.f32 %v1315, %v1411
  %v1413 = vpop.f32.mrf.mxu0
  %v1414 = vpop.f32.mrf.mxu0
  %v1415 = vadd.f32 %v1318, %v1414
  %v1416 = vpop.f32.mrf.mxu0
  %1417 = vmatprep.mubr.bf16.mxu0 %v527
  %1418 = vmatmul.mubr.bf16.gmra.mxu0 %v526
  %v1419 = vpop.f32.mrf.mxu0
  %v1420 = vadd.f32 %v1323, %v1419
  %v1421 = vpop.f32.mrf.mxu0
  %v1422 = vpop.f32.mrf.mxu0
  %v1423 = vadd.f32 %v1326, %v1422
  %v1424 = vpop.f32.mrf.mxu0
  %1425 = vmatprep.mubr.bf16.mxu0 %v536
  %1426 = vmatmul.mubr.bf16.gmra.mxu0 %v535
  %v1427 = vpop.f32.mrf.mxu0
  %v1428 = vadd.f32 %v1331, %v1427
  %v1429 = vpop.f32.mrf.mxu0
  %v1430 = vpop.f32.mrf.mxu0
  %v1431 = vadd.f32 %v1334, %v1430
  %v1432 = vpop.f32.mrf.mxu0
  %1433 = vmatprep.mubr.bf16.mxu0 %v545
  %1434 = vmatmul.mubr.bf16.gmra.mxu0 %v544
  %v1435 = vpop.f32.mrf.mxu0
  %v1436 = vadd.f32 %v1339, %v1435
  %v1437 = vpop.f32.mrf.mxu0
  %v1438 = vpop.f32.mrf.mxu0
  %v1439 = vadd.f32 %v1342, %v1438
  %v1440 = vpop.f32.mrf.mxu0
  %1441 = vmatprep.mubr.bf16.mxu0 %v554
  %1442 = vmatmul.mubr.bf16.gmra.mxu0 %v553
  %v1443 = vpop.f32.mrf.mxu0
  %v1444 = vadd.f32 %v1347, %v1443
  %v1445 = vpop.f32.mrf.mxu0
  %v1446 = vpop.f32.mrf.mxu0
  %v1447 = vadd.f32 %v1350, %v1446
  %v1448 = vpop.f32.mrf.mxu0
  %1449 = vmatprep.mubr.bf16.mxu0 %v563
  %1450 = vmatmul.mubr.bf16.gmra.mxu0 %v562
  %v1451 = vpop.f32.mrf.mxu0
  %v1452 = vadd.f32 %v1355, %v1451
  %v1453 = vpop.f32.mrf.mxu0
  %v1454 = vpop.f32.mrf.mxu0
  %v1455 = vadd.f32 %v1358, %v1454
  %v1456 = vpop.f32.mrf.mxu0
  %1457 = vmatprep.mubr.bf16.mxu0 %v572
  %1458 = vmatmul.mubr.bf16.gmra.mxu0 %v571
  %v1459 = vpop.f32.mrf.mxu0
  %v1460 = vadd.f32 %v1363, %v1459
  %v1461 = vpop.f32.mrf.mxu0
  %v1462 = vpop.f32.mrf.mxu0
  %v1463 = vadd.f32 %v1366, %v1462
  %v1464 = vpop.f32.mrf.mxu0
  %1465 = vdwg.mxu0
  %1466 = vmatprep.subr.bf16.mxu0 0
  %1467 = vmatpush1.bf16.msra.mxu0 %v1005
  %1468 = vmatprep.subr.bf16.mxu0 0
  %1469 = vmatpush1.bf16.msra.mxu0 %v1004
  %1470 = vmatprep.subr.bf16.mxu0 0
  %1471 = vmatpush1.bf16.msra.mxu0 %v1003
  %1472 = vmatprep.subr.bf16.mxu0 0
  %1473 = vmatpush1.bf16.msra.mxu0 %v1002
  %1474 = vmatprep.subr.bf16.mxu0 0
  %1475 = vmatpush1.bf16.msra.mxu0 %v1001
  %1476 = vmatprep.subr.bf16.mxu0 0
  %1477 = vmatpush1.bf16.msra.mxu0 %v1000
  %1478 = vmatprep.subr.bf16.mxu0 0
  %1479 = vmatpush1.bf16.msra.mxu0 %v999
  %1480 = vmatprep.subr.bf16.mxu0 0
  %1481 = vmatpush1.bf16.msra.mxu0 %v998
  %1482 = vmatprep.subr.bf16.mxu0 0
  %1483 = vmatpush2.bf16.msra.mxu0 0
  %1484 = vmatprep.subr.bf16.mxu0 0
  %1485 = vmatpush2.bf16.msra.mxu0 0
  %1486 = vmatprep.subr.bf16.mxu0 0
  %1487 = vmatpush2.bf16.msra.mxu0 0
  %1488 = vmatprep.subr.bf16.mxu0 0
  %1489 = vmatpush2.bf16.msra.mxu0 0
  %1490 = vmatprep.subr.bf16.mxu0 0
  %1491 = vmatpush2.bf16.msra.mxu0 0
  %1492 = vmatprep.subr.bf16.mxu0 0
  %1493 = vmatpush2.bf16.msra.mxu0 0
  %1494 = vmatprep.subr.bf16.mxu0 0
  %1495 = vmatpush2.bf16.msra.mxu0 0
  %1496 = vmatprep.subr.bf16.mxu0 0
  %1497 = vmatpush2.bf16.msra.mxu0 0
  %1498 = vmatprep.mubr.bf16.mxu0 0
  %1499 = vmatmul.mubr.bf16.gmra.mxu0 %v510
  %v1500 = vpop.f32.mrf.mxu0
  %v1501 = vadd.f32 %v1404, %v1500
  %v1502 = vpop.f32.mrf.mxu0
  %v1503 = vpop.f32.mrf.mxu0
  %v1504 = vadd.f32 %v1407, %v1503
  %v1505 = vpop.f32.mrf.mxu0
  %1506 = vmatprep.mubr.bf16.mxu0 0
  %1507 = vmatmul.mubr.bf16.gmra.mxu0 %v519
  %v1508 = vpop.f32.mrf.mxu0
  %v1509 = vadd.f32 %v1412, %v1508
  %v1510 = vpop.f32.mrf.mxu0
  %v1511 = vpop.f32.mrf.mxu0
  %v1512 = vadd.f32 %v1415, %v1511
  %v1513 = vpop.f32.mrf.mxu0
  %1514 = vmatprep.mubr.bf16.mxu0 0
  %1515 = vmatmul.mubr.bf16.gmra.mxu0 %v528
  %v1516 = vpop.f32.mrf.mxu0
  %v1517 = vadd.f32 %v1420, %v1516
  %v1518 = vpop.f32.mrf.mxu0
  %v1519 = vpop.f32.mrf.mxu0
  %v1520 = vadd.f32 %v1423, %v1519
  %v1521 = vpop.f32.mrf.mxu0
  %1522 = vmatprep.mubr.bf16.mxu0 0
  %1523 = vmatmul.mubr.bf16.gmra.mxu0 %v537
  %v1524 = vpop.f32.mrf.mxu0
  %v1525 = vadd.f32 %v1428, %v1524
  %v1526 = vpop.f32.mrf.mxu0
  %v1527 = vpop.f32.mrf.mxu0
  %v1528 = vadd.f32 %v1431, %v1527
  %v1529 = vpop.f32.mrf.mxu0
  %1530 = vmatprep.mubr.bf16.mxu0 0
  %1531 = vmatmul.mubr.bf16.gmra.mxu0 %v546
  %v1532 = vpop.f32.mrf.mxu0
  %v1533 = vadd.f32 %v1436, %v1532
  %v1534 = vpop.f32.mrf.mxu0
  %v1535 = vpop.f32.mrf.mxu0
  %v1536 = vadd.f32 %v1439, %v1535
  %v1537 = vpop.f32.mrf.mxu0
  %1538 = vmatprep.mubr.bf16.mxu0 0
  %1539 = vmatmul.mubr.bf16.gmra.mxu0 %v555
  %v1540 = vpop.f32.mrf.mxu0
  %v1541 = vadd.f32 %v1444, %v1540
  %v1542 = vpop.f32.mrf.mxu0
  %v1543 = vpop.f32.mrf.mxu0
  %v1544 = vadd.f32 %v1447, %v1543
  %v1545 = vpop.f32.mrf.mxu0
  %1546 = vmatprep.mubr.bf16.mxu0 0
  %1547 = vmatmul.mubr.bf16.gmra.mxu0 %v564
  %v1548 = vpop.f32.mrf.mxu0
  %v1549 = vadd.f32 %v1452, %v1548
  %v1550 = vpop.f32.mrf.mxu0
  %v1551 = vpop.f32.mrf.mxu0
  %v1552 = vadd.f32 %v1455, %v1551
  %v1553 = vpop.f32.mrf.mxu0
  %1554 = vmatprep.mubr.bf16.mxu0 0
  %1555 = vmatmul.mubr.bf16.gmra.mxu0 %v573
  %v1556 = vpop.f32.mrf.mxu0
  %v1557 = vadd.f32 %v1460, %v1556
  %v1558 = vpop.f32.mrf.mxu0
  %v1559 = vpop.f32.mrf.mxu0
  %v1560 = vadd.f32 %v1463, %v1559
  %v1561 = vpop.f32.mrf.mxu0
  %1562 = vdwg.mxu0
  %v1563 = vadd.f32 %v38, %v1501
  %v1564 = vadd.f32 %v39, %v1504
  %v1565 = vadd.f32 %v40, %v1509
  %v1566 = vadd.f32 %v41, %v1512
  %v1567 = vadd.f32 %v42, %v1517
  %v1568 = vadd.f32 %v43, %v1520
  %v1569 = vadd.f32 %v44, %v1525
  %v1570 = vadd.f32 %v45, %v1528
  %v1571 = vadd.f32 %v46, %v1533
  %v1572 = vadd.f32 %v47, %v1536
  %v1573 = vadd.f32 %v48, %v1541
  %v1574 = vadd.f32 %v49, %v1544
  %v1575 = vadd.f32 %v50, %v1549
  %v1576 = vadd.f32 %v51, %v1552
  %v1577 = vadd.f32 %v52, %v1557
  %v1578 = vadd.f32 %v53, %v1560
  %1579 = vst [vmem:[#allocation2] sm:$0xff] %v1563
  %1580 = vst [vmem:[#allocation2 + $0x8] sm:$0xff] %v1564
  %1581 = vst [vmem:[#allocation2 + $0x10] sm:$0xff] %v1565
  %1582 = vst [vmem:[#allocation2 + $0x18] sm:$0xff] %v1566
  %1583 = vst [vmem:[#allocation2 + $0x20] sm:$0xff] %v1567
  %1584 = vst [vmem:[#allocation2 + $0x28] sm:$0xff] %v1568
  %1585 = vst [vmem:[#allocation2 + $0x30] sm:$0xff] %v1569
  %1586 = vst [vmem:[#allocation2 + $0x38] sm:$0xff] %v1570
  %1587 = vst [vmem:[#allocation2 + $0x40] sm:$0xff] %v1571
  %1588 = vst [vmem:[#allocation2 + $0x48] sm:$0xff] %v1572
  %1589 = vst [vmem:[#allocation2 + $0x50] sm:$0xff] %v1573
  %1590 = vst [vmem:[#allocation2 + $0x58] sm:$0xff] %v1574
  %1591 = vst [vmem:[#allocation2 + $0x60] sm:$0xff] %v1575
  %1592 = vst [vmem:[#allocation2 + $0x68] sm:$0xff] %v1576
  %1593 = vst [vmem:[#allocation2 + $0x70] sm:$0xff] %v1577
  %1594 = vst [vmem:[#allocation2 + $0x78] sm:$0xff] %v1578
  // Predicated region
  $region22: #{_lambda_.6} parent=0 // pred_check
    %p1595 = pneg %p18
  $region23: #{_lambda_.6} parent=0 // pred_check_branch
    %1597 = sbr.rel (%p1595) target = $region25
  $region24: #{_lambda_.6} parent=0 // pred_region
    %v1598 = vld [vmem:[#allocation2] sm:$0xff]
    %v1599 = vld [vmem:[#allocation2 + $0x8] sm:$0xff]
    %v1600 = vld [vmem:[#allocation2 + $0x10] sm:$0xff]
    %v1601 = vld [vmem:[#allocation2 + $0x18] sm:$0xff]
    %v1602 = vld [vmem:[#allocation2 + $0x20] sm:$0xff]
    %v1603 = vld [vmem:[#allocation2 + $0x28] sm:$0xff]
    %v1604 = vld [vmem:[#allocation2 + $0x30] sm:$0xff]
    %v1605 = vld [vmem:[#allocation2 + $0x38] sm:$0xff]
    %v1606 = vld [vmem:[#allocation2 + $0x40] sm:$0xff]
    %v1607 = vld [vmem:[#allocation2 + $0x48] sm:$0xff]
    %v1608 = vld [vmem:[#allocation2 + $0x50] sm:$0xff]
    %v1609 = vld [vmem:[#allocation2 + $0x58] sm:$0xff]
    %v1610 = vld [vmem:[#allocation2 + $0x60] sm:$0xff]
    %v1611 = vld [vmem:[#allocation2 + $0x68] sm:$0xff]
    %v1612 = vld [vmem:[#allocation2 + $0x70] sm:$0xff]
    %v1613 = vld [vmem:[#allocation2 + $0x78] sm:$0xff]
    %v1614 = vadd.f32 %v1598, %v1599
    %v1615 = vadd.f32 %v1614, %v1600
    %v1616 = vadd.f32 %v1615, %v1601
    %v1617 = vadd.f32 %v1616, %v1602
    %v1618 = vadd.f32 %v1617, %v1603
    %v1619 = vadd.f32 %v1618, %v1604
    %v1620 = vadd.f32 %v1619, %v1605
    %v1621 = vadd.f32 %v1620, %v1606
    %v1622 = vadd.f32 %v1621, %v1607
    %v1623 = vadd.f32 %v1622, %v1608
    %v1624 = vadd.f32 %v1623, %v1609
    %v1625 = vadd.f32 %v1624, %v1610
    %v1626 = vadd.f32 %v1625, %v1611
    %v1627 = vadd.f32 %v1626, %v1612
    %v1628 = vadd.f32 %v1627, %v1613
    %v1629 = vrot.slane %v1628, 4
    %v1630 = vadd.f32 %v1628, %v1629
    %v1631 = vrot.slane %v1630, 2
    %v1632 = vadd.f32 %v1630, %v1631
    %v1633 = vrot.slane %v1632, 1
    %v1634 = vadd.f32 %v1632, %v1633
    %v1635 = vrcp.pop 128.0
    %v1636 = vmul.f32 %v1634, %v1635
    %v1637 = vsub.f32 %v1598, %v1636
    %v1638 = vsub.f32 %v1599, %v1636
    %v1639 = vsub.f32 %v1600, %v1636
    %v1640 = vsub.f32 %v1601, %v1636
    %v1641 = vsub.f32 %v1602, %v1636
    %v1642 = vsub.f32 %v1603, %v1636
    %v1643 = vsub.f32 %v1604, %v1636
    %v1644 = vsub.f32 %v1605, %v1636
    %v1645 = vsub.f32 %v1606, %v1636
    %v1646 = vsub.f32 %v1607, %v1636
    %v1647 = vsub.f32 %v1608, %v1636
    %v1648 = vsub.f32 %v1609, %v1636
    %v1649 = vsub.f32 %v1610, %v1636
    %v1650 = vsub.f32 %v1611, %v1636
    %v1651 = vsub.f32 %v1612, %v1636
    %v1652 = vsub.f32 %v1613, %v1636
    %v1653 = vmul.f32 %v1637, %v1637
    %v1654 = vmul.f32 %v1638, %v1638
    %v1655 = vmul.f32 %v1639, %v1639
    %v1656 = vmul.f32 %v1640, %v1640
    %v1657 = vmul.f32 %v1641, %v1641
    %v1658 = vmul.f32 %v1642, %v1642
    %v1659 = vmul.f32 %v1643, %v1643
    %v1660 = vmul.f32 %v1644, %v1644
    %v1661 = vmul.f32 %v1645, %v1645
    %v1662 = vmul.f32 %v1646, %v1646
    %v1663 = vmul.f32 %v1647, %v1647
    %v1664 = vmul.f32 %v1648, %v1648
    %v1665 = vmul.f32 %v1649, %v1649
    %v1666 = vmul.f32 %v1650, %v1650
    %v1667 = vmul.f32 %v1651, %v1651
    %v1668 = vmul.f32 %v1652, %v1652
    %v1669 = vadd.f32 %v1653, %v1654
    %v1670 = vadd.f32 %v1669, %v1655
    %v1671 = vadd.f32 %v1670, %v1656
    %v1672 = vadd.f32 %v1671, %v1657
    %v1673 = vadd.f32 %v1672, %v1658
    %v1674 = vadd.f32 %v1673, %v1659
    %v1675 = vadd.f32 %v1674, %v1660
    %v1676 = vadd.f32 %v1675, %v1661
    %v1677 = vadd.f32 %v1676, %v1662
    %v1678 = vadd.f32 %v1677, %v1663
    %v1679 = vadd.f32 %v1678, %v1664
    %v1680 = vadd.f32 %v1679, %v1665
    %v1681 = vadd.f32 %v1680, %v1666
    %v1682 = vadd.f32 %v1681, %v1667
    %v1683 = vadd.f32 %v1682, %v1668
    %v1684 = vrot.slane %v1683, 4
    %v1685 = vadd.f32 %v1683, %v1684
    %v1686 = vrot.slane %v1685, 2
    %v1687 = vadd.f32 %v1685, %v1686
    %v1688 = vrot.slane %v1687, 1
    %v1689 = vadd.f32 %v1687, %v1688
    %v1690 = vmul.f32 %v1689, %v1635
    %v1691 = vadd.f32 %v1690, 1e-05
    %v1692 = vrsqrt.pop %v1691
    %v1693 = vmul.f32 %v1637, %v1692
    %v1694 = vmul.f32 %v1638, %v1692
    %v1695 = vmul.f32 %v1639, %v1692
    %v1696 = vmul.f32 %v1640, %v1692
    %v1697 = vmul.f32 %v1641, %v1692
    %v1698 = vmul.f32 %v1642, %v1692
    %v1699 = vmul.f32 %v1643, %v1692
    %v1700 = vmul.f32 %v1644, %v1692
    %v1701 = vmul.f32 %v1645, %v1692
    %v1702 = vmul.f32 %v1646, %v1692
    %v1703 = vmul.f32 %v1647, %v1692
    %v1704 = vmul.f32 %v1648, %v1692
    %v1705 = vmul.f32 %v1649, %v1692
    %v1706 = vmul.f32 %v1650, %v1692
    %v1707 = vmul.f32 %v1651, %v1692
    %v1708 = vmul.f32 %v1652, %v1692
    %v1709 = vld [vmem:[%s2] sm:$0x1]
    %v1711 = vlaneseq
    %v1712 = vshrl.u32 %v1711, 7
    %v1713 = vsub.s32 0, %v1712
    %v1714 = vrot.slane %v1709, %v1713
    %v1716 = vmul.f32 %v1693, %v1714
    %v1717 = vmul.f32 %v1694, %v1714
    %v1718 = vmul.f32 %v1695, %v1714
    %v1719 = vmul.f32 %v1696, %v1714
    %v1720 = vmul.f32 %v1697, %v1714
    %v1721 = vmul.f32 %v1698, %v1714
    %v1722 = vmul.f32 %v1699, %v1714
    %v1723 = vmul.f32 %v1700, %v1714
    %v1724 = vmul.f32 %v1701, %v1714
    %v1725 = vmul.f32 %v1702, %v1714
    %v1726 = vmul.f32 %v1703, %v1714
    %v1727 = vmul.f32 %v1704, %v1714
    %v1728 = vmul.f32 %v1705, %v1714
    %v1729 = vmul.f32 %v1706, %v1714
    %v1730 = vmul.f32 %v1707, %v1714
    %v1731 = vmul.f32 %v1708, %v1714
    %v1732 = vld [vmem:[%s3] sm:$0x1]
    %v1734 = vlaneseq
    %v1735 = vshrl.u32 %v1734, 7
    %v1736 = vsub.s32 0, %v1735
    %v1737 = vrot.slane %v1732, %v1736
    %v1739 = vadd.f32 %v1716, %v1737
    %v1740 = vadd.f32 %v1717, %v1737
    %v1741 = vadd.f32 %v1718, %v1737
    %v1742 = vadd.f32 %v1719, %v1737
    %v1743 = vadd.f32 %v1720, %v1737
    %v1744 = vadd.f32 %v1721, %v1737
    %v1745 = vadd.f32 %v1722, %v1737
    %v1746 = vadd.f32 %v1723, %v1737
    %v1747 = vadd.f32 %v1724, %v1737
    %v1748 = vadd.f32 %v1725, %v1737
    %v1749 = vadd.f32 %v1726, %v1737
    %v1750 = vadd.f32 %v1727, %v1737
    %v1751 = vadd.f32 %v1728, %v1737
    %v1752 = vadd.f32 %v1729, %v1737
    %v1753 = vadd.f32 %v1730, %v1737
    %v1754 = vadd.f32 %v1731, %v1737
    %v1755 = vmax.f32 %v1739, 0.0
    %v1756 = vmax.f32 %v1740, 0.0
    %v1757 = vmax.f32 %v1741, 0.0
    %v1758 = vmax.f32 %v1742, 0.0
    %v1759 = vmax.f32 %v1743, 0.0
    %v1760 = vmax.f32 %v1744, 0.0
    %v1761 = vmax.f32 %v1745, 0.0
    %v1762 = vmax.f32 %v1746, 0.0
    %v1763 = vmax.f32 %v1747, 0.0
    %v1764 = vmax.f32 %v1748, 0.0
    %v1765 = vmax.f32 %v1749, 0.0
    %v1766 = vmax.f32 %v1750, 0.0
    %v1767 = vmax.f32 %v1751, 0.0
    %v1768 = vmax.f32 %v1752, 0.0
    %v1769 = vmax.f32 %v1753, 0.0
    %v1770 = vmax.f32 %v1754, 0.0
    %v1771 = vpack.c.bf16 %v1756, %v1755
    %v1772 = vpack.c.bf16 %v1758, %v1757
    %v1773 = vpack.c.bf16 %v1760, %v1759
    %v1774 = vpack.c.bf16 %v1762, %v1761
    %v1775 = vpack.c.bf16 %v1764, %v1763
    %v1776 = vpack.c.bf16 %v1766, %v1765
    %v1777 = vpack.c.bf16 %v1768, %v1767
    %v1778 = vpack.c.bf16 %v1770, %v1769
    %v1787 = vunpack.c.l.b16 %v1771
    %v1788 = vunpack.c.h.b16 %v1771
    %v1789 = vunpack.c.l.b16 %v1772
    %v1790 = vunpack.c.h.b16 %v1772
    %v1791 = vunpack.c.l.b16 %v1773
    %v1792 = vunpack.c.h.b16 %v1773
    %v1793 = vunpack.c.l.b16 %v1774
    %v1794 = vunpack.c.h.b16 %v1774
    %v1795 = vunpack.c.l.b16 %v1775
    %v1796 = vunpack.c.h.b16 %v1775
    %v1797 = vunpack.c.l.b16 %v1776
    %v1798 = vunpack.c.h.b16 %v1776
    %v1799 = vunpack.c.l.b16 %v1777
    %v1800 = vunpack.c.h.b16 %v1777
    %v1801 = vunpack.c.l.b16 %v1778
    %v1802 = vunpack.c.h.b16 %v1778
    %v1803 = vpack.c.b16 %v1787, %v1787
    %v1804 = vpack.c.b16 %v1788, %v1788
    %v1805 = vpack.c.b16 %v1789, %v1789
    %v1806 = vpack.c.b16 %v1790, %v1790
    %v1807 = vpack.c.b16 %v1791, %v1791
    %v1808 = vpack.c.b16 %v1792, %v1792
    %v1809 = vpack.c.b16 %v1793, %v1793
    %v1810 = vpack.c.b16 %v1794, %v1794
    %v1811 = vpack.c.b16 %v1795, %v1795
    %v1812 = vpack.c.b16 %v1796, %v1796
    %v1813 = vpack.c.b16 %v1797, %v1797
    %v1814 = vpack.c.b16 %v1798, %v1798
    %v1815 = vpack.c.b16 %v1799, %v1799
    %v1816 = vpack.c.b16 %v1800, %v1800
    %v1817 = vpack.c.b16 %v1801, %v1801
    %v1818 = vpack.c.b16 %v1802, %v1802
    %1835 = vst [vmem:[%s4] sm:$0xf] %v1803
    %1836 = vst [vmem:[%s4 + $0x4] sm:$0xf] %v1804
    %1837 = vst [vmem:[%s4 + $0x8] sm:$0xf] %v1805
    %1838 = vst [vmem:[%s4 + $0xc] sm:$0xf] %v1806
    %1839 = vst [vmem:[%s4 + $0x10] sm:$0xf] %v1807
    %1840 = vst [vmem:[%s4 + $0x14] sm:$0xf] %v1808
    %1841 = vst [vmem:[%s4 + $0x18] sm:$0xf] %v1809
    %1842 = vst [vmem:[%s4 + $0x1c] sm:$0xf] %v1810
    %1843 = vst [vmem:[%s4 + $0x20] sm:$0xf] %v1811
    %1844 = vst [vmem:[%s4 + $0x24] sm:$0xf] %v1812
    %1845 = vst [vmem:[%s4 + $0x28] sm:$0xf] %v1813
    %1846 = vst [vmem:[%s4 + $0x2c] sm:$0xf] %v1814
    %1847 = vst [vmem:[%s4 + $0x30] sm:$0xf] %v1815
    %1848 = vst [vmem:[%s4 + $0x34] sm:$0xf] %v1816
    %1849 = vst [vmem:[%s4 + $0x38] sm:$0xf] %v1817
    %1850 = vst [vmem:[%s4 + $0x3c] sm:$0xf] %v1818
  $region25: #{_lambda_.6} parent=0 // pred_fallthru
    _
  // Predicated region
  $region26: #{_lambda_.6} parent=0 // pred_check
    _
  $region27: #{_lambda_.6} parent=0 // pred_check_branch
    %1852 = sbr.rel (0) target = $region29
  $region28: #{_lambda_.6} parent=0 // pred_region
    _
  $region29: #{_lambda_.6} parent=0 // pred_fallthru
    _
  // Predicated region
  $region30: #{_lambda_.6} parent=0 // pred_check
    _
  $region31: #{_lambda_.6} parent=0 // pred_check_branch
    %1854 = sbr.rel (0) target = $region33
  $region32: #{_lambda_.6} parent=0 // pred_region
    _
  $region33: #{_lambda_.6} parent=0 // pred_fallthru
    _

// kernel: _lambda_.7
$region0: #{_lambda_.7}
  #allocation0 [shape = 'u32[]', space=smem, size = 0x4, offset = 0x4, fixed_abs, tag = 'smem constant byte address 0x4 - core index']
  #allocation1 [shape = 'u32[144,128]{1,0:T(1,128)}', space=vmem, size = 0x12000, scoped, tag = 'internal scratch']
  #allocation2 [shape = 'f32[128,128]{1,0:T(8,128)}', space=vmem, size = 0x10000, scoped, tag = 'scratch operand']
  %s0 = inlined_call_operand.vmem [shape: bf16[128,1152], index: 0, kind: input, shape index: {}]
  %s1 = inlined_call_operand.vmem [shape: bf16[1152,128], index: 1, kind: input, shape index: {}]
  %s2 = inlined_call_operand.vmem [shape: f32[1,128], index: 2, kind: input, shape index: {}]
  %s3 = inlined_call_operand.vmem [shape: f32[1,128], index: 3, kind: input, shape index: {}]
  %s4 = inlined_call_operand.vmem [shape: bf16[128,128], index: 4, kind: input, shape index: {}]
  %s5 = inlined_call_operand.vmem [shape: bf16[128,128], index: 5, kind: output, shape index: {}]
  %s6 = sld [smem:[#allocation0]]
  $region38: #{_lambda_.7} parent=0
    _
  %s8 = ssub.s32 1, %s6
  %s9 = scalar_select 0, %s8, %s6
  // Predicated region
  $region2: #{_lambda_.7} parent=0 // pred_check
    _
  $region3: #{_lambda_.7} parent=0 // pred_check_branch
    %11 = sbr.rel (0) target = $region5
  $region4: #{_lambda_.7} parent=0 // pred_region
    _
  $region5: #{_lambda_.7} parent=0 // pred_fallthru
    _
  // Predicated region
  $region6: #{_lambda_.7} parent=0 // pred_check
    _
  $region7: #{_lambda_.7} parent=0 // pred_check_branch
    %13 = sbr.rel (0) target = $region9
  $region8: #{_lambda_.7} parent=0 // pred_region
    _
  $region9: #{_lambda_.7} parent=0 // pred_fallthru
    _
  // Predicated region
  $region10: #{_lambda_.7} parent=0 // pred_check
    _
  $region11: #{_lambda_.7} parent=0 // pred_check_branch
    %15 = sbr.rel (0) target = $region13
  $region12: #{_lambda_.7} parent=0 // pred_region
    _
  $region13: #{_lambda_.7} parent=0 // pred_fallthru
    _
  // Predicated region
  $region14: #{_lambda_.7} parent=0 // pred_check
    _
  $region15: #{_lambda_.7} parent=0 // pred_check_branch
    %17 = sbr.rel (0) target = $region17
  $region16: #{_lambda_.7} parent=0 // pred_region
    _
  $region17: #{_lambda_.7} parent=0 // pred_fallthru
    _
  // Predicated region
  $region18: #{_lambda_.7} parent=0 // pred_check
    _
  $region19: #{_lambda_.7} parent=0 // pred_check_branch
    %19 = sbr.rel (0) target = $region21
  $region20: #{_lambda_.7} parent=0 // pred_region
    _
  $region21: #{_lambda_.7} parent=0 // pred_fallthru
    _
  %p21 = scmp.eq.s32.totalorder 0, 0
  // Predicated region
  $region22: #{_lambda_.7} parent=0 // pred_check
    %p22 = pneg %p21
  $region23: #{_lambda_.7} parent=0 // pred_check_branch
    %24 = sbr.rel (%p22) target = $region25
  $region24: #{_lambda_.7} parent=0 // pred_region
    %25 = vst [vmem:[#allocation2] sm:$0xff] 0.0
    %26 = vst [vmem:[#allocation2 + $0x8] sm:$0xff] 0.0
    %27 = vst [vmem:[#allocation2 + $0x10] sm:$0xff] 0.0
    %28 = vst [vmem:[#allocation2 + $0x18] sm:$0xff] 0.0
    %29 = vst [vmem:[#allocation2 + $0x20] sm:$0xff] 0.0
    %30 = vst [vmem:[#allocation2 + $0x28] sm:$0xff] 0.0
    %31 = vst [vmem:[#allocation2 + $0x30] sm:$0xff] 0.0
    %32 = vst [vmem:[#allocation2 + $0x38] sm:$0xff] 0.0
    %33 = vst [vmem:[#allocation2 + $0x40] sm:$0xff] 0.0
    %34 = vst [vmem:[#allocation2 + $0x48] sm:$0xff] 0.0
    %35 = vst [vmem:[#allocation2 + $0x50] sm:$0xff] 0.0
    %36 = vst [vmem:[#allocation2 + $0x58] sm:$0xff] 0.0
    %37 = vst [vmem:[#allocation2 + $0x60] sm:$0xff] 0.0
    %38 = vst [vmem:[#allocation2 + $0x68] sm:$0xff] 0.0
    %39 = vst [vmem:[#allocation2 + $0x70] sm:$0xff] 0.0
    %40 = vst [vmem:[#allocation2 + $0x78] sm:$0xff] 0.0
  $region25: #{_lambda_.7} parent=0 // pred_fallthru
    _
  %v41 = vld [vmem:[#allocation2] sm:$0xff]
  %v42 = vld [vmem:[#allocation2 + $0x8] sm:$0xff]
  %v43 = vld [vmem:[#allocation2 + $0x10] sm:$0xff]
  %v44 = vld [vmem:[#allocation2 + $0x18] sm:$0xff]
  %v45 = vld [vmem:[#allocation2 + $0x20] sm:$0xff]
  %v46 = vld [vmem:[#allocation2 + $0x28] sm:$0xff]
  %v47 = vld [vmem:[#allocation2 + $0x30] sm:$0xff]
  %v48 = vld [vmem:[#allocation2 + $0x38] sm:$0xff]
  %v49 = vld [vmem:[#allocation2 + $0x40] sm:$0xff]
  %v50 = vld [vmem:[#allocation2 + $0x48] sm:$0xff]
  %v51 = vld [vmem:[#allocation2 + $0x50] sm:$0xff]
  %v52 = vld [vmem:[#allocation2 + $0x58] sm:$0xff]
  %v53 = vld [vmem:[#allocation2 + $0x60] sm:$0xff]
  %v54 = vld [vmem:[#allocation2 + $0x68] sm:$0xff]
  %v55 = vld [vmem:[#allocation2 + $0x70] sm:$0xff]
  %v56 = vld [vmem:[#allocation2 + $0x78] sm:$0xff]
  %v57 = vld [vmem:[%s0] sm:$0xff]
  %v58 = vld [vmem:[%s0 + $0x8] sm:$0xff]
  %v59 = vld [vmem:[%s0 + $0x10] sm:$0xff]
  %v60 = vld [vmem:[%s0 + $0x18] sm:$0xff]
  %v61 = vld [vmem:[%s0 + $0x20] sm:$0xf]
  %v62 = vld [vmem:[%s0 + $0x24] sm:$0xff]
  %v63 = vld [vmem:[%s0 + $0x2c] sm:$0xff]
  %v64 = vld [vmem:[%s0 + $0x34] sm:$0xff]
  %v65 = vld [vmem:[%s0 + $0x3c] sm:$0xff]
  %v66 = vld [vmem:[%s0 + $0x44] sm:$0xf]
  %v67 = vld [vmem:[%s0 + $0x48] sm:$0xff]
  %v68 = vld [vmem:[%s0 + $0x50] sm:$0xff]
  %v69 = vld [vmem:[%s0 + $0x58] sm:$0xff]
  %v70 = vld [vmem:[%s0 + $0x60] sm:$0xff]
  %v71 = vld [vmem:[%s0 + $0x68] sm:$0xf]
  %v72 = vld [vmem:[%s0 + $0x6c] sm:$0xff]
  %v73 = vld [vmem:[%s0 + $0x74] sm:$0xff]
  %v74 = vld [vmem:[%s0 + $0x7c] sm:$0xff]
  %v75 = vld [vmem:[%s0 + $0x84] sm:$0xff]
  %v76 = vld [vmem:[%s0 + $0x8c] sm:$0xf]
  %v77 = vld [vmem:[%s0 + $0x90] sm:$0xff]
  %v78 = vld [vmem:[%s0 + $0x98] sm:$0xff]
  %v79 = vld [vmem:[%s0 + $0xa0] sm:$0xff]
  %v80 = vld [vmem:[%s0 + $0xa8] sm:$0xff]
  %v81 = vld [vmem:[%s0 + $0xb0] sm:$0xf]
  %v82 = vld [vmem:[%s0 + $0xb4] sm:$0xff]
  %v83 = vld [vmem:[%s0 + $0xbc] sm:$0xff]
  %v84 = vld [vmem:[%s0 + $0xc4] sm:$0xff]
  %v85 = vld [vmem:[%s0 + $0xcc] sm:$0xff]
  %v86 = vld [vmem:[%s0 + $0xd4] sm:$0xf]
  %v87 = vld [vmem:[%s0 + $0xd8] sm:$0xff]
  %v88 = vld [vmem:[%s0 + $0xe0] sm:$0xff]
  %v89 = vld [vmem:[%s0 + $0xe8] sm:$0xff]
  %v90 = vld [vmem:[%s0 + $0xf0] sm:$0xff]
  %v91 = vld [vmem:[%s0 + $0xf8] sm:$0xf]
  %v92 = vld [vmem:[%s0 + $0xfc] sm:$0xff]
  %v93 = vld [vmem:[%s0 + $0x104] sm:$0xff]
  %v94 = vld [vmem:[%s0 + $0x10c] sm:$0xff]
  %v95 = vld [vmem:[%s0 + $0x114] sm:$0xff]
  %v96 = vld [vmem:[%s0 + $0x11c] sm:$0xf]
  %v97 = vld [vmem:[%s0 + $0x120] sm:$0xff]
  %v98 = vld [vmem:[%s0 + $0x128] sm:$0xff]
  %v99 = vld [vmem:[%s0 + $0x130] sm:$0xff]
  %v100 = vld [vmem:[%s0 + $0x138] sm:$0xff]
  %v101 = vld [vmem:[%s0 + $0x140] sm:$0xf]
  %v102 = vld [vmem:[%s0 + $0x144] sm:$0xff]
  %v103 = vld [vmem:[%s0 + $0x14c] sm:$0xff]
  %v104 = vld [vmem:[%s0 + $0x154] sm:$0xff]
  %v105 = vld [vmem:[%s0 + $0x15c] sm:$0xff]
  %v106 = vld [vmem:[%s0 + $0x164] sm:$0xf]
  %v107 = vld [vmem:[%s0 + $0x168] sm:$0xff]
  %v108 = vld [vmem:[%s0 + $0x170] sm:$0xff]
  %v109 = vld [vmem:[%s0 + $0x178] sm:$0xff]
  %v110 = vld [vmem:[%s0 + $0x180] sm:$0xff]
  %v111 = vld [vmem:[%s0 + $0x188] sm:$0xf]
  %v112 = vld [vmem:[%s0 + $0x18c] sm:$0xff]
  %v113 = vld [vmem:[%s0 + $0x194] sm:$0xff]
  %v114 = vld [vmem:[%s0 + $0x19c] sm:$0xff]
  %v115 = vld [vmem:[%s0 + $0x1a4] sm:$0xff]
  %v116 = vld [vmem:[%s0 + $0x1ac] sm:$0xf]
  %v117 = vld [vmem:[%s0 + $0x1b0] sm:$0xff]
  %v118 = vld [vmem:[%s0 + $0x1b8] sm:$0xff]
  %v119 = vld [vmem:[%s0 + $0x1c0] sm:$0xff]
  %v120 = vld [vmem:[%s0 + $0x1c8] sm:$0xff]
  %v121 = vld [vmem:[%s0 + $0x1d0] sm:$0xf]
  %v122 = vld [vmem:[%s0 + $0x1d4] sm:$0xff]
  %v123 = vld [vmem:[%s0 + $0x1dc] sm:$0xff]
  %v124 = vld [vmem:[%s0 + $0x1e4] sm:$0xff]
  %v125 = vld [vmem:[%s0 + $0x1ec] sm:$0xff]
  %v126 = vld [vmem:[%s0 + $0x1f4] sm:$0xf]
  %v127 = vld [vmem:[%s0 + $0x1f8] sm:$0xff]
  %v128 = vld [vmem:[%s0 + $0x200] sm:$0xff]
  %v129 = vld [vmem:[%s0 + $0x208] sm:$0xff]
  %v130 = vld [vmem:[%s0 + $0x210] sm:$0xff]
  %v131 = vld [vmem:[%s0 + $0x218] sm:$0xf]
  %v132 = vld [vmem:[%s0 + $0x21c] sm:$0xff]
  %v133 = vld [vmem:[%s0 + $0x224] sm:$0xff]
  %v134 = vld [vmem:[%s0 + $0x22c] sm:$0xff]
  %v135 = vld [vmem:[%s0 + $0x234] sm:$0xff]
  %v136 = vld [vmem:[%s0 + $0x23c] sm:$0xf]
  %v137 = vld [vmem:[%s1] sm:$0xf]
  %v138 = vld [vmem:[%s1 + $0x4] sm:$0xf]
  %v139 = vld [vmem:[%s1 + $0x8] sm:$0xf]
  %v140 = vld [vmem:[%s1 + $0xc] sm:$0xf]
  %v141 = vld [vmem:[%s1 + $0x10] sm:$0xf]
  %v142 = vld [vmem:[%s1 + $0x14] sm:$0xf]
  %v143 = vld [vmem:[%s1 + $0x18] sm:$0xf]
  %v144 = vld [vmem:[%s1 + $0x1c] sm:$0xf]
  %v145 = vld [vmem:[%s1 + $0x20] sm:$0xf]
  %v146 = vld [vmem:[%s1 + $0x24] sm:$0xf]
  %v147 = vld [vmem:[%s1 + $0x28] sm:$0xf]
  %v148 = vld [vmem:[%s1 + $0x2c] sm:$0xf]
  %v149 = vld [vmem:[%s1 + $0x30] sm:$0xf]
  %v150 = vld [vmem:[%s1 + $0x34] sm:$0xf]
  %v151 = vld [vmem:[%s1 + $0x38] sm:$0xf]
  %v152 = vld [vmem:[%s1 + $0x3c] sm:$0xf]
  %v153 = vld [vmem:[%s1 + $0x40] sm:$0xf]
  %v154 = vld [vmem:[%s1 + $0x44] sm:$0xf]
  %v155 = vld [vmem:[%s1 + $0x48] sm:$0xf]
  %v156 = vld [vmem:[%s1 + $0x4c] sm:$0xf]
  %v157 = vld [vmem:[%s1 + $0x50] sm:$0xf]
  %v158 = vld [vmem:[%s1 + $0x54] sm:$0xf]
  %v159 = vld [vmem:[%s1 + $0x58] sm:$0xf]
  %v160 = vld [vmem:[%s1 + $0x5c] sm:$0xf]
  %v161 = vld [vmem:[%s1 + $0x60] sm:$0xf]
  %v162 = vld [vmem:[%s1 + $0x64] sm:$0xf]
  %v163 = vld [vmem:[%s1 + $0x68] sm:$0xf]
  %v164 = vld [vmem:[%s1 + $0x6c] sm:$0xf]
  %v165 = vld [vmem:[%s1 + $0x70] sm:$0xf]
  %v166 = vld [vmem:[%s1 + $0x74] sm:$0xf]
  %v167 = vld [vmem:[%s1 + $0x78] sm:$0xf]
  %v168 = vld [vmem:[%s1 + $0x7c] sm:$0xf]
  %v169 = vld [vmem:[%s1 + $0x80] sm:$0xf]
  %v170 = vld [vmem:[%s1 + $0x84] sm:$0xf]
  %v171 = vld [vmem:[%s1 + $0x88] sm:$0xf]
  %v172 = vld [vmem:[%s1 + $0x8c] sm:$0xf]
  %v173 = vld [vmem:[%s1 + $0x90] sm:$0xf]
  %v174 = vld [vmem:[%s1 + $0x94] sm:$0xf]
  %v175 = vld [vmem:[%s1 + $0x98] sm:$0xf]
  %v176 = vld [vmem:[%s1 + $0x9c] sm:$0xf]
  %v177 = vld [vmem:[%s1 + $0xa0] sm:$0xf]
  %v178 = vld [vmem:[%s1 + $0xa4] sm:$0xf]
  %v179 = vld [vmem:[%s1 + $0xa8] sm:$0xf]
  %v180 = vld [vmem:[%s1 + $0xac] sm:$0xf]
  %v181 = vld [vmem:[%s1 + $0xb0] sm:$0xf]
  %v182 = vld [vmem:[%s1 + $0xb4] sm:$0xf]
  %v183 = vld [vmem:[%s1 + $0xb8] sm:$0xf]
  %v184 = vld [vmem:[%s1 + $0xbc] sm:$0xf]
  %v185 = vld [vmem:[%s1 + $0xc0] sm:$0xf]
  %v186 = vld [vmem:[%s1 + $0xc4] sm:$0xf]
  %v187 = vld [vmem:[%s1 + $0xc8] sm:$0xf]
  %v188 = vld [vmem:[%s1 + $0xcc] sm:$0xf]
  %v189 = vld [vmem:[%s1 + $0xd0] sm:$0xf]
  %v190 = vld [vmem:[%s1 + $0xd4] sm:$0xf]
  %v191 = vld [vmem:[%s1 + $0xd8] sm:$0xf]
  %v192 = vld [vmem:[%s1 + $0xdc] sm:$0xf]
  %v193 = vld [vmem:[%s1 + $0xe0] sm:$0xf]
  %v194 = vld [vmem:[%s1 + $0xe4] sm:$0xf]
  %v195 = vld [vmem:[%s1 + $0xe8] sm:$0xf]
  %v196 = vld [vmem:[%s1 + $0xec] sm:$0xf]
  %v197 = vld [vmem:[%s1 + $0xf0] sm:$0xf]
  %v198 = vld [vmem:[%s1 + $0xf4] sm:$0xf]
  %v199 = vld [vmem:[%s1 + $0xf8] sm:$0xf]
  %v200 = vld [vmem:[%s1 + $0xfc] sm:$0xf]
  %v201 = vld [vmem:[%s1 + $0x100] sm:$0xf]
  %v202 = vld [vmem:[%s1 + $0x104] sm:$0xf]
  %v203 = vld [vmem:[%s1 + $0x108] sm:$0xf]
  %v204 = vld [vmem:[%s1 + $0x10c] sm:$0xf]
  %v205 = vld [vmem:[%s1 + $0x110] sm:$0xf]
  %v206 = vld [vmem:[%s1 + $0x114] sm:$0xf]
  %v207 = vld [vmem:[%s1 + $0x118] sm:$0xf]
  %v208 = vld [vmem:[%s1 + $0x11c] sm:$0xf]
  %v209 = vld [vmem:[%s1 + $0x120] sm:$0xf]
  %v210 = vld [vmem:[%s1 + $0x124] sm:$0xf]
  %v211 = vld [vmem:[%s1 + $0x128] sm:$0xf]
  %v212 = vld [vmem:[%s1 + $0x12c] sm:$0xf]
  %v213 = vld [vmem:[%s1 + $0x130] sm:$0xf]
  %v214 = vld [vmem:[%s1 + $0x134] sm:$0xf]
  %v215 = vld [vmem:[%s1 + $0x138] sm:$0xf]
  %v216 = vld [vmem:[%s1 + $0x13c] sm:$0xf]
  %v217 = vld [vmem:[%s1 + $0x140] sm:$0xf]
  %v218 = vld [vmem:[%s1 + $0x144] sm:$0xf]
  %v219 = vld [vmem:[%s1 + $0x148] sm:$0xf]
  %v220 = vld [vmem:[%s1 + $0x14c] sm:$0xf]
  %v221 = vld [vmem:[%s1 + $0x150] sm:$0xf]
  %v222 = vld [vmem:[%s1 + $0x154] sm:$0xf]
  %v223 = vld [vmem:[%s1 + $0x158] sm:$0xf]
  %v224 = vld [vmem:[%s1 + $0x15c] sm:$0xf]
  %v225 = vld [vmem:[%s1 + $0x160] sm:$0xf]
  %v226 = vld [vmem:[%s1 + $0x164] sm:$0xf]
  %v227 = vld [vmem:[%s1 + $0x168] sm:$0xf]
  %v228 = vld [vmem:[%s1 + $0x16c] sm:$0xf]
  %v229 = vld [vmem:[%s1 + $0x170] sm:$0xf]
  %v230 = vld [vmem:[%s1 + $0x174] sm:$0xf]
  %v231 = vld [vmem:[%s1 + $0x178] sm:$0xf]
  %v232 = vld [vmem:[%s1 + $0x17c] sm:$0xf]
  %v233 = vld [vmem:[%s1 + $0x180] sm:$0xf]
  %v234 = vld [vmem:[%s1 + $0x184] sm:$0xf]
  %v235 = vld [vmem:[%s1 + $0x188] sm:$0xf]
  %v236 = vld [vmem:[%s1 + $0x18c] sm:$0xf]
  %v237 = vld [vmem:[%s1 + $0x190] sm:$0xf]
  %v238 = vld [vmem:[%s1 + $0x194] sm:$0xf]
  %v239 = vld [vmem:[%s1 + $0x198] sm:$0xf]
  %v240 = vld [vmem:[%s1 + $0x19c] sm:$0xf]
  %v241 = vld [vmem:[%s1 + $0x1a0] sm:$0xf]
  %v242 = vld [vmem:[%s1 + $0x1a4] sm:$0xf]
  %v243 = vld [vmem:[%s1 + $0x1a8] sm:$0xf]
  %v244 = vld [vmem:[%s1 + $0x1ac] sm:$0xf]
  %v245 = vld [vmem:[%s1 + $0x1b0] sm:$0xf]
  %v246 = vld [vmem:[%s1 + $0x1b4] sm:$0xf]
  %v247 = vld [vmem:[%s1 + $0x1b8] sm:$0xf]
  %v248 = vld [vmem:[%s1 + $0x1bc] sm:$0xf]
  %v249 = vld [vmem:[%s1 + $0x1c0] sm:$0xf]
  %v250 = vld [vmem:[%s1 + $0x1c4] sm:$0xf]
  %v251 = vld [vmem:[%s1 + $0x1c8] sm:$0xf]
  %v252 = vld [vmem:[%s1 + $0x1cc] sm:$0xf]
  %v253 = vld [vmem:[%s1 + $0x1d0] sm:$0xf]
  %v254 = vld [vmem:[%s1 + $0x1d4] sm:$0xf]
  %v255 = vld [vmem:[%s1 + $0x1d8] sm:$0xf]
  %v256 = vld [vmem:[%s1 + $0x1dc] sm:$0xf]
  %v257 = vld [vmem:[%s1 + $0x1e0] sm:$0xf]
  %v258 = vld [vmem:[%s1 + $0x1e4] sm:$0xf]
  %v259 = vld [vmem:[%s1 + $0x1e8] sm:$0xf]
  %v260 = vld [vmem:[%s1 + $0x1ec] sm:$0xf]
  %v261 = vld [vmem:[%s1 + $0x1f0] sm:$0xf]
  %v262 = vld [vmem:[%s1 + $0x1f4] sm:$0xf]
  %v263 = vld [vmem:[%s1 + $0x1f8] sm:$0xf]
  %v264 = vld [vmem:[%s1 + $0x1fc] sm:$0xf]
  %v265 = vld [vmem:[%s1 + $0x200] sm:$0xf]
  %v266 = vld [vmem:[%s1 + $0x204] sm:$0xf]
  %v267 = vld [vmem:[%s1 + $0x208] sm:$0xf]
  %v268 = vld [vmem:[%s1 + $0x20c] sm:$0xf]
  %v269 = vld [vmem:[%s1 + $0x210] sm:$0xf]
  %v270 = vld [vmem:[%s1 + $0x214] sm:$0xf]
  %v271 = vld [vmem:[%s1 + $0x218] sm:$0xf]
  %v272 = vld [vmem:[%s1 + $0x21c] sm:$0xf]
  %v273 = vld [vmem:[%s1 + $0x220] sm:$0xf]
  %v274 = vld [vmem:[%s1 + $0x224] sm:$0xf]
  %v275 = vld [vmem:[%s1 + $0x228] sm:$0xf]
  %v276 = vld [vmem:[%s1 + $0x22c] sm:$0xf]
  %v277 = vld [vmem:[%s1 + $0x230] sm:$0xf]
  %v278 = vld [vmem:[%s1 + $0x234] sm:$0xf]
  %v279 = vld [vmem:[%s1 + $0x238] sm:$0xf]
  %v280 = vld [vmem:[%s1 + $0x23c] sm:$0xf]
  %v361 = vunpack.c.l.b16 %v57
  %v362 = vunpack.c.h.b16 %v57
  %v363 = vunpack.c.l.b16 %v58
  %v364 = vunpack.c.h.b16 %v58
  %v365 = vunpack.c.l.b16 %v59
  %v366 = vunpack.c.h.b16 %v59
  %v367 = vunpack.c.l.b16 %v60
  %v368 = vunpack.c.h.b16 %v60
  %v369 = vunpack.c.l.b16 %v61
  %v370 = vunpack.c.l.b16 %v62
  %v371 = vunpack.c.h.b16 %v62
  %v372 = vunpack.c.l.b16 %v63
  %v373 = vunpack.c.h.b16 %v63
  %v374 = vunpack.c.l.b16 %v64
  %v375 = vunpack.c.h.b16 %v64
  %v376 = vunpack.c.l.b16 %v65
  %v377 = vunpack.c.h.b16 %v65
  %v378 = vunpack.c.l.b16 %v66
  %v379 = vunpack.c.l.b16 %v67
  %v380 = vunpack.c.h.b16 %v67
  %v381 = vunpack.c.l.b16 %v68
  %v382 = vunpack.c.h.b16 %v68
  %v383 = vunpack.c.l.b16 %v69
  %v384 = vunpack.c.h.b16 %v69
  %v385 = vunpack.c.l.b16 %v70
  %v386 = vunpack.c.h.b16 %v70
  %v387 = vunpack.c.l.b16 %v71
  %v388 = vunpack.c.l.b16 %v72
  %v389 = vunpack.c.h.b16 %v72
  %v390 = vunpack.c.l.b16 %v73
  %v391 = vunpack.c.h.b16 %v73
  %v392 = vunpack.c.l.b16 %v74
  %v393 = vunpack.c.h.b16 %v74
  %v394 = vunpack.c.l.b16 %v75
  %v395 = vunpack.c.h.b16 %v75
  %v396 = vunpack.c.l.b16 %v76
  %v397 = vunpack.c.l.b16 %v77
  %v398 = vunpack.c.h.b16 %v77
  %v399 = vunpack.c.l.b16 %v78
  %v400 = vunpack.c.h.b16 %v78
  %v401 = vunpack.c.l.b16 %v79
  %v402 = vunpack.c.h.b16 %v79
  %v403 = vunpack.c.l.b16 %v80
  %v404 = vunpack.c.h.b16 %v80
  %v405 = vunpack.c.l.b16 %v81
  %v406 = vunpack.c.l.b16 %v82
  %v407 = vunpack.c.h.b16 %v82
  %v408 = vunpack.c.l.b16 %v83
  %v409 = vunpack.c.h.b16 %v83
  %v410 = vunpack.c.l.b16 %v84
  %v411 = vunpack.c.h.b16 %v84
  %v412 = vunpack.c.l.b16 %v85
  %v413 = vunpack.c.h.b16 %v85
  %v414 = vunpack.c.l.b16 %v86
  %v415 = vunpack.c.l.b16 %v87
  %v416 = vunpack.c.h.b16 %v87
  %v417 = vunpack.c.l.b16 %v88
  %v418 = vunpack.c.h.b16 %v88
  %v419 = vunpack.c.l.b16 %v89
  %v420 = vunpack.c.h.b16 %v89
  %v421 = vunpack.c.l.b16 %v90
  %v422 = vunpack.c.h.b16 %v90
  %v423 = vunpack.c.l.b16 %v91
  %v424 = vunpack.c.l.b16 %v92
  %v425 = vunpack.c.h.b16 %v92
  %v426 = vunpack.c.l.b16 %v93
  %v427 = vunpack.c.h.b16 %v93
  %v428 = vunpack.c.l.b16 %v94
  %v429 = vunpack.c.h.b16 %v94
  %v430 = vunpack.c.l.b16 %v95
  %v431 = vunpack.c.h.b16 %v95
  %v432 = vunpack.c.l.b16 %v96
  %v433 = vunpack.c.l.b16 %v97
  %v434 = vunpack.c.h.b16 %v97
  %v435 = vunpack.c.l.b16 %v98
  %v436 = vunpack.c.h.b16 %v98
  %v437 = vunpack.c.l.b16 %v99
  %v438 = vunpack.c.h.b16 %v99
  %v439 = vunpack.c.l.b16 %v100
  %v440 = vunpack.c.h.b16 %v100
  %v441 = vunpack.c.l.b16 %v101
  %v442 = vunpack.c.l.b16 %v102
  %v443 = vunpack.c.h.b16 %v102
  %v444 = vunpack.c.l.b16 %v103
  %v445 = vunpack.c.h.b16 %v103
  %v446 = vunpack.c.l.b16 %v104
  %v447 = vunpack.c.h.b16 %v104
  %v448 = vunpack.c.l.b16 %v105
  %v449 = vunpack.c.h.b16 %v105
  %v450 = vunpack.c.l.b16 %v106
  %v451 = vunpack.c.l.b16 %v107
  %v452 = vunpack.c.h.b16 %v107
  %v453 = vunpack.c.l.b16 %v108
  %v454 = vunpack.c.h.b16 %v108
  %v455 = vunpack.c.l.b16 %v109
  %v456 = vunpack.c.h.b16 %v109
  %v457 = vunpack.c.l.b16 %v110
  %v458 = vunpack.c.h.b16 %v110
  %v459 = vunpack.c.l.b16 %v111
  %v460 = vunpack.c.l.b16 %v112
  %v461 = vunpack.c.h.b16 %v112
  %v462 = vunpack.c.l.b16 %v113
  %v463 = vunpack.c.h.b16 %v113
  %v464 = vunpack.c.l.b16 %v114
  %v465 = vunpack.c.h.b16 %v114
  %v466 = vunpack.c.l.b16 %v115
  %v467 = vunpack.c.h.b16 %v115
  %v468 = vunpack.c.l.b16 %v116
  %v469 = vunpack.c.l.b16 %v117
  %v470 = vunpack.c.h.b16 %v117
  %v471 = vunpack.c.l.b16 %v118
  %v472 = vunpack.c.h.b16 %v118
  %v473 = vunpack.c.l.b16 %v119
  %v474 = vunpack.c.h.b16 %v119
  %v475 = vunpack.c.l.b16 %v120
  %v476 = vunpack.c.h.b16 %v120
  %v477 = vunpack.c.l.b16 %v121
  %v478 = vunpack.c.l.b16 %v122
  %v479 = vunpack.c.h.b16 %v122
  %v480 = vunpack.c.l.b16 %v123
  %v481 = vunpack.c.h.b16 %v123
  %v482 = vunpack.c.l.b16 %v124
  %v483 = vunpack.c.h.b16 %v124
  %v484 = vunpack.c.l.b16 %v125
  %v485 = vunpack.c.h.b16 %v125
  %v486 = vunpack.c.l.b16 %v126
  %v487 = vunpack.c.l.b16 %v127
  %v488 = vunpack.c.h.b16 %v127
  %v489 = vunpack.c.l.b16 %v128
  %v490 = vunpack.c.h.b16 %v128
  %v491 = vunpack.c.l.b16 %v129
  %v492 = vunpack.c.h.b16 %v129
  %v493 = vunpack.c.l.b16 %v130
  %v494 = vunpack.c.h.b16 %v130
  %v495 = vunpack.c.l.b16 %v131
  %v496 = vunpack.c.l.b16 %v132
  %v497 = vunpack.c.h.b16 %v132
  %v498 = vunpack.c.l.b16 %v133
  %v499 = vunpack.c.h.b16 %v133
  %v500 = vunpack.c.l.b16 %v134
  %v501 = vunpack.c.h.b16 %v134
  %v502 = vunpack.c.l.b16 %v135
  %v503 = vunpack.c.h.b16 %v135
  %v504 = vunpack.c.l.b16 %v136
  %v505 = vpack.c.b16 %v370, %v361
  %v506 = vpack.c.b16 %v371, %v362
  %v507 = vpack.c.b16 %v372, %v363
  %v508 = vpack.c.b16 %v373, %v364
  %v509 = vpack.c.b16 %v374, %v365
  %v510 = vpack.c.b16 %v375, %v366
  %v511 = vpack.c.b16 %v376, %v367
  %v512 = vpack.c.b16 %v377, %v368
  %v513 = vpack.c.b16 %v378, %v369
  %v514 = vpack.c.b16 %v388, %v379
  %v515 = vpack.c.b16 %v389, %v380
  %v516 = vpack.c.b16 %v390, %v381
  %v517 = vpack.c.b16 %v391, %v382
  %v518 = vpack.c.b16 %v392, %v383
  %v519 = vpack.c.b16 %v393, %v384
  %v520 = vpack.c.b16 %v394, %v385
  %v521 = vpack.c.b16 %v395, %v386
  %v522 = vpack.c.b16 %v396, %v387
  %v523 = vpack.c.b16 %v406, %v397
  %v524 = vpack.c.b16 %v407, %v398
  %v525 = vpack.c.b16 %v408, %v399
  %v526 = vpack.c.b16 %v409, %v400
  %v527 = vpack.c.b16 %v410, %v401
  %v528 = vpack.c.b16 %v411, %v402
  %v529 = vpack.c.b16 %v412, %v403
  %v530 = vpack.c.b16 %v413, %v404
  %v531 = vpack.c.b16 %v414, %v405
  %v532 = vpack.c.b16 %v424, %v415
  %v533 = vpack.c.b16 %v425, %v416
  %v534 = vpack.c.b16 %v426, %v417
  %v535 = vpack.c.b16 %v427, %v418
  %v536 = vpack.c.b16 %v428, %v419
  %v537 = vpack.c.b16 %v429, %v420
  %v538 = vpack.c.b16 %v430, %v421
  %v539 = vpack.c.b16 %v431, %v422
  %v540 = vpack.c.b16 %v432, %v423
  %v541 = vpack.c.b16 %v442, %v433
  %v542 = vpack.c.b16 %v443, %v434
  %v543 = vpack.c.b16 %v444, %v435
  %v544 = vpack.c.b16 %v445, %v436
  %v545 = vpack.c.b16 %v446, %v437
  %v546 = vpack.c.b16 %v447, %v438
  %v547 = vpack.c.b16 %v448, %v439
  %v548 = vpack.c.b16 %v449, %v440
  %v549 = vpack.c.b16 %v450, %v441
  %v550 = vpack.c.b16 %v460, %v451
  %v551 = vpack.c.b16 %v461, %v452
  %v552 = vpack.c.b16 %v462, %v453
  %v553 = vpack.c.b16 %v463, %v454
  %v554 = vpack.c.b16 %v464, %v455
  %v555 = vpack.c.b16 %v465, %v456
  %v556 = vpack.c.b16 %v466, %v457
  %v557 = vpack.c.b16 %v467, %v458
  %v558 = vpack.c.b16 %v468, %v459
  %v559 = vpack.c.b16 %v478, %v469
  %v560 = vpack.c.b16 %v479, %v470
  %v561 = vpack.c.b16 %v480, %v471
  %v562 = vpack.c.b16 %v481, %v472
  %v563 = vpack.c.b16 %v482, %v473
  %v564 = vpack.c.b16 %v483, %v474
  %v565 = vpack.c.b16 %v484, %v475
  %v566 = vpack.c.b16 %v485, %v476
  %v567 = vpack.c.b16 %v486, %v477
  %v568 = vpack.c.b16 %v496, %v487
  %v569 = vpack.c.b16 %v497, %v488
  %v570 = vpack.c.b16 %v498, %v489
  %v571 = vpack.c.b16 %v499, %v490
  %v572 = vpack.c.b16 %v500, %v491
  %v573 = vpack.c.b16 %v501, %v492
  %v574 = vpack.c.b16 %v502, %v493
  %v575 = vpack.c.b16 %v503, %v494
  %v576 = vpack.c.b16 %v504, %v495
  %v793 = vunpack.c.l.b16 %v137
  %v794 = vunpack.c.l.b16 %v138
  %v795 = vunpack.c.l.b16 %v139
  %v796 = vunpack.c.l.b16 %v140
  %v797 = vunpack.c.l.b16 %v141
  %v798 = vunpack.c.l.b16 %v142
  %v799 = vunpack.c.l.b16 %v143
  %v800 = vunpack.c.l.b16 %v144
  %v801 = vunpack.c.l.b16 %v145
  %v802 = vunpack.c.l.b16 %v146
  %v803 = vunpack.c.l.b16 %v147
  %v804 = vunpack.c.l.b16 %v148
  %v805 = vunpack.c.l.b16 %v149
  %v806 = vunpack.c.l.b16 %v150
  %v807 = vunpack.c.l.b16 %v151
  %v808 = vunpack.c.l.b16 %v152
  %v809 = vunpack.c.l.b16 %v153
  %v810 = vunpack.c.l.b16 %v154
  %v811 = vunpack.c.l.b16 %v155
  %v812 = vunpack.c.l.b16 %v156
  %v813 = vunpack.c.l.b16 %v157
  %v814 = vunpack.c.l.b16 %v158
  %v815 = vunpack.c.l.b16 %v159
  %v816 = vunpack.c.l.b16 %v160
  %v817 = vunpack.c.l.b16 %v161
  %v818 = vunpack.c.l.b16 %v162
  %v819 = vunpack.c.l.b16 %v163
  %v820 = vunpack.c.l.b16 %v164
  %v821 = vunpack.c.l.b16 %v165
  %v822 = vunpack.c.l.b16 %v166
  %v823 = vunpack.c.l.b16 %v167
  %v824 = vunpack.c.l.b16 %v168
  %v825 = vunpack.c.l.b16 %v169
  %v826 = vunpack.c.l.b16 %v170
  %v827 = vunpack.c.l.b16 %v171
  %v828 = vunpack.c.l.b16 %v172
  %v829 = vunpack.c.l.b16 %v173
  %v830 = vunpack.c.l.b16 %v174
  %v831 = vunpack.c.l.b16 %v175
  %v832 = vunpack.c.l.b16 %v176
  %v833 = vunpack.c.l.b16 %v177
  %v834 = vunpack.c.l.b16 %v178
  %v835 = vunpack.c.l.b16 %v179
  %v836 = vunpack.c.l.b16 %v180
  %v837 = vunpack.c.l.b16 %v181
  %v838 = vunpack.c.l.b16 %v182
  %v839 = vunpack.c.l.b16 %v183
  %v840 = vunpack.c.l.b16 %v184
  %v841 = vunpack.c.l.b16 %v185
  %v842 = vunpack.c.l.b16 %v186
  %v843 = vunpack.c.l.b16 %v187
  %v844 = vunpack.c.l.b16 %v188
  %v845 = vunpack.c.l.b16 %v189
  %v846 = vunpack.c.l.b16 %v190
  %v847 = vunpack.c.l.b16 %v191
  %v848 = vunpack.c.l.b16 %v192
  %v849 = vunpack.c.l.b16 %v193
  %v850 = vunpack.c.l.b16 %v194
  %v851 = vunpack.c.l.b16 %v195
  %v852 = vunpack.c.l.b16 %v196
  %v853 = vunpack.c.l.b16 %v197
  %v854 = vunpack.c.l.b16 %v198
  %v855 = vunpack.c.l.b16 %v199
  %v856 = vunpack.c.l.b16 %v200
  %v857 = vunpack.c.l.b16 %v201
  %v858 = vunpack.c.l.b16 %v202
  %v859 = vunpack.c.l.b16 %v203
  %v860 = vunpack.c.l.b16 %v204
  %v861 = vunpack.c.l.b16 %v205
  %v862 = vunpack.c.l.b16 %v206
  %v863 = vunpack.c.l.b16 %v207
  %v864 = vunpack.c.l.b16 %v208
  %v865 = vunpack.c.l.b16 %v209
  %v866 = vunpack.c.l.b16 %v210
  %v867 = vunpack.c.l.b16 %v211
  %v868 = vunpack.c.l.b16 %v212
  %v869 = vunpack.c.l.b16 %v213
  %v870 = vunpack.c.l.b16 %v214
  %v871 = vunpack.c.l.b16 %v215
  %v872 = vunpack.c.l.b16 %v216
  %v873 = vunpack.c.l.b16 %v217
  %v874 = vunpack.c.l.b16 %v218
  %v875 = vunpack.c.l.b16 %v219
  %v876 = vunpack.c.l.b16 %v220
  %v877 = vunpack.c.l.b16 %v221
  %v878 = vunpack.c.l.b16 %v222
  %v879 = vunpack.c.l.b16 %v223
  %v880 = vunpack.c.l.b16 %v224
  %v881 = vunpack.c.l.b16 %v225
  %v882 = vunpack.c.l.b16 %v226
  %v883 = vunpack.c.l.b16 %v227
  %v884 = vunpack.c.l.b16 %v228
  %v885 = vunpack.c.l.b16 %v229
  %v886 = vunpack.c.l.b16 %v230
  %v887 = vunpack.c.l.b16 %v231
  %v888 = vunpack.c.l.b16 %v232
  %v889 = vunpack.c.l.b16 %v233
  %v890 = vunpack.c.l.b16 %v234
  %v891 = vunpack.c.l.b16 %v235
  %v892 = vunpack.c.l.b16 %v236
  %v893 = vunpack.c.l.b16 %v237
  %v894 = vunpack.c.l.b16 %v238
  %v895 = vunpack.c.l.b16 %v239
  %v896 = vunpack.c.l.b16 %v240
  %v897 = vunpack.c.l.b16 %v241
  %v898 = vunpack.c.l.b16 %v242
  %v899 = vunpack.c.l.b16 %v243
  %v900 = vunpack.c.l.b16 %v244
  %v901 = vunpack.c.l.b16 %v245
  %v902 = vunpack.c.l.b16 %v246
  %v903 = vunpack.c.l.b16 %v247
  %v904 = vunpack.c.l.b16 %v248
  %v905 = vunpack.c.l.b16 %v249
  %v906 = vunpack.c.l.b16 %v250
  %v907 = vunpack.c.l.b16 %v251
  %v908 = vunpack.c.l.b16 %v252
  %v909 = vunpack.c.l.b16 %v253
  %v910 = vunpack.c.l.b16 %v254
  %v911 = vunpack.c.l.b16 %v255
  %v912 = vunpack.c.l.b16 %v256
  %v913 = vunpack.c.l.b16 %v257
  %v914 = vunpack.c.l.b16 %v258
  %v915 = vunpack.c.l.b16 %v259
  %v916 = vunpack.c.l.b16 %v260
  %v917 = vunpack.c.l.b16 %v261
  %v918 = vunpack.c.l.b16 %v262
  %v919 = vunpack.c.l.b16 %v263
  %v920 = vunpack.c.l.b16 %v264
  %v921 = vunpack.c.l.b16 %v265
  %v922 = vunpack.c.l.b16 %v266
  %v923 = vunpack.c.l.b16 %v267
  %v924 = vunpack.c.l.b16 %v268
  %v925 = vunpack.c.l.b16 %v269
  %v926 = vunpack.c.l.b16 %v270
  %v927 = vunpack.c.l.b16 %v271
  %v928 = vunpack.c.l.b16 %v272
  %v929 = vunpack.c.l.b16 %v273
  %v930 = vunpack.c.l.b16 %v274
  %v931 = vunpack.c.l.b16 %v275
  %v932 = vunpack.c.l.b16 %v276
  %v933 = vunpack.c.l.b16 %v277
  %v934 = vunpack.c.l.b16 %v278
  %v935 = vunpack.c.l.b16 %v279
  %v936 = vunpack.c.l.b16 %v280
  %v937 = vpack.c.b16 %v794, %v793
  %v938 = vpack.c.b16 %v796, %v795
  %v939 = vpack.c.b16 %v798, %v797
  %v940 = vpack.c.b16 %v800, %v799
  %v941 = vpack.c.b16 %v802, %v801
  %v942 = vpack.c.b16 %v804, %v803
  %v943 = vpack.c.b16 %v806, %v805
  %v944 = vpack.c.b16 %v808, %v807
  %v945 = vpack.c.b16 %v810, %v809
  %v946 = vpack.c.b16 %v812, %v811
  %v947 = vpack.c.b16 %v814, %v813
  %v948 = vpack.c.b16 %v816, %v815
  %v949 = vpack.c.b16 %v818, %v817
  %v950 = vpack.c.b16 %v820, %v819
  %v951 = vpack.c.b16 %v822, %v821
  %v952 = vpack.c.b16 %v824, %v823
  %v953 = vpack.c.b16 %v826, %v825
  %v954 = vpack.c.b16 %v828, %v827
  %v955 = vpack.c.b16 %v830, %v829
  %v956 = vpack.c.b16 %v832, %v831
  %v957 = vpack.c.b16 %v834, %v833
  %v958 = vpack.c.b16 %v836, %v835
  %v959 = vpack.c.b16 %v838, %v837
  %v960 = vpack.c.b16 %v840, %v839
  %v961 = vpack.c.b16 %v842, %v841
  %v962 = vpack.c.b16 %v844, %v843
  %v963 = vpack.c.b16 %v846, %v845
  %v964 = vpack.c.b16 %v848, %v847
  %v965 = vpack.c.b16 %v850, %v849
  %v966 = vpack.c.b16 %v852, %v851
  %v967 = vpack.c.b16 %v854, %v853
  %v968 = vpack.c.b16 %v856, %v855
  %v969 = vpack.c.b16 %v858, %v857
  %v970 = vpack.c.b16 %v860, %v859
  %v971 = vpack.c.b16 %v862, %v861
  %v972 = vpack.c.b16 %v864, %v863
  %v973 = vpack.c.b16 %v866, %v865
  %v974 = vpack.c.b16 %v868, %v867
  %v975 = vpack.c.b16 %v870, %v869
  %v976 = vpack.c.b16 %v872, %v871
  %v977 = vpack.c.b16 %v874, %v873
  %v978 = vpack.c.b16 %v876, %v875
  %v979 = vpack.c.b16 %v878, %v877
  %v980 = vpack.c.b16 %v880, %v879
  %v981 = vpack.c.b16 %v882, %v881
  %v982 = vpack.c.b16 %v884, %v883
  %v983 = vpack.c.b16 %v886, %v885
  %v984 = vpack.c.b16 %v888, %v887
  %v985 = vpack.c.b16 %v890, %v889
  %v986 = vpack.c.b16 %v892, %v891
  %v987 = vpack.c.b16 %v894, %v893
  %v988 = vpack.c.b16 %v896, %v895
  %v989 = vpack.c.b16 %v898, %v897
  %v990 = vpack.c.b16 %v900, %v899
  %v991 = vpack.c.b16 %v902, %v901
  %v992 = vpack.c.b16 %v904, %v903
  %v993 = vpack.c.b16 %v906, %v905
  %v994 = vpack.c.b16 %v908, %v907
  %v995 = vpack.c.b16 %v910, %v909
  %v996 = vpack.c.b16 %v912, %v911
  %v997 = vpack.c.b16 %v914, %v913
  %v998 = vpack.c.b16 %v916, %v915
  %v999 = vpack.c.b16 %v918, %v917
  %v1000 = vpack.c.b16 %v920, %v919
  %v1001 = vpack.c.b16 %v922, %v921
  %v1002 = vpack.c.b16 %v924, %v923
  %v1003 = vpack.c.b16 %v926, %v925
  %v1004 = vpack.c.b16 %v928, %v927
  %v1005 = vpack.c.b16 %v930, %v929
  %v1006 = vpack.c.b16 %v932, %v931
  %v1007 = vpack.c.b16 %v934, %v933
  %v1008 = vpack.c.b16 %v936, %v935
  %1081 = vmatprep.subr.bf16.mxu0 0
  %1082 = vmatpush1.bf16.msra.mxu0 %v944
  %1083 = vmatprep.subr.bf16.mxu0 0
  %1084 = vmatpush1.bf16.msra.mxu0 %v943
  %1085 = vmatprep.subr.bf16.mxu0 0
  %1086 = vmatpush1.bf16.msra.mxu0 %v942
  %1087 = vmatprep.subr.bf16.mxu0 0
  %1088 = vmatpush1.bf16.msra.mxu0 %v941
  %1089 = vmatprep.subr.bf16.mxu0 0
  %1090 = vmatpush1.bf16.msra.mxu0 %v940
  %1091 = vmatprep.subr.bf16.mxu0 0
  %1092 = vmatpush1.bf16.msra.mxu0 %v939
  %1093 = vmatprep.subr.bf16.mxu0 0
  %1094 = vmatpush1.bf16.msra.mxu0 %v938
  %1095 = vmatprep.subr.bf16.mxu0 0
  %1096 = vmatpush1.bf16.msra.mxu0 %v937
  %1097 = vmatprep.subr.bf16.mxu0 0
  %1098 = vmatpush2.bf16.msra.mxu0 %v952
  %1099 = vmatprep.subr.bf16.mxu0 0
  %1100 = vmatpush2.bf16.msra.mxu0 %v951
  %1101 = vmatprep.subr.bf16.mxu0 0
  %1102 = vmatpush2.bf16.msra.mxu0 %v950
  %1103 = vmatprep.subr.bf16.mxu0 0
  %1104 = vmatpush2.bf16.msra.mxu0 %v949
  %1105 = vmatprep.subr.bf16.mxu0 0
  %1106 = vmatpush2.bf16.msra.mxu0 %v948
  %1107 = vmatprep.subr.bf16.mxu0 0
  %1108 = vmatpush2.bf16.msra.mxu0 %v947
  %1109 = vmatprep.subr.bf16.mxu0 0
  %1110 = vmatpush2.bf16.msra.mxu0 %v946
  %1111 = vmatprep.subr.bf16.mxu0 0
  %1112 = vmatpush2.bf16.msra.mxu0 %v945
  %1113 = vmatprep.mubr.bf16.mxu0 %v506
  %1114 = vmatmul.mubr.bf16.gmra.mxu0 %v505
  %v1115 = vpop.f32.mrf.mxu0
  %v1116 = vadd.f32 0.0, %v1115
  %v1117 = vpop.f32.mrf.mxu0
  %v1118 = vpop.f32.mrf.mxu0
  %v1119 = vadd.f32 0.0, %v1118
  %v1120 = vpop.f32.mrf.mxu0
  %1121 = vmatprep.mubr.bf16.mxu0 %v515
  %1122 = vmatmul.mubr.bf16.gmra.mxu0 %v514
  %v1123 = vpop.f32.mrf.mxu0
  %v1124 = vadd.f32 0.0, %v1123
  %v1125 = vpop.f32.mrf.mxu0
  %v1126 = vpop.f32.mrf.mxu0
  %v1127 = vadd.f32 0.0, %v1126
  %v1128 = vpop.f32.mrf.mxu0
  %1129 = vmatprep.mubr.bf16.mxu0 %v524
  %1130 = vmatmul.mubr.bf16.gmra.mxu0 %v523
  %v1131 = vpop.f32.mrf.mxu0
  %v1132 = vadd.f32 0.0, %v1131
  %v1133 = vpop.f32.mrf.mxu0
  %v1134 = vpop.f32.mrf.mxu0
  %v1135 = vadd.f32 0.0, %v1134
  %v1136 = vpop.f32.mrf.mxu0
  %1137 = vmatprep.mubr.bf16.mxu0 %v533
  %1138 = vmatmul.mubr.bf16.gmra.mxu0 %v532
  %v1139 = vpop.f32.mrf.mxu0
  %v1140 = vadd.f32 0.0, %v1139
  %v1141 = vpop.f32.mrf.mxu0
  %v1142 = vpop.f32.mrf.mxu0
  %v1143 = vadd.f32 0.0, %v1142
  %v1144 = vpop.f32.mrf.mxu0
  %1145 = vmatprep.mubr.bf16.mxu0 %v542
  %1146 = vmatmul.mubr.bf16.gmra.mxu0 %v541
  %v1147 = vpop.f32.mrf.mxu0
  %v1148 = vadd.f32 0.0, %v1147
  %v1149 = vpop.f32.mrf.mxu0
  %v1150 = vpop.f32.mrf.mxu0
  %v1151 = vadd.f32 0.0, %v1150
  %v1152 = vpop.f32.mrf.mxu0
  %1153 = vmatprep.mubr.bf16.mxu0 %v551
  %1154 = vmatmul.mubr.bf16.gmra.mxu0 %v550
  %v1155 = vpop.f32.mrf.mxu0
  %v1156 = vadd.f32 0.0, %v1155
  %v1157 = vpop.f32.mrf.mxu0
  %v1158 = vpop.f32.mrf.mxu0
  %v1159 = vadd.f32 0.0, %v1158
  %v1160 = vpop.f32.mrf.mxu0
  %1161 = vmatprep.mubr.bf16.mxu0 %v560
  %1162 = vmatmul.mubr.bf16.gmra.mxu0 %v559
  %v1163 = vpop.f32.mrf.mxu0
  %v1164 = vadd.f32 0.0, %v1163
  %v1165 = vpop.f32.mrf.mxu0
  %v1166 = vpop.f32.mrf.mxu0
  %v1167 = vadd.f32 0.0, %v1166
  %v1168 = vpop.f32.mrf.mxu0
  %1169 = vmatprep.mubr.bf16.mxu0 %v569
  %1170 = vmatmul.mubr.bf16.gmra.mxu0 %v568
  %v1171 = vpop.f32.mrf.mxu0
  %v1172 = vadd.f32 0.0, %v1171
  %v1173 = vpop.f32.mrf.mxu0
  %v1174 = vpop.f32.mrf.mxu0
  %v1175 = vadd.f32 0.0, %v1174
  %v1176 = vpop.f32.mrf.mxu0
  %1177 = vdwg.mxu0
  %1178 = vmatprep.subr.bf16.mxu0 0
  %1179 = vmatpush1.bf16.msra.mxu0 %v960
  %1180 = vmatprep.subr.bf16.mxu0 0
  %1181 = vmatpush1.bf16.msra.mxu0 %v959
  %1182 = vmatprep.subr.bf16.mxu0 0
  %1183 = vmatpush1.bf16.msra.mxu0 %v958
  %1184 = vmatprep.subr.bf16.mxu0 0
  %1185 = vmatpush1.bf16.msra.mxu0 %v957
  %1186 = vmatprep.subr.bf16.mxu0 0
  %1187 = vmatpush1.bf16.msra.mxu0 %v956
  %1188 = vmatprep.subr.bf16.mxu0 0
  %1189 = vmatpush1.bf16.msra.mxu0 %v955
  %1190 = vmatprep.subr.bf16.mxu0 0
  %1191 = vmatpush1.bf16.msra.mxu0 %v954
  %1192 = vmatprep.subr.bf16.mxu0 0
  %1193 = vmatpush1.bf16.msra.mxu0 %v953
  %1194 = vmatprep.subr.bf16.mxu0 0
  %1195 = vmatpush2.bf16.msra.mxu0 %v968
  %1196 = vmatprep.subr.bf16.mxu0 0
  %1197 = vmatpush2.bf16.msra.mxu0 %v967
  %1198 = vmatprep.subr.bf16.mxu0 0
  %1199 = vmatpush2.bf16.msra.mxu0 %v966
  %1200 = vmatprep.subr.bf16.mxu0 0
  %1201 = vmatpush2.bf16.msra.mxu0 %v965
  %1202 = vmatprep.subr.bf16.mxu0 0
  %1203 = vmatpush2.bf16.msra.mxu0 %v964
  %1204 = vmatprep.subr.bf16.mxu0 0
  %1205 = vmatpush2.bf16.msra.mxu0 %v963
  %1206 = vmatprep.subr.bf16.mxu0 0
  %1207 = vmatpush2.bf16.msra.mxu0 %v962
  %1208 = vmatprep.subr.bf16.mxu0 0
  %1209 = vmatpush2.bf16.msra.mxu0 %v961
  %1210 = vmatprep.mubr.bf16.mxu0 %v508
  %1211 = vmatmul.mubr.bf16.gmra.mxu0 %v507
  %v1212 = vpop.f32.mrf.mxu0
  %v1213 = vadd.f32 %v1116, %v1212
  %v1214 = vpop.f32.mrf.mxu0
  %v1215 = vpop.f32.mrf.mxu0
  %v1216 = vadd.f32 %v1119, %v1215
  %v1217 = vpop.f32.mrf.mxu0
  %1218 = vmatprep.mubr.bf16.mxu0 %v517
  %1219 = vmatmul.mubr.bf16.gmra.mxu0 %v516
  %v1220 = vpop.f32.mrf.mxu0
  %v1221 = vadd.f32 %v1124, %v1220
  %v1222 = vpop.f32.mrf.mxu0
  %v1223 = vpop.f32.mrf.mxu0
  %v1224 = vadd.f32 %v1127, %v1223
  %v1225 = vpop.f32.mrf.mxu0
  %1226 = vmatprep.mubr.bf16.mxu0 %v526
  %1227 = vmatmul.mubr.bf16.gmra.mxu0 %v525
  %v1228 = vpop.f32.mrf.mxu0
  %v1229 = vadd.f32 %v1132, %v1228
  %v1230 = vpop.f32.mrf.mxu0
  %v1231 = vpop.f32.mrf.mxu0
  %v1232 = vadd.f32 %v1135, %v1231
  %v1233 = vpop.f32.mrf.mxu0
  %1234 = vmatprep.mubr.bf16.mxu0 %v535
  %1235 = vmatmul.mubr.bf16.gmra.mxu0 %v534
  %v1236 = vpop.f32.mrf.mxu0
  %v1237 = vadd.f32 %v1140, %v1236
  %v1238 = vpop.f32.mrf.mxu0
  %v1239 = vpop.f32.mrf.mxu0
  %v1240 = vadd.f32 %v1143, %v1239
  %v1241 = vpop.f32.mrf.mxu0
  %1242 = vmatprep.mubr.bf16.mxu0 %v544
  %1243 = vmatmul.mubr.bf16.gmra.mxu0 %v543
  %v1244 = vpop.f32.mrf.mxu0
  %v1245 = vadd.f32 %v1148, %v1244
  %v1246 = vpop.f32.mrf.mxu0
  %v1247 = vpop.f32.mrf.mxu0
  %v1248 = vadd.f32 %v1151, %v1247
  %v1249 = vpop.f32.mrf.mxu0
  %1250 = vmatprep.mubr.bf16.mxu0 %v553
  %1251 = vmatmul.mubr.bf16.gmra.mxu0 %v552
  %v1252 = vpop.f32.mrf.mxu0
  %v1253 = vadd.f32 %v1156, %v1252
  %v1254 = vpop.f32.mrf.mxu0
  %v1255 = vpop.f32.mrf.mxu0
  %v1256 = vadd.f32 %v1159, %v1255
  %v1257 = vpop.f32.mrf.mxu0
  %1258 = vmatprep.mubr.bf16.mxu0 %v562
  %1259 = vmatmul.mubr.bf16.gmra.mxu0 %v561
  %v1260 = vpop.f32.mrf.mxu0
  %v1261 = vadd.f32 %v1164, %v1260
  %v1262 = vpop.f32.mrf.mxu0
  %v1263 = vpop.f32.mrf.mxu0
  %v1264 = vadd.f32 %v1167, %v1263
  %v1265 = vpop.f32.mrf.mxu0
  %1266 = vmatprep.mubr.bf16.mxu0 %v571
  %1267 = vmatmul.mubr.bf16.gmra.mxu0 %v570
  %v1268 = vpop.f32.mrf.mxu0
  %v1269 = vadd.f32 %v1172, %v1268
  %v1270 = vpop.f32.mrf.mxu0
  %v1271 = vpop.f32.mrf.mxu0
  %v1272 = vadd.f32 %v1175, %v1271
  %v1273 = vpop.f32.mrf.mxu0
  %1274 = vdwg.mxu0
  %1275 = vmatprep.subr.bf16.mxu0 0
  %1276 = vmatpush1.bf16.msra.mxu0 %v976
  %1277 = vmatprep.subr.bf16.mxu0 0
  %1278 = vmatpush1.bf16.msra.mxu0 %v975
  %1279 = vmatprep.subr.bf16.mxu0 0
  %1280 = vmatpush1.bf16.msra.mxu0 %v974
  %1281 = vmatprep.subr.bf16.mxu0 0
  %1282 = vmatpush1.bf16.msra.mxu0 %v973
  %1283 = vmatprep.subr.bf16.mxu0 0
  %1284 = vmatpush1.bf16.msra.mxu0 %v972
  %1285 = vmatprep.subr.bf16.mxu0 0
  %1286 = vmatpush1.bf16.msra.mxu0 %v971
  %1287 = vmatprep.subr.bf16.mxu0 0
  %1288 = vmatpush1.bf16.msra.mxu0 %v970
  %1289 = vmatprep.subr.bf16.mxu0 0
  %1290 = vmatpush1.bf16.msra.mxu0 %v969
  %1291 = vmatprep.subr.bf16.mxu0 0
  %1292 = vmatpush2.bf16.msra.mxu0 %v984
  %1293 = vmatprep.subr.bf16.mxu0 0
  %1294 = vmatpush2.bf16.msra.mxu0 %v983
  %1295 = vmatprep.subr.bf16.mxu0 0
  %1296 = vmatpush2.bf16.msra.mxu0 %v982
  %1297 = vmatprep.subr.bf16.mxu0 0
  %1298 = vmatpush2.bf16.msra.mxu0 %v981
  %1299 = vmatprep.subr.bf16.mxu0 0
  %1300 = vmatpush2.bf16.msra.mxu0 %v980
  %1301 = vmatprep.subr.bf16.mxu0 0
  %1302 = vmatpush2.bf16.msra.mxu0 %v979
  %1303 = vmatprep.subr.bf16.mxu0 0
  %1304 = vmatpush2.bf16.msra.mxu0 %v978
  %1305 = vmatprep.subr.bf16.mxu0 0
  %1306 = vmatpush2.bf16.msra.mxu0 %v977
  %1307 = vmatprep.mubr.bf16.mxu0 %v510
  %1308 = vmatmul.mubr.bf16.gmra.mxu0 %v509
  %v1309 = vpop.f32.mrf.mxu0
  %v1310 = vadd.f32 %v1213, %v1309
  %v1311 = vpop.f32.mrf.mxu0
  %v1312 = vpop.f32.mrf.mxu0
  %v1313 = vadd.f32 %v1216, %v1312
  %v1314 = vpop.f32.mrf.mxu0
  %1315 = vmatprep.mubr.bf16.mxu0 %v519
  %1316 = vmatmul.mubr.bf16.gmra.mxu0 %v518
  %v1317 = vpop.f32.mrf.mxu0
  %v1318 = vadd.f32 %v1221, %v1317
  %v1319 = vpop.f32.mrf.mxu0
  %v1320 = vpop.f32.mrf.mxu0
  %v1321 = vadd.f32 %v1224, %v1320
  %v1322 = vpop.f32.mrf.mxu0
  %1323 = vmatprep.mubr.bf16.mxu0 %v528
  %1324 = vmatmul.mubr.bf16.gmra.mxu0 %v527
  %v1325 = vpop.f32.mrf.mxu0
  %v1326 = vadd.f32 %v1229, %v1325
  %v1327 = vpop.f32.mrf.mxu0
  %v1328 = vpop.f32.mrf.mxu0
  %v1329 = vadd.f32 %v1232, %v1328
  %v1330 = vpop.f32.mrf.mxu0
  %1331 = vmatprep.mubr.bf16.mxu0 %v537
  %1332 = vmatmul.mubr.bf16.gmra.mxu0 %v536
  %v1333 = vpop.f32.mrf.mxu0
  %v1334 = vadd.f32 %v1237, %v1333
  %v1335 = vpop.f32.mrf.mxu0
  %v1336 = vpop.f32.mrf.mxu0
  %v1337 = vadd.f32 %v1240, %v1336
  %v1338 = vpop.f32.mrf.mxu0
  %1339 = vmatprep.mubr.bf16.mxu0 %v546
  %1340 = vmatmul.mubr.bf16.gmra.mxu0 %v545
  %v1341 = vpop.f32.mrf.mxu0
  %v1342 = vadd.f32 %v1245, %v1341
  %v1343 = vpop.f32.mrf.mxu0
  %v1344 = vpop.f32.mrf.mxu0
  %v1345 = vadd.f32 %v1248, %v1344
  %v1346 = vpop.f32.mrf.mxu0
  %1347 = vmatprep.mubr.bf16.mxu0 %v555
  %1348 = vmatmul.mubr.bf16.gmra.mxu0 %v554
  %v1349 = vpop.f32.mrf.mxu0
  %v1350 = vadd.f32 %v1253, %v1349
  %v1351 = vpop.f32.mrf.mxu0
  %v1352 = vpop.f32.mrf.mxu0
  %v1353 = vadd.f32 %v1256, %v1352
  %v1354 = vpop.f32.mrf.mxu0
  %1355 = vmatprep.mubr.bf16.mxu0 %v564
  %1356 = vmatmul.mubr.bf16.gmra.mxu0 %v563
  %v1357 = vpop.f32.mrf.mxu0
  %v1358 = vadd.f32 %v1261, %v1357
  %v1359 = vpop.f32.mrf.mxu0
  %v1360 = vpop.f32.mrf.mxu0
  %v1361 = vadd.f32 %v1264, %v1360
  %v1362 = vpop.f32.mrf.mxu0
  %1363 = vmatprep.mubr.bf16.mxu0 %v573
  %1364 = vmatmul.mubr.bf16.gmra.mxu0 %v572
  %v1365 = vpop.f32.mrf.mxu0
  %v1366 = vadd.f32 %v1269, %v1365
  %v1367 = vpop.f32.mrf.mxu0
  %v1368 = vpop.f32.mrf.mxu0
  %v1369 = vadd.f32 %v1272, %v1368
  %v1370 = vpop.f32.mrf.mxu0
  %1371 = vdwg.mxu0
  %1372 = vmatprep.subr.bf16.mxu0 0
  %1373 = vmatpush1.bf16.msra.mxu0 %v992
  %1374 = vmatprep.subr.bf16.mxu0 0
  %1375 = vmatpush1.bf16.msra.mxu0 %v991
  %1376 = vmatprep.subr.bf16.mxu0 0
  %1377 = vmatpush1.bf16.msra.mxu0 %v990
  %1378 = vmatprep.subr.bf16.mxu0 0
  %1379 = vmatpush1.bf16.msra.mxu0 %v989
  %1380 = vmatprep.subr.bf16.mxu0 0
  %1381 = vmatpush1.bf16.msra.mxu0 %v988
  %1382 = vmatprep.subr.bf16.mxu0 0
  %1383 = vmatpush1.bf16.msra.mxu0 %v987
  %1384 = vmatprep.subr.bf16.mxu0 0
  %1385 = vmatpush1.bf16.msra.mxu0 %v986
  %1386 = vmatprep.subr.bf16.mxu0 0
  %1387 = vmatpush1.bf16.msra.mxu0 %v985
  %1388 = vmatprep.subr.bf16.mxu0 0
  %1389 = vmatpush2.bf16.msra.mxu0 %v1000
  %1390 = vmatprep.subr.bf16.mxu0 0
  %1391 = vmatpush2.bf16.msra.mxu0 %v999
  %1392 = vmatprep.subr.bf16.mxu0 0
  %1393 = vmatpush2.bf16.msra.mxu0 %v998
  %1394 = vmatprep.subr.bf16.mxu0 0
  %1395 = vmatpush2.bf16.msra.mxu0 %v997
  %1396 = vmatprep.subr.bf16.mxu0 0
  %1397 = vmatpush2.bf16.msra.mxu0 %v996
  %1398 = vmatprep.subr.bf16.mxu0 0
  %1399 = vmatpush2.bf16.msra.mxu0 %v995
  %1400 = vmatprep.subr.bf16.mxu0 0
  %1401 = vmatpush2.bf16.msra.mxu0 %v994
  %1402 = vmatprep.subr.bf16.mxu0 0
  %1403 = vmatpush2.bf16.msra.mxu0 %v993
  %1404 = vmatprep.mubr.bf16.mxu0 %v512
  %1405 = vmatmul.mubr.bf16.gmra.mxu0 %v511
  %v1406 = vpop.f32.mrf.mxu0
  %v1407 = vadd.f32 %v1310, %v1406
  %v1408 = vpop.f32.mrf.mxu0
  %v1409 = vpop.f32.mrf.mxu0
  %v1410 = vadd.f32 %v1313, %v1409
  %v1411 = vpop.f32.mrf.mxu0
  %1412 = vmatprep.mubr.bf16.mxu0 %v521
  %1413 = vmatmul.mubr.bf16.gmra.mxu0 %v520
  %v1414 = vpop.f32.mrf.mxu0
  %v1415 = vadd.f32 %v1318, %v1414
  %v1416 = vpop.f32.mrf.mxu0
  %v1417 = vpop.f32.mrf.mxu0
  %v1418 = vadd.f32 %v1321, %v1417
  %v1419 = vpop.f32.mrf.mxu0
  %1420 = vmatprep.mubr.bf16.mxu0 %v530
  %1421 = vmatmul.mubr.bf16.gmra.mxu0 %v529
  %v1422 = vpop.f32.mrf.mxu0
  %v1423 = vadd.f32 %v1326, %v1422
  %v1424 = vpop.f32.mrf.mxu0
  %v1425 = vpop.f32.mrf.mxu0
  %v1426 = vadd.f32 %v1329, %v1425
  %v1427 = vpop.f32.mrf.mxu0
  %1428 = vmatprep.mubr.bf16.mxu0 %v539
  %1429 = vmatmul.mubr.bf16.gmra.mxu0 %v538
  %v1430 = vpop.f32.mrf.mxu0
  %v1431 = vadd.f32 %v1334, %v1430
  %v1432 = vpop.f32.mrf.mxu0
  %v1433 = vpop.f32.mrf.mxu0
  %v1434 = vadd.f32 %v1337, %v1433
  %v1435 = vpop.f32.mrf.mxu0
  %1436 = vmatprep.mubr.bf16.mxu0 %v548
  %1437 = vmatmul.mubr.bf16.gmra.mxu0 %v547
  %v1438 = vpop.f32.mrf.mxu0
  %v1439 = vadd.f32 %v1342, %v1438
  %v1440 = vpop.f32.mrf.mxu0
  %v1441 = vpop.f32.mrf.mxu0
  %v1442 = vadd.f32 %v1345, %v1441
  %v1443 = vpop.f32.mrf.mxu0
  %1444 = vmatprep.mubr.bf16.mxu0 %v557
  %1445 = vmatmul.mubr.bf16.gmra.mxu0 %v556
  %v1446 = vpop.f32.mrf.mxu0
  %v1447 = vadd.f32 %v1350, %v1446
  %v1448 = vpop.f32.mrf.mxu0
  %v1449 = vpop.f32.mrf.mxu0
  %v1450 = vadd.f32 %v1353, %v1449
  %v1451 = vpop.f32.mrf.mxu0
  %1452 = vmatprep.mubr.bf16.mxu0 %v566
  %1453 = vmatmul.mubr.bf16.gmra.mxu0 %v565
  %v1454 = vpop.f32.mrf.mxu0
  %v1455 = vadd.f32 %v1358, %v1454
  %v1456 = vpop.f32.mrf.mxu0
  %v1457 = vpop.f32.mrf.mxu0
  %v1458 = vadd.f32 %v1361, %v1457
  %v1459 = vpop.f32.mrf.mxu0
  %1460 = vmatprep.mubr.bf16.mxu0 %v575
  %1461 = vmatmul.mubr.bf16.gmra.mxu0 %v574
  %v1462 = vpop.f32.mrf.mxu0
  %v1463 = vadd.f32 %v1366, %v1462
  %v1464 = vpop.f32.mrf.mxu0
  %v1465 = vpop.f32.mrf.mxu0
  %v1466 = vadd.f32 %v1369, %v1465
  %v1467 = vpop.f32.mrf.mxu0
  %1468 = vdwg.mxu0
  %1469 = vmatprep.subr.bf16.mxu0 0
  %1470 = vmatpush1.bf16.msra.mxu0 %v1008
  %1471 = vmatprep.subr.bf16.mxu0 0
  %1472 = vmatpush1.bf16.msra.mxu0 %v1007
  %1473 = vmatprep.subr.bf16.mxu0 0
  %1474 = vmatpush1.bf16.msra.mxu0 %v1006
  %1475 = vmatprep.subr.bf16.mxu0 0
  %1476 = vmatpush1.bf16.msra.mxu0 %v1005
  %1477 = vmatprep.subr.bf16.mxu0 0
  %1478 = vmatpush1.bf16.msra.mxu0 %v1004
  %1479 = vmatprep.subr.bf16.mxu0 0
  %1480 = vmatpush1.bf16.msra.mxu0 %v1003
  %1481 = vmatprep.subr.bf16.mxu0 0
  %1482 = vmatpush1.bf16.msra.mxu0 %v1002
  %1483 = vmatprep.subr.bf16.mxu0 0
  %1484 = vmatpush1.bf16.msra.mxu0 %v1001
  %1485 = vmatprep.subr.bf16.mxu0 0
  %1486 = vmatpush2.bf16.msra.mxu0 0
  %1487 = vmatprep.subr.bf16.mxu0 0
  %1488 = vmatpush2.bf16.msra.mxu0 0
  %1489 = vmatprep.subr.bf16.mxu0 0
  %1490 = vmatpush2.bf16.msra.mxu0 0
  %1491 = vmatprep.subr.bf16.mxu0 0
  %1492 = vmatpush2.bf16.msra.mxu0 0
  %1493 = vmatprep.subr.bf16.mxu0 0
  %1494 = vmatpush2.bf16.msra.mxu0 0
  %1495 = vmatprep.subr.bf16.mxu0 0
  %1496 = vmatpush2.bf16.msra.mxu0 0
  %1497 = vmatprep.subr.bf16.mxu0 0
  %1498 = vmatpush2.bf16.msra.mxu0 0
  %1499 = vmatprep.subr.bf16.mxu0 0
  %1500 = vmatpush2.bf16.msra.mxu0 0
  %1501 = vmatprep.mubr.bf16.mxu0 0
  %1502 = vmatmul.mubr.bf16.gmra.mxu0 %v513
  %v1503 = vpop.f32.mrf.mxu0
  %v1504 = vadd.f32 %v1407, %v1503
  %v1505 = vpop.f32.mrf.mxu0
  %v1506 = vpop.f32.mrf.mxu0
  %v1507 = vadd.f32 %v1410, %v1506
  %v1508 = vpop.f32.mrf.mxu0
  %1509 = vmatprep.mubr.bf16.mxu0 0
  %1510 = vmatmul.mubr.bf16.gmra.mxu0 %v522
  %v1511 = vpop.f32.mrf.mxu0
  %v1512 = vadd.f32 %v1415, %v1511
  %v1513 = vpop.f32.mrf.mxu0
  %v1514 = vpop.f32.mrf.mxu0
  %v1515 = vadd.f32 %v1418, %v1514
  %v1516 = vpop.f32.mrf.mxu0
  %1517 = vmatprep.mubr.bf16.mxu0 0
  %1518 = vmatmul.mubr.bf16.gmra.mxu0 %v531
  %v1519 = vpop.f32.mrf.mxu0
  %v1520 = vadd.f32 %v1423, %v1519
  %v1521 = vpop.f32.mrf.mxu0
  %v1522 = vpop.f32.mrf.mxu0
  %v1523 = vadd.f32 %v1426, %v1522
  %v1524 = vpop.f32.mrf.mxu0
  %1525 = vmatprep.mubr.bf16.mxu0 0
  %1526 = vmatmul.mubr.bf16.gmra.mxu0 %v540
  %v1527 = vpop.f32.mrf.mxu0
  %v1528 = vadd.f32 %v1431, %v1527
  %v1529 = vpop.f32.mrf.mxu0
  %v1530 = vpop.f32.mrf.mxu0
  %v1531 = vadd.f32 %v1434, %v1530
  %v1532 = vpop.f32.mrf.mxu0
  %1533 = vmatprep.mubr.bf16.mxu0 0
  %1534 = vmatmul.mubr.bf16.gmra.mxu0 %v549
  %v1535 = vpop.f32.mrf.mxu0
  %v1536 = vadd.f32 %v1439, %v1535
  %v1537 = vpop.f32.mrf.mxu0
  %v1538 = vpop.f32.mrf.mxu0
  %v1539 = vadd.f32 %v1442, %v1538
  %v1540 = vpop.f32.mrf.mxu0
  %1541 = vmatprep.mubr.bf16.mxu0 0
  %1542 = vmatmul.mubr.bf16.gmra.mxu0 %v558
  %v1543 = vpop.f32.mrf.mxu0
  %v1544 = vadd.f32 %v1447, %v1543
  %v1545 = vpop.f32.mrf.mxu0
  %v1546 = vpop.f32.mrf.mxu0
  %v1547 = vadd.f32 %v1450, %v1546
  %v1548 = vpop.f32.mrf.mxu0
  %1549 = vmatprep.mubr.bf16.mxu0 0
  %1550 = vmatmul.mubr.bf16.gmra.mxu0 %v567
  %v1551 = vpop.f32.mrf.mxu0
  %v1552 = vadd.f32 %v1455, %v1551
  %v1553 = vpop.f32.mrf.mxu0
  %v1554 = vpop.f32.mrf.mxu0
  %v1555 = vadd.f32 %v1458, %v1554
  %v1556 = vpop.f32.mrf.mxu0
  %1557 = vmatprep.mubr.bf16.mxu0 0
  %1558 = vmatmul.mubr.bf16.gmra.mxu0 %v576
  %v1559 = vpop.f32.mrf.mxu0
  %v1560 = vadd.f32 %v1463, %v1559
  %v1561 = vpop.f32.mrf.mxu0
  %v1562 = vpop.f32.mrf.mxu0
  %v1563 = vadd.f32 %v1466, %v1562
  %v1564 = vpop.f32.mrf.mxu0
  %1565 = vdwg.mxu0
  %v1566 = vadd.f32 %v41, %v1504
  %v1567 = vadd.f32 %v42, %v1507
  %v1568 = vadd.f32 %v43, %v1512
  %v1569 = vadd.f32 %v44, %v1515
  %v1570 = vadd.f32 %v45, %v1520
  %v1571 = vadd.f32 %v46, %v1523
  %v1572 = vadd.f32 %v47, %v1528
  %v1573 = vadd.f32 %v48, %v1531
  %v1574 = vadd.f32 %v49, %v1536
  %v1575 = vadd.f32 %v50, %v1539
  %v1576 = vadd.f32 %v51, %v1544
  %v1577 = vadd.f32 %v52, %v1547
  %v1578 = vadd.f32 %v53, %v1552
  %v1579 = vadd.f32 %v54, %v1555
  %v1580 = vadd.f32 %v55, %v1560
  %v1581 = vadd.f32 %v56, %v1563
  %1582 = vst [vmem:[#allocation2] sm:$0xff] %v1566
  %1583 = vst [vmem:[#allocation2 + $0x8] sm:$0xff] %v1567
  %1584 = vst [vmem:[#allocation2 + $0x10] sm:$0xff] %v1568
  %1585 = vst [vmem:[#allocation2 + $0x18] sm:$0xff] %v1569
  %1586 = vst [vmem:[#allocation2 + $0x20] sm:$0xff] %v1570
  %1587 = vst [vmem:[#allocation2 + $0x28] sm:$0xff] %v1571
  %1588 = vst [vmem:[#allocation2 + $0x30] sm:$0xff] %v1572
  %1589 = vst [vmem:[#allocation2 + $0x38] sm:$0xff] %v1573
  %1590 = vst [vmem:[#allocation2 + $0x40] sm:$0xff] %v1574
  %1591 = vst [vmem:[#allocation2 + $0x48] sm:$0xff] %v1575
  %1592 = vst [vmem:[#allocation2 + $0x50] sm:$0xff] %v1576
  %1593 = vst [vmem:[#allocation2 + $0x58] sm:$0xff] %v1577
  %1594 = vst [vmem:[#allocation2 + $0x60] sm:$0xff] %v1578
  %1595 = vst [vmem:[#allocation2 + $0x68] sm:$0xff] %v1579
  %1596 = vst [vmem:[#allocation2 + $0x70] sm:$0xff] %v1580
  %1597 = vst [vmem:[#allocation2 + $0x78] sm:$0xff] %v1581
  // Predicated region
  $region26: #{_lambda_.7} parent=0 // pred_check
    %p1598 = pneg %p21
  $region27: #{_lambda_.7} parent=0 // pred_check_branch
    %1600 = sbr.rel (%p1598) target = $region29
  $region28: #{_lambda_.7} parent=0 // pred_region
    %v1601 = vld [vmem:[#allocation2] sm:$0xff]
    %v1602 = vld [vmem:[#allocation2 + $0x8] sm:$0xff]
    %v1603 = vld [vmem:[#allocation2 + $0x10] sm:$0xff]
    %v1604 = vld [vmem:[#allocation2 + $0x18] sm:$0xff]
    %v1605 = vld [vmem:[#allocation2 + $0x20] sm:$0xff]
    %v1606 = vld [vmem:[#allocation2 + $0x28] sm:$0xff]
    %v1607 = vld [vmem:[#allocation2 + $0x30] sm:$0xff]
    %v1608 = vld [vmem:[#allocation2 + $0x38] sm:$0xff]
    %v1609 = vld [vmem:[#allocation2 + $0x40] sm:$0xff]
    %v1610 = vld [vmem:[#allocation2 + $0x48] sm:$0xff]
    %v1611 = vld [vmem:[#allocation2 + $0x50] sm:$0xff]
    %v1612 = vld [vmem:[#allocation2 + $0x58] sm:$0xff]
    %v1613 = vld [vmem:[#allocation2 + $0x60] sm:$0xff]
    %v1614 = vld [vmem:[#allocation2 + $0x68] sm:$0xff]
    %v1615 = vld [vmem:[#allocation2 + $0x70] sm:$0xff]
    %v1616 = vld [vmem:[#allocation2 + $0x78] sm:$0xff]
    %v1617 = vadd.f32 %v1601, %v1602
    %v1618 = vadd.f32 %v1617, %v1603
    %v1619 = vadd.f32 %v1618, %v1604
    %v1620 = vadd.f32 %v1619, %v1605
    %v1621 = vadd.f32 %v1620, %v1606
    %v1622 = vadd.f32 %v1621, %v1607
    %v1623 = vadd.f32 %v1622, %v1608
    %v1624 = vadd.f32 %v1623, %v1609
    %v1625 = vadd.f32 %v1624, %v1610
    %v1626 = vadd.f32 %v1625, %v1611
    %v1627 = vadd.f32 %v1626, %v1612
    %v1628 = vadd.f32 %v1627, %v1613
    %v1629 = vadd.f32 %v1628, %v1614
    %v1630 = vadd.f32 %v1629, %v1615
    %v1631 = vadd.f32 %v1630, %v1616
    %v1632 = vrot.slane %v1631, 4
    %v1633 = vadd.f32 %v1631, %v1632
    %v1634 = vrot.slane %v1633, 2
    %v1635 = vadd.f32 %v1633, %v1634
    %v1636 = vrot.slane %v1635, 1
    %v1637 = vadd.f32 %v1635, %v1636
    %v1638 = vrcp.pop 128.0
    %v1639 = vmul.f32 %v1637, %v1638
    %v1640 = vsub.f32 %v1601, %v1639
    %v1641 = vsub.f32 %v1602, %v1639
    %v1642 = vsub.f32 %v1603, %v1639
    %v1643 = vsub.f32 %v1604, %v1639
    %v1644 = vsub.f32 %v1605, %v1639
    %v1645 = vsub.f32 %v1606, %v1639
    %v1646 = vsub.f32 %v1607, %v1639
    %v1647 = vsub.f32 %v1608, %v1639
    %v1648 = vsub.f32 %v1609, %v1639
    %v1649 = vsub.f32 %v1610, %v1639
    %v1650 = vsub.f32 %v1611, %v1639
    %v1651 = vsub.f32 %v1612, %v1639
    %v1652 = vsub.f32 %v1613, %v1639
    %v1653 = vsub.f32 %v1614, %v1639
    %v1654 = vsub.f32 %v1615, %v1639
    %v1655 = vsub.f32 %v1616, %v1639
    %v1656 = vmul.f32 %v1640, %v1640
    %v1657 = vmul.f32 %v1641, %v1641
    %v1658 = vmul.f32 %v1642, %v1642
    %v1659 = vmul.f32 %v1643, %v1643
    %v1660 = vmul.f32 %v1644, %v1644
    %v1661 = vmul.f32 %v1645, %v1645
    %v1662 = vmul.f32 %v1646, %v1646
    %v1663 = vmul.f32 %v1647, %v1647
    %v1664 = vmul.f32 %v1648, %v1648
    %v1665 = vmul.f32 %v1649, %v1649
    %v1666 = vmul.f32 %v1650, %v1650
    %v1667 = vmul.f32 %v1651, %v1651
    %v1668 = vmul.f32 %v1652, %v1652
    %v1669 = vmul.f32 %v1653, %v1653
    %v1670 = vmul.f32 %v1654, %v1654
    %v1671 = vmul.f32 %v1655, %v1655
    %v1672 = vadd.f32 %v1656, %v1657
    %v1673 = vadd.f32 %v1672, %v1658
    %v1674 = vadd.f32 %v1673, %v1659
    %v1675 = vadd.f32 %v1674, %v1660
    %v1676 = vadd.f32 %v1675, %v1661
    %v1677 = vadd.f32 %v1676, %v1662
    %v1678 = vadd.f32 %v1677, %v1663
    %v1679 = vadd.f32 %v1678, %v1664
    %v1680 = vadd.f32 %v1679, %v1665
    %v1681 = vadd.f32 %v1680, %v1666
    %v1682 = vadd.f32 %v1681, %v1667
    %v1683 = vadd.f32 %v1682, %v1668
    %v1684 = vadd.f32 %v1683, %v1669
    %v1685 = vadd.f32 %v1684, %v1670
    %v1686 = vadd.f32 %v1685, %v1671
    %v1687 = vrot.slane %v1686, 4
    %v1688 = vadd.f32 %v1686, %v1687
    %v1689 = vrot.slane %v1688, 2
    %v1690 = vadd.f32 %v1688, %v1689
    %v1691 = vrot.slane %v1690, 1
    %v1692 = vadd.f32 %v1690, %v1691
    %v1693 = vmul.f32 %v1692, %v1638
    %v1694 = vadd.f32 %v1693, 1e-05
    %v1695 = vrsqrt.pop %v1694
    %v1696 = vmul.f32 %v1640, %v1695
    %v1697 = vmul.f32 %v1641, %v1695
    %v1698 = vmul.f32 %v1642, %v1695
    %v1699 = vmul.f32 %v1643, %v1695
    %v1700 = vmul.f32 %v1644, %v1695
    %v1701 = vmul.f32 %v1645, %v1695
    %v1702 = vmul.f32 %v1646, %v1695
    %v1703 = vmul.f32 %v1647, %v1695
    %v1704 = vmul.f32 %v1648, %v1695
    %v1705 = vmul.f32 %v1649, %v1695
    %v1706 = vmul.f32 %v1650, %v1695
    %v1707 = vmul.f32 %v1651, %v1695
    %v1708 = vmul.f32 %v1652, %v1695
    %v1709 = vmul.f32 %v1653, %v1695
    %v1710 = vmul.f32 %v1654, %v1695
    %v1711 = vmul.f32 %v1655, %v1695
    %v1712 = vld [vmem:[%s2] sm:$0x1]
    %v1714 = vlaneseq
    %v1715 = vshrl.u32 %v1714, 7
    %v1716 = vsub.s32 0, %v1715
    %v1717 = vrot.slane %v1712, %v1716
    %v1719 = vmul.f32 %v1696, %v1717
    %v1720 = vmul.f32 %v1697, %v1717
    %v1721 = vmul.f32 %v1698, %v1717
    %v1722 = vmul.f32 %v1699, %v1717
    %v1723 = vmul.f32 %v1700, %v1717
    %v1724 = vmul.f32 %v1701, %v1717
    %v1725 = vmul.f32 %v1702, %v1717
    %v1726 = vmul.f32 %v1703, %v1717
    %v1727 = vmul.f32 %v1704, %v1717
    %v1728 = vmul.f32 %v1705, %v1717
    %v1729 = vmul.f32 %v1706, %v1717
    %v1730 = vmul.f32 %v1707, %v1717
    %v1731 = vmul.f32 %v1708, %v1717
    %v1732 = vmul.f32 %v1709, %v1717
    %v1733 = vmul.f32 %v1710, %v1717
    %v1734 = vmul.f32 %v1711, %v1717
    %v1735 = vld [vmem:[%s3] sm:$0x1]
    %v1737 = vlaneseq
    %v1738 = vshrl.u32 %v1737, 7
    %v1739 = vsub.s32 0, %v1738
    %v1740 = vrot.slane %v1735, %v1739
    %v1742 = vadd.f32 %v1719, %v1740
    %v1743 = vadd.f32 %v1720, %v1740
    %v1744 = vadd.f32 %v1721, %v1740
    %v1745 = vadd.f32 %v1722, %v1740
    %v1746 = vadd.f32 %v1723, %v1740
    %v1747 = vadd.f32 %v1724, %v1740
    %v1748 = vadd.f32 %v1725, %v1740
    %v1749 = vadd.f32 %v1726, %v1740
    %v1750 = vadd.f32 %v1727, %v1740
    %v1751 = vadd.f32 %v1728, %v1740
    %v1752 = vadd.f32 %v1729, %v1740
    %v1753 = vadd.f32 %v1730, %v1740
    %v1754 = vadd.f32 %v1731, %v1740
    %v1755 = vadd.f32 %v1732, %v1740
    %v1756 = vadd.f32 %v1733, %v1740
    %v1757 = vadd.f32 %v1734, %v1740
    %v1758 = vld [vmem:[%s4] sm:$0xf]
    %v1759 = vld [vmem:[%s4 + $0x4] sm:$0xf]
    %v1760 = vld [vmem:[%s4 + $0x8] sm:$0xf]
    %v1761 = vld [vmem:[%s4 + $0xc] sm:$0xf]
    %v1762 = vld [vmem:[%s4 + $0x10] sm:$0xf]
    %v1763 = vld [vmem:[%s4 + $0x14] sm:$0xf]
    %v1764 = vld [vmem:[%s4 + $0x18] sm:$0xf]
    %v1765 = vld [vmem:[%s4 + $0x1c] sm:$0xf]
    %v1766 = vld [vmem:[%s4 + $0x20] sm:$0xf]
    %v1767 = vld [vmem:[%s4 + $0x24] sm:$0xf]
    %v1768 = vld [vmem:[%s4 + $0x28] sm:$0xf]
    %v1769 = vld [vmem:[%s4 + $0x2c] sm:$0xf]
    %v1770 = vld [vmem:[%s4 + $0x30] sm:$0xf]
    %v1771 = vld [vmem:[%s4 + $0x34] sm:$0xf]
    %v1772 = vld [vmem:[%s4 + $0x38] sm:$0xf]
    %v1773 = vld [vmem:[%s4 + $0x3c] sm:$0xf]
    %v1774 = vunpack.c.l.bf16 %v1758
    %v1775 = vunpack.c.l.bf16 %v1759
    %v1776 = vunpack.c.l.bf16 %v1760
    %v1777 = vunpack.c.l.bf16 %v1761
    %v1778 = vunpack.c.l.bf16 %v1762
    %v1779 = vunpack.c.l.bf16 %v1763
    %v1780 = vunpack.c.l.bf16 %v1764
    %v1781 = vunpack.c.l.bf16 %v1765
    %v1782 = vunpack.c.l.bf16 %v1766
    %v1783 = vunpack.c.l.bf16 %v1767
    %v1784 = vunpack.c.l.bf16 %v1768
    %v1785 = vunpack.c.l.bf16 %v1769
    %v1786 = vunpack.c.l.bf16 %v1770
    %v1787 = vunpack.c.l.bf16 %v1771
    %v1788 = vunpack.c.l.bf16 %v1772
    %v1789 = vunpack.c.l.bf16 %v1773
    %v1790 = vadd.f32 %v1742, %v1774
    %v1791 = vadd.f32 %v1743, %v1775
    %v1792 = vadd.f32 %v1744, %v1776
    %v1793 = vadd.f32 %v1745, %v1777
    %v1794 = vadd.f32 %v1746, %v1778
    %v1795 = vadd.f32 %v1747, %v1779
    %v1796 = vadd.f32 %v1748, %v1780
    %v1797 = vadd.f32 %v1749, %v1781
    %v1798 = vadd.f32 %v1750, %v1782
    %v1799 = vadd.f32 %v1751, %v1783
    %v1800 = vadd.f32 %v1752, %v1784
    %v1801 = vadd.f32 %v1753, %v1785
    %v1802 = vadd.f32 %v1754, %v1786
    %v1803 = vadd.f32 %v1755, %v1787
    %v1804 = vadd.f32 %v1756, %v1788
    %v1805 = vadd.f32 %v1757, %v1789
    %v1806 = vpack.c.bf16 %v1791, %v1790
    %v1807 = vpack.c.bf16 %v1793, %v1792
    %v1808 = vpack.c.bf16 %v1795, %v1794
    %v1809 = vpack.c.bf16 %v1797, %v1796
    %v1810 = vpack.c.bf16 %v1799, %v1798
    %v1811 = vpack.c.bf16 %v1801, %v1800
    %v1812 = vpack.c.bf16 %v1803, %v1802
    %v1813 = vpack.c.bf16 %v1805, %v1804
    %v1822 = vunpack.c.l.b16 %v1806
    %v1823 = vunpack.c.h.b16 %v1806
    %v1824 = vunpack.c.l.b16 %v1807
    %v1825 = vunpack.c.h.b16 %v1807
    %v1826 = vunpack.c.l.b16 %v1808
    %v1827 = vunpack.c.h.b16 %v1808
    %v1828 = vunpack.c.l.b16 %v1809
    %v1829 = vunpack.c.h.b16 %v1809
    %v1830 = vunpack.c.l.b16 %v1810
    %v1831 = vunpack.c.h.b16 %v1810
    %v1832 = vunpack.c.l.b16 %v1811
    %v1833 = vunpack.c.h.b16 %v1811
    %v1834 = vunpack.c.l.b16 %v1812
    %v1835 = vunpack.c.h.b16 %v1812
    %v1836 = vunpack.c.l.b16 %v1813
    %v1837 = vunpack.c.h.b16 %v1813
    %v1838 = vpack.c.b16 %v1822, %v1822
    %v1839 = vpack.c.b16 %v1823, %v1823
    %v1840 = vpack.c.b16 %v1824, %v1824
    %v1841 = vpack.c.b16 %v1825, %v1825
    %v1842 = vpack.c.b16 %v1826, %v1826
    %v1843 = vpack.c.b16 %v1827, %v1827
    %v1844 = vpack.c.b16 %v1828, %v1828
    %v1845 = vpack.c.b16 %v1829, %v1829
    %v1846 = vpack.c.b16 %v1830, %v1830
    %v1847 = vpack.c.b16 %v1831, %v1831
    %v1848 = vpack.c.b16 %v1832, %v1832
    %v1849 = vpack.c.b16 %v1833, %v1833
    %v1850 = vpack.c.b16 %v1834, %v1834
    %v1851 = vpack.c.b16 %v1835, %v1835
    %v1852 = vpack.c.b16 %v1836, %v1836
    %v1853 = vpack.c.b16 %v1837, %v1837
    %1870 = vst [vmem:[%s5] sm:$0xf] %v1838
    %1871 = vst [vmem:[%s5 + $0x4] sm:$0xf] %v1839
    %1872 = vst [vmem:[%s5 + $0x8] sm:$0xf] %v1840
    %1873 = vst [vmem:[%s5 + $0xc] sm:$0xf] %v1841
    %1874 = vst [vmem:[%s5 + $0x10] sm:$0xf] %v1842
    %1875 = vst [vmem:[%s5 + $0x14] sm:$0xf] %v1843
    %1876 = vst [vmem:[%s5 + $0x18] sm:$0xf] %v1844
    %1877 = vst [vmem:[%s5 + $0x1c] sm:$0xf] %v1845
    %1878 = vst [vmem:[%s5 + $0x20] sm:$0xf] %v1846
    %1879 = vst [vmem:[%s5 + $0x24] sm:$0xf] %v1847
    %1880 = vst [vmem:[%s5 + $0x28] sm:$0xf] %v1848
    %1881 = vst [vmem:[%s5 + $0x2c] sm:$0xf] %v1849
    %1882 = vst [vmem:[%s5 + $0x30] sm:$0xf] %v1850
    %1883 = vst [vmem:[%s5 + $0x34] sm:$0xf] %v1851
    %1884 = vst [vmem:[%s5 + $0x38] sm:$0xf] %v1852
    %1885 = vst [vmem:[%s5 + $0x3c] sm:$0xf] %v1853
  $region29: #{_lambda_.7} parent=0 // pred_fallthru
    _
  // Predicated region
  $region30: #{_lambda_.7} parent=0 // pred_check
    _
  $region31: #{_lambda_.7} parent=0 // pred_check_branch
    %1887 = sbr.rel (0) target = $region33
  $region32: #{_lambda_.7} parent=0 // pred_region
    _
  $region33: #{_lambda_.7} parent=0 // pred_fallthru
    _
  // Predicated region
  $region34: #{_lambda_.7} parent=0 // pred_check
    _
  $region35: #{_lambda_.7} parent=0 // pred_check_branch
    %1889 = sbr.rel (0) target = $region37
  $region36: #{_lambda_.7} parent=0 // pred_region
    _
  $region37: #{_lambda_.7} parent=0 // pred_fallthru
    _

</llo_original>
